<compile_context>
chip_gen: v7x
topology: tpu7x:2x2x1
jax: 0.10.0
libtpu: 0.0.40
codegen_flags: <defaults>
</compile_context>

<pallas_src>
import functools

import jax
import jax.numpy as jnp
import numpy as np
from jax import lax
from jax.experimental import pallas as pl
from jax.experimental.pallas import tpu as pltpu

D1 = 2  # dilation / padding of conv1 (padding == dilation -> SAME size)
D2 = 3  # dilation / padding of conv2


def _fused_double_conv_kernel(x_ref, w1_ref, s1_ref, b1_ref,
                              w2_ref, s2_ref, b2_ref, o_ref,
                              p1_ref, y1_ref, p2_ref,
                              *, H, W, TH, C1, cin):
    """One grid step = (batch n, output row-tile h).

    x_ref : (1, H + 2*(D1+D2), Wp, cin)  zero-padded input, full image of batch n
    w1_ref: (9*cin, cin)   conv1 weights, K ordered as (ky*3+kx)*cin + ci
    w2_ref: (9*cin, cout)  conv2 weights, same K ordering
    s*_ref, b*_ref: (1, C) folded BN scale / bias (conv bias included)
    o_ref : (1, TH, W, cout)
    p1_ref: (R1, C1, 9*cin) VMEM scratch -- im2col patches for conv1
    y1_ref: (R1, C1, cin)   VMEM scratch -- fused stage-1 (conv-BN-ReLU) output
    p2_ref: (TH, W, 9*cin)  VMEM scratch -- im2col patches for conv2
    """
    h = pl.program_id(1)
    R1 = TH + 2 * D2              # stage-1 rows needed by this output tile
    row0 = h * TH                 # first padded-input row this tile touches
    row0_hint = pl.multiple_of(row0, 8) if TH % 8 == 0 else row0

    # ---- stage 1: im2col (9 shifted copies into VMEM scratch) + one matmul.
    for ky in range(3):
        for kx in range(3):
            t = ky * 3 + kx
            p1_ref[:, :, t * cin:(t + 1) * cin] = x_ref[
                0, pl.ds(row0_hint + ky * D1, R1), kx * D1:kx * D1 + C1, :]
    z1 = jnp.einsum("rck,ko->rco", p1_ref[...], w1_ref[...],
                    preferred_element_type=jnp.float32)
    y1 = jnp.maximum(z1 * s1_ref[0] + b1_ref[0], 0.0)
    # Zero positions outside the original HxW image: conv2 must see its own
    # zero padding there, not conv1-evaluated-on-padding.
    ri = lax.broadcasted_iota(jnp.int32, (R1, C1, 1), 0) + (row0 - D2)
    ci = lax.broadcasted_iota(jnp.int32, (R1, C1, 1), 1)
    valid = (ri >= 0) & (ri < H) & (ci >= D2) & (ci < D2 + W)
    y1_ref[...] = jnp.where(valid, y1, 0.0).astype(y1_ref.dtype)

    # ---- stage 2: im2col + one matmul + BN + ReLU, write the output tile.
    for ky in range(3):
        for kx in range(3):
            t = ky * 3 + kx
            p2_ref[:, :, t * cin:(t + 1) * cin] = y1_ref[
                ky * D2:ky * D2 + TH, kx * D2:kx * D2 + W, :]
    z2 = jnp.einsum("rck,ko->rco", p2_ref[...], w2_ref[...],
                    preferred_element_type=jnp.float32)
    o_ref[0] = jnp.maximum(z2 * s2_ref[0] + b2_ref[0], 0.0).astype(o_ref.dtype)


def _fold_bn(conv_bias, gamma, beta, running_mean, running_var, eps=1e-5):
    scale = gamma / jnp.sqrt(running_var + eps)
    bias = (conv_bias - running_mean) * scale + beta
    return scale, bias


def _pick_tile_h(H):
    for th in (64, 32, 16, 8):
        if H % th == 0 and H // th >= 2:
            return th
    return H


def double_conv_forward(x_nchw, params, *, compute_dtype=jnp.float32):
    """Forward pass. x_nchw: (N, C_in, H, W) -> (N, C_out, H, W)."""
    N, cin, H, W = x_nchw.shape
    cout = params["w2"].shape[-1]
    TH = _pick_tile_h(H)
    R1 = TH + 2 * D2                       # stage-1 rows per tile
    C1 = ((W + 2 * D2 + 7) // 8) * 8       # stage-1 cols, sublane aligned
    Wp = C1 + 2 * D1                       # padded input width
    Hp = H + 2 * (D1 + D2)                 # padded input height

    # NCHW -> NHWC, single zero-pad covering both convs' halos (conv2's halo
    # outside the image is produced in-kernel by the validity mask).
    x = jnp.transpose(x_nchw, (0, 2, 3, 1))
    x = jnp.pad(x, ((0, 0),
                    (D1 + D2, D1 + D2),
                    (D1 + D2, Wp - W - (D1 + D2)),
                    (0, 0))).astype(compute_dtype)

    s1, b1 = _fold_bn(params["b1"], params["bn1_gamma"], params["bn1_beta"],
                      params["bn1_mean"], params["bn1_var"])
    s2, b2 = _fold_bn(params["b2"], params["bn2_gamma"], params["bn2_beta"],
                      params["bn2_mean"], params["bn2_var"])
    # HWIO (3,3,Cin,Cout) -> (9*Cin, Cout); K index = (ky*3+kx)*Cin + ci.
    w1 = params["w1"].reshape(9 * cin, cin).astype(compute_dtype)
    w2 = params["w2"].reshape(9 * cin, cout).astype(compute_dtype)

    kernel = functools.partial(_fused_double_conv_kernel,
                               H=H, W=W, TH=TH, C1=C1, cin=cin)

    out = pl.pallas_call(
        kernel,
        out_shape=jax.ShapeDtypeStruct((N, H, W, cout), jnp.float32),
        grid_spec=pltpu.PrefetchScalarGridSpec(
            num_scalar_prefetch=0,
            grid=(N, H // TH),
            in_specs=[
                # Full padded image per batch element (re-DMA'd only when n
                # changes since the block index ignores h).
                pl.BlockSpec((1, Hp, Wp, cin), lambda n, h: (n, 0, 0, 0)),
                pl.BlockSpec((9 * cin, cin), lambda n, h: (0, 0)),
                pl.BlockSpec((1, cin), lambda n, h: (0, 0)),
                pl.BlockSpec((1, cin), lambda n, h: (0, 0)),
                pl.BlockSpec((9 * cin, cout), lambda n, h: (0, 0)),
                pl.BlockSpec((1, cout), lambda n, h: (0, 0)),
                pl.BlockSpec((1, cout), lambda n, h: (0, 0)),
            ],
            out_specs=pl.BlockSpec((1, TH, W, cout), lambda n, h: (n, h, 0, 0)),
            scratch_shapes=[
                pltpu.VMEM((R1, C1, 9 * cin), compute_dtype),   # conv1 im2col
                pltpu.VMEM((R1, C1, cin), compute_dtype),       # stage-1 output
                pltpu.VMEM((TH, W, 9 * cin), compute_dtype),    # conv2 im2col
            ]),
        compiler_params=pltpu.CompilerParams(
            dimension_semantics=("parallel", "parallel"),
            vmem_limit_bytes=64 * 1024 * 1024),
    )(x, w1, s1.reshape(1, cin), b1.reshape(1, cin),
      w2, s2.reshape(1, cout), b2.reshape(1, cout))

    return jnp.transpose(out, (0, 3, 1, 2))  # NHWC -> NCHW


def init_double_conv_params(key, in_ch, out_ch):
    """Deterministic synthetic parameters matching the PyTorch module shapes."""
    ks = jax.random.split(key, 10)
    p = {}
    # Conv1: torch OIHW (in_ch, in_ch, 3, 3) -> HWIO (3, 3, in_ch, in_ch).
    w1 = jax.random.normal(ks[0], (in_ch, in_ch, 3, 3), jnp.float32) * 0.1
    p["w1"] = jnp.transpose(w1, (2, 3, 1, 0))
    p["b1"] = jax.random.normal(ks[1], (in_ch,), jnp.float32) * 0.1
    p["bn1_gamma"] = 1.0 + 0.1 * jax.random.normal(ks[2], (in_ch,), jnp.float32)
    p["bn1_beta"] = 0.1 * jax.random.normal(ks[3], (in_ch,), jnp.float32)
    p["bn1_mean"] = 0.1 * jax.random.normal(ks[4], (in_ch,), jnp.float32)
    p["bn1_var"] = jnp.abs(jax.random.normal(ks[5], (in_ch,), jnp.float32)) + 0.5
    # Conv2: torch OIHW (out_ch, in_ch, 3, 3) -> HWIO (3, 3, in_ch, out_ch).
    w2 = jax.random.normal(ks[6], (out_ch, in_ch, 3, 3), jnp.float32) * 0.1
    p["w2"] = jnp.transpose(w2, (2, 3, 1, 0))
    p["b2"] = jax.random.normal(ks[7], (out_ch,), jnp.float32) * 0.1
    p["bn2_gamma"] = 1.0 + 0.1 * jax.random.normal(ks[8], (out_ch,), jnp.float32)
    p["bn2_beta"] = 0.1 * jax.random.normal(ks[9], (out_ch,), jnp.float32)
    p["bn2_mean"] = 0.05 * jnp.arange(out_ch, dtype=jnp.float32)
    p["bn2_var"] = 1.0 + 0.1 * jnp.arange(out_ch, dtype=jnp.float32)
    return p


def _reference_forward(x_nchw, params):
    """Pure-JAX reference (lax.conv_general_dilated) for validation."""
    def conv_bn_relu(x, w_hwio, cbias, gamma, beta, mean, var, d):
        y = jax.lax.conv_general_dilated(
            x, w_hwio,
            window_strides=(1, 1),
            padding=[(d, d), (d, d)],
            rhs_dilation=(d, d),
            dimension_numbers=("NCHW", "HWIO", "NCHW"),
        )
        y = y + cbias[None, :, None, None]
        s = gamma / jnp.sqrt(var + 1e-5)
        y = (y - mean[None, :, None, None]) * s[None, :, None, None] \
            + beta[None, :, None, None]
        return jnp.maximum(y, 0.0)

    y = conv_bn_relu(x_nchw, params["w1"], params["b1"], params["bn1_gamma"],
                     params["bn1_beta"], params["bn1_mean"], params["bn1_var"], 2)
    y = conv_bn_relu(y, params["w2"], params["b2"], params["bn2_gamma"],
                     params["bn2_beta"], params["bn2_mean"], params["bn2_var"], 3)
    return y


if __name__ == "__main__":
    N, in_ch, out_ch, H, W = 2, 4, 8, 16, 16
    key = jax.random.PRNGKey(0)
    kx_, kp = jax.random.split(key)
    x = jax.random.normal(kx_, (N, in_ch, H, W), jnp.float32)
    params = init_double_conv_params(kp, in_ch, out_ch)

    ref = jax.block_until_ready(_reference_forward(x, params))

    # f32 path: strict check against the f32 reference.
    out_f32 = jax.block_until_ready(double_conv_forward(x, params))
    assert out_f32.shape == (N, out_ch, H, W), out_f32.shape
    np.testing.assert_allclose(np.asarray(out_f32), np.asarray(ref),
                               rtol=1e-4, atol=1e-4)

    # bf16 MXU path (f32 accumulation + f32 epilogue): looser tolerance.
    out_bf16 = jax.block_until_ready(
        double_conv_forward(x, params, compute_dtype=jnp.bfloat16))
    np.testing.assert_allclose(np.asarray(out_bf16), np.asarray(ref),
                               rtol=5e-2, atol=5e-2)

    print("KERNEL_OK")
</pallas_src>

<mosaic_0001>
module attributes {stable_mosaic.version = 11 : i64} {
  func.func @_fused_double_conv_kernel(%arg0: i32, %arg1: i32, %arg2: memref<1x26x28x4xf32, #tpu.memory_space<vmem>>, %arg3: memref<36x4xf32, #tpu.memory_space<vmem>>, %arg4: memref<1x4xf32, #tpu.memory_space<vmem>>, %arg5: memref<1x4xf32, #tpu.memory_space<vmem>>, %arg6: memref<36x8xf32, #tpu.memory_space<vmem>>, %arg7: memref<1x8xf32, #tpu.memory_space<vmem>>, %arg8: memref<1x8xf32, #tpu.memory_space<vmem>>, %arg9: memref<1x8x16x8xf32, #tpu.memory_space<vmem>>, %arg10: memref<14x24x36xf32, #tpu.memory_space<vmem>>, %arg11: memref<14x24x4xf32, #tpu.memory_space<vmem>>, %arg12: memref<8x16x36xf32, #tpu.memory_space<vmem>>) attributes {dimension_semantics = [#tpu.dimension_semantics<parallel>, #tpu.dimension_semantics<parallel>], iteration_bounds = array<i64: 2, 2>, scalar_prefetch = 0 : i64, scratch_operands = 3 : i64, tpu.core_type = #tpu.core_type<tc>, window_params = [{transform_indices = @transform_0, window_bounds = array<i64: 1, 26, 28, 4>}, {pipeline_mode = #tpu.pipeline_mode<synchronous>, transform_indices = @transform_1, window_bounds = array<i64: 36, 4>}, {pipeline_mode = #tpu.pipeline_mode<synchronous>, transform_indices = @transform_2, window_bounds = array<i64: 1, 4>}, {pipeline_mode = #tpu.pipeline_mode<synchronous>, transform_indices = @transform_3, window_bounds = array<i64: 1, 4>}, {pipeline_mode = #tpu.pipeline_mode<synchronous>, transform_indices = @transform_4, window_bounds = array<i64: 36, 8>}, {pipeline_mode = #tpu.pipeline_mode<synchronous>, transform_indices = @transform_5, window_bounds = array<i64: 1, 8>}, {pipeline_mode = #tpu.pipeline_mode<synchronous>, transform_indices = @transform_6, window_bounds = array<i64: 1, 8>}, {transform_indices = @transform_7, window_bounds = array<i64: 1, 8, 16, 8>}]} {
    %c8_i32 = arith.constant 8 : i32
    %0 = arith.muli %arg1, %c8_i32 : i32
    %1 = tpu.assume_multiple %0, 8 : i32
    %c0_i32 = arith.constant 0 : i32
    %2 = arith.addi %1, %c0_i32 : i32
    %c0 = arith.constant 0 : index
    %3 = arith.index_cast %2 : i32 to index
    %c0_0 = arith.constant 0 : index
    %c0_1 = arith.constant 0 : index
    %4 = vector.load %arg2[%c0, %3, %c0_0, %c0_1] : memref<1x26x28x4xf32, #tpu.memory_space<vmem>>, vector<1x14x24x4xf32>
    %5 = vector.shape_cast %4 : vector<1x14x24x4xf32> to vector<14x24x4xf32>
    %c0_2 = arith.constant 0 : index
    %c0_3 = arith.constant 0 : index
    %c0_4 = arith.constant 0 : index
    %6 = vector.load %arg10[%c0_2, %c0_3, %c0_4] : memref<14x24x36xf32, #tpu.memory_space<vmem>>, vector<14x24x4xf32>
    tpu.vector_store %arg10[%c0_2, %c0_3, %c0_4], %5 {strides = array<i32>} : memref<14x24x36xf32, #tpu.memory_space<vmem>>, vector<14x24x4xf32>,
    %c0_i32_5 = arith.constant 0 : i32
    %7 = arith.addi %1, %c0_i32_5 : i32
    %c0_6 = arith.constant 0 : index
    %8 = arith.index_cast %7 : i32 to index
    %c2 = arith.constant 2 : index
    %c0_7 = arith.constant 0 : index
    %9 = vector.load %arg2[%c0_6, %8, %c2, %c0_7] : memref<1x26x28x4xf32, #tpu.memory_space<vmem>>, vector<1x14x24x4xf32>
    %10 = vector.shape_cast %9 : vector<1x14x24x4xf32> to vector<14x24x4xf32>
    %c0_8 = arith.constant 0 : index
    %c0_9 = arith.constant 0 : index
    %c4 = arith.constant 4 : index
    %11 = vector.load %arg10[%c0_8, %c0_9, %c4] : memref<14x24x36xf32, #tpu.memory_space<vmem>>, vector<14x24x4xf32>
    tpu.vector_store %arg10[%c0_8, %c0_9, %c4], %10 {strides = array<i32>} : memref<14x24x36xf32, #tpu.memory_space<vmem>>, vector<14x24x4xf32>,
    %c0_i32_10 = arith.constant 0 : i32
    %12 = arith.addi %1, %c0_i32_10 : i32
    %c0_11 = arith.constant 0 : index
    %13 = arith.index_cast %12 : i32 to index
    %c4_12 = arith.constant 4 : index
    %c0_13 = arith.constant 0 : index
    %14 = vector.load %arg2[%c0_11, %13, %c4_12, %c0_13] : memref<1x26x28x4xf32, #tpu.memory_space<vmem>>, vector<1x14x24x4xf32>
    %15 = vector.shape_cast %14 : vector<1x14x24x4xf32> to vector<14x24x4xf32>
    %c0_14 = arith.constant 0 : index
    %c0_15 = arith.constant 0 : index
    %c8 = arith.constant 8 : index
    %16 = vector.load %arg10[%c0_14, %c0_15, %c8] : memref<14x24x36xf32, #tpu.memory_space<vmem>>, vector<14x24x4xf32>
    tpu.vector_store %arg10[%c0_14, %c0_15, %c8], %15 {strides = array<i32>} : memref<14x24x36xf32, #tpu.memory_space<vmem>>, vector<14x24x4xf32>,
    %c2_i32 = arith.constant 2 : i32
    %17 = arith.addi %1, %c2_i32 : i32
    %c0_16 = arith.constant 0 : index
    %18 = arith.index_cast %17 : i32 to index
    %c0_17 = arith.constant 0 : index
    %c0_18 = arith.constant 0 : index
    %19 = vector.load %arg2[%c0_16, %18, %c0_17, %c0_18] : memref<1x26x28x4xf32, #tpu.memory_space<vmem>>, vector<1x14x24x4xf32>
    %20 = vector.shape_cast %19 : vector<1x14x24x4xf32> to vector<14x24x4xf32>
    %c0_19 = arith.constant 0 : index
    %c0_20 = arith.constant 0 : index
    %c12 = arith.constant 12 : index
    %21 = vector.load %arg10[%c0_19, %c0_20, %c12] : memref<14x24x36xf32, #tpu.memory_space<vmem>>, vector<14x24x4xf32>
    tpu.vector_store %arg10[%c0_19, %c0_20, %c12], %20 {strides = array<i32>} : memref<14x24x36xf32, #tpu.memory_space<vmem>>, vector<14x24x4xf32>,
    %c2_i32_21 = arith.constant 2 : i32
    %22 = arith.addi %1, %c2_i32_21 : i32
    %c0_22 = arith.constant 0 : index
    %23 = arith.index_cast %22 : i32 to index
    %c2_23 = arith.constant 2 : index
    %c0_24 = arith.constant 0 : index
    %24 = vector.load %arg2[%c0_22, %23, %c2_23, %c0_24] : memref<1x26x28x4xf32, #tpu.memory_space<vmem>>, vector<1x14x24x4xf32>
    %25 = vector.shape_cast %24 : vector<1x14x24x4xf32> to vector<14x24x4xf32>
    %c0_25 = arith.constant 0 : index
    %c0_26 = arith.constant 0 : index
    %c16 = arith.constant 16 : index
    %26 = vector.load %arg10[%c0_25, %c0_26, %c16] : memref<14x24x36xf32, #tpu.memory_space<vmem>>, vector<14x24x4xf32>
    tpu.vector_store %arg10[%c0_25, %c0_26, %c16], %25 {strides = array<i32>} : memref<14x24x36xf32, #tpu.memory_space<vmem>>, vector<14x24x4xf32>,
    %c2_i32_27 = arith.constant 2 : i32
    %27 = arith.addi %1, %c2_i32_27 : i32
    %c0_28 = arith.constant 0 : index
    %28 = arith.index_cast %27 : i32 to index
    %c4_29 = arith.constant 4 : index
    %c0_30 = arith.constant 0 : index
    %29 = vector.load %arg2[%c0_28, %28, %c4_29, %c0_30] : memref<1x26x28x4xf32, #tpu.memory_space<vmem>>, vector<1x14x24x4xf32>
    %30 = vector.shape_cast %29 : vector<1x14x24x4xf32> to vector<14x24x4xf32>
    %c0_31 = arith.constant 0 : index
    %c0_32 = arith.constant 0 : index
    %c20 = arith.constant 20 : index
    %31 = vector.load %arg10[%c0_31, %c0_32, %c20] : memref<14x24x36xf32, #tpu.memory_space<vmem>>, vector<14x24x4xf32>
    tpu.vector_store %arg10[%c0_31, %c0_32, %c20], %30 {strides = array<i32>} : memref<14x24x36xf32, #tpu.memory_space<vmem>>, vector<14x24x4xf32>,
    %c4_i32 = arith.constant 4 : i32
    %32 = arith.addi %1, %c4_i32 : i32
    %c0_33 = arith.constant 0 : index
    %33 = arith.index_cast %32 : i32 to index
    %c0_34 = arith.constant 0 : index
    %c0_35 = arith.constant 0 : index
    %34 = vector.load %arg2[%c0_33, %33, %c0_34, %c0_35] : memref<1x26x28x4xf32, #tpu.memory_space<vmem>>, vector<1x14x24x4xf32>
    %35 = vector.shape_cast %34 : vector<1x14x24x4xf32> to vector<14x24x4xf32>
    %c0_36 = arith.constant 0 : index
    %c0_37 = arith.constant 0 : index
    %c24 = arith.constant 24 : index
    %36 = vector.load %arg10[%c0_36, %c0_37, %c24] : memref<14x24x36xf32, #tpu.memory_space<vmem>>, vector<14x24x4xf32>
    tpu.vector_store %arg10[%c0_36, %c0_37, %c24], %35 {strides = array<i32>} : memref<14x24x36xf32, #tpu.memory_space<vmem>>, vector<14x24x4xf32>,
    %c4_i32_38 = arith.constant 4 : i32
    %37 = arith.addi %1, %c4_i32_38 : i32
    %c0_39 = arith.constant 0 : index
    %38 = arith.index_cast %37 : i32 to index
    %c2_40 = arith.constant 2 : index
    %c0_41 = arith.constant 0 : index
    %39 = vector.load %arg2[%c0_39, %38, %c2_40, %c0_41] : memref<1x26x28x4xf32, #tpu.memory_space<vmem>>, vector<1x14x24x4xf32>
    %40 = vector.shape_cast %39 : vector<1x14x24x4xf32> to vector<14x24x4xf32>
    %c0_42 = arith.constant 0 : index
    %c0_43 = arith.constant 0 : index
    %c28 = arith.constant 28 : index
    %41 = vector.load %arg10[%c0_42, %c0_43, %c28] : memref<14x24x36xf32, #tpu.memory_space<vmem>>, vector<14x24x4xf32>
    tpu.vector_store %arg10[%c0_42, %c0_43, %c28], %40 {strides = array<i32>} : memref<14x24x36xf32, #tpu.memory_space<vmem>>, vector<14x24x4xf32>,
    %c4_i32_44 = arith.constant 4 : i32
    %42 = arith.addi %1, %c4_i32_44 : i32
    %c0_45 = arith.constant 0 : index
    %43 = arith.index_cast %42 : i32 to index
    %c4_46 = arith.constant 4 : index
    %c0_47 = arith.constant 0 : index
    %44 = vector.load %arg2[%c0_45, %43, %c4_46, %c0_47] : memref<1x26x28x4xf32, #tpu.memory_space<vmem>>, vector<1x14x24x4xf32>
    %45 = vector.shape_cast %44 : vector<1x14x24x4xf32> to vector<14x24x4xf32>
    %c0_48 = arith.constant 0 : index
    %c0_49 = arith.constant 0 : index
    %c32 = arith.constant 32 : index
    %46 = vector.load %arg10[%c0_48, %c0_49, %c32] : memref<14x24x36xf32, #tpu.memory_space<vmem>>, vector<14x24x4xf32>
    tpu.vector_store %arg10[%c0_48, %c0_49, %c32], %45 {strides = array<i32>} : memref<14x24x36xf32, #tpu.memory_space<vmem>>, vector<14x24x4xf32>,
    %c0_50 = arith.constant 0 : index
    %c0_51 = arith.constant 0 : index
    %c0_52 = arith.constant 0 : index
    %47 = vector.load %arg10[%c0_50, %c0_51, %c0_52] : memref<14x24x36xf32, #tpu.memory_space<vmem>>, vector<14x24x36xf32>
    %c0_53 = arith.constant 0 : index
    %c0_54 = arith.constant 0 : index
    %48 = vector.load %arg3[%c0_53, %c0_54] : memref<36x4xf32, #tpu.memory_space<vmem>>, vector<36x4xf32>
    "tpu.trace_start"() <{level = 10 : i32, message = "rck,ko->rco"}> : () -> ()
    %cst = arith.constant dense<0.000000e+00> : vector<14x24x4xf32>
    %49 = tpu.matmul %47, %48, %cst {dimension_numbers = #tpu.dot_dimension_numbers<[2], [0], [0, 1], [1], [0, 0, 0, 1, 1, 1], [], []>} : vector<14x24x36xf32>, vector<36x4xf32>, vector<14x24x4xf32> -> vector<14x24x4xf32>
    "tpu.trace_stop"() : () -> ()
    %c0_55 = arith.constant 0 : index
    %c0_56 = arith.constant 0 : index
    %50 = vector.load %arg4[%c0_55, %c0_56] : memref<1x4xf32, #tpu.memory_space<vmem>>, vector<1x4xf32>
    %51 = vector.shape_cast %50 : vector<1x4xf32> to vector<4xf32>
    %52 = vector.shape_cast %51 : vector<4xf32> to vector<1x1x4xf32>
    %53 = vector.broadcast %52 : vector<1x1x4xf32> to vector<14x24x4xf32>
    %54 = arith.mulf %49, %53 : vector<14x24x4xf32>
    %c0_57 = arith.constant 0 : index
    %c0_58 = arith.constant 0 : index
    %55 = vector.load %arg5[%c0_57, %c0_58] : memref<1x4xf32, #tpu.memory_space<vmem>>, vector<1x4xf32>
    %56 = vector.shape_cast %55 : vector<1x4xf32> to vector<4xf32>
    %57 = vector.shape_cast %56 : vector<4xf32> to vector<1x1x4xf32>
    %58 = vector.broadcast %57 : vector<1x1x4xf32> to vector<14x24x4xf32>
    %59 = arith.addf %54, %58 : vector<14x24x4xf32>
    %cst_59 = arith.constant 0.000000e+00 : f32
    %60 = vector.broadcast %cst_59 : f32 to vector<14x24x4xf32>
    %61 = arith.maximumf %59, %60 : vector<14x24x4xf32>
    %62 = tpu.iota {dimensions = array<i32: 0>} : vector<14x24x1xi32>
    %c3_i32 = arith.constant 3 : i32
    %63 = arith.subi %0, %c3_i32 : i32
    %64 = vector.broadcast %63 : i32 to vector<14x24x1xi32>
    %65 = arith.addi %62, %64 : vector<14x24x1xi32>
    %66 = tpu.iota {dimensions = array<i32: 1>} : vector<14x24x1xi32>
    %c0_i32_60 = arith.constant 0 : i32
    %67 = vector.broadcast %c0_i32_60 : i32 to vector<14x24x1xi32>
    %68 = arith.cmpi sge, %65, %67 : vector<14x24x1xi32>
    %c16_i32 = arith.constant 16 : i32
    %69 = vector.broadcast %c16_i32 : i32 to vector<14x24x1xi32>
    %70 = arith.cmpi slt, %65, %69 : vector<14x24x1xi32>
    %71 = arith.andi %68, %70 : vector<14x24x1xi1>
    %c3_i32_61 = arith.constant 3 : i32
    %72 = vector.broadcast %c3_i32_61 : i32 to vector<14x24x1xi32>
    %73 = arith.cmpi sge, %66, %72 : vector<14x24x1xi32>
    %74 = arith.andi %71, %73 : vector<14x24x1xi1>
    %c19_i32 = arith.constant 19 : i32
    %75 = vector.broadcast %c19_i32 : i32 to vector<14x24x1xi32>
    %76 = arith.cmpi slt, %66, %75 : vector<14x24x1xi32>
    %77 = arith.andi %74, %76 : vector<14x24x1xi1>
    %cst_62 = arith.constant 0.000000e+00 : f32
    %78 = vector.shape_cast %77 : vector<14x24x1xi1> to vector<14x24x1xi1>
    %79 = vector.broadcast %78 : vector<14x24x1xi1> to vector<14x24x4xi1>
    %80 = vector.broadcast %cst_62 : f32 to vector<14x24x4xf32>
    %81 = arith.select %79, %61, %80 : vector<14x24x4xi1>, vector<14x24x4xf32>
    %c0_63 = arith.constant 0 : index
    %c0_64 = arith.constant 0 : index
    %c0_65 = arith.constant 0 : index
    %82 = vector.load %arg11[%c0_63, %c0_64, %c0_65] : memref<14x24x4xf32, #tpu.memory_space<vmem>>, vector<14x24x4xf32>
    tpu.vector_store %arg11[%c0_63, %c0_64, %c0_65], %81 {strides = array<i32>} : memref<14x24x4xf32, #tpu.memory_space<vmem>>, vector<14x24x4xf32>,
    %c0_66 = arith.constant 0 : index
    %c0_67 = arith.constant 0 : index
    %c0_68 = arith.constant 0 : index
    %83 = vector.load %arg11[%c0_66, %c0_67, %c0_68] : memref<14x24x4xf32, #tpu.memory_space<vmem>>, vector<8x16x4xf32>
    %c0_69 = arith.constant 0 : index
    %c0_70 = arith.constant 0 : index
    %c0_71 = arith.constant 0 : index
    %84 = vector.load %arg12[%c0_69, %c0_70, %c0_71] : memref<8x16x36xf32, #tpu.memory_space<vmem>>, vector<8x16x4xf32>
    tpu.vector_store %arg12[%c0_69, %c0_70, %c0_71], %83 {strides = array<i32>} : memref<8x16x36xf32, #tpu.memory_space<vmem>>, vector<8x16x4xf32>,
    %c0_72 = arith.constant 0 : index
    %c3 = arith.constant 3 : index
    %c0_73 = arith.constant 0 : index
    %85 = vector.load %arg11[%c0_72, %c3, %c0_73] : memref<14x24x4xf32, #tpu.memory_space<vmem>>, vector<8x16x4xf32>
    %c0_74 = arith.constant 0 : index
    %c0_75 = arith.constant 0 : index
    %c4_76 = arith.constant 4 : index
    %86 = vector.load %arg12[%c0_74, %c0_75, %c4_76] : memref<8x16x36xf32, #tpu.memory_space<vmem>>, vector<8x16x4xf32>
    tpu.vector_store %arg12[%c0_74, %c0_75, %c4_76], %85 {strides = array<i32>} : memref<8x16x36xf32, #tpu.memory_space<vmem>>, vector<8x16x4xf32>,
    %c0_77 = arith.constant 0 : index
    %c6 = arith.constant 6 : index
    %c0_78 = arith.constant 0 : index
    %87 = vector.load %arg11[%c0_77, %c6, %c0_78] : memref<14x24x4xf32, #tpu.memory_space<vmem>>, vector<8x16x4xf32>
    %c0_79 = arith.constant 0 : index
    %c0_80 = arith.constant 0 : index
    %c8_81 = arith.constant 8 : index
    %88 = vector.load %arg12[%c0_79, %c0_80, %c8_81] : memref<8x16x36xf32, #tpu.memory_space<vmem>>, vector<8x16x4xf32>
    tpu.vector_store %arg12[%c0_79, %c0_80, %c8_81], %87 {strides = array<i32>} : memref<8x16x36xf32, #tpu.memory_space<vmem>>, vector<8x16x4xf32>,
    %c3_82 = arith.constant 3 : index
    %c0_83 = arith.constant 0 : index
    %c0_84 = arith.constant 0 : index
    %89 = vector.load %arg11[%c3_82, %c0_83, %c0_84] : memref<14x24x4xf32, #tpu.memory_space<vmem>>, vector<8x16x4xf32>
    %c0_85 = arith.constant 0 : index
    %c0_86 = arith.constant 0 : index
    %c12_87 = arith.constant 12 : index
    %90 = vector.load %arg12[%c0_85, %c0_86, %c12_87] : memref<8x16x36xf32, #tpu.memory_space<vmem>>, vector<8x16x4xf32>
    tpu.vector_store %arg12[%c0_85, %c0_86, %c12_87], %89 {strides = array<i32>} : memref<8x16x36xf32, #tpu.memory_space<vmem>>, vector<8x16x4xf32>,
    %c3_88 = arith.constant 3 : index
    %c3_89 = arith.constant 3 : index
    %c0_90 = arith.constant 0 : index
    %91 = vector.load %arg11[%c3_88, %c3_89, %c0_90] : memref<14x24x4xf32, #tpu.memory_space<vmem>>, vector<8x16x4xf32>
    %c0_91 = arith.constant 0 : index
    %c0_92 = arith.constant 0 : index
    %c16_93 = arith.constant 16 : index
    %92 = vector.load %arg12[%c0_91, %c0_92, %c16_93] : memref<8x16x36xf32, #tpu.memory_space<vmem>>, vector<8x16x4xf32>
    tpu.vector_store %arg12[%c0_91, %c0_92, %c16_93], %91 {strides = array<i32>} : memref<8x16x36xf32, #tpu.memory_space<vmem>>, vector<8x16x4xf32>,
    %c3_94 = arith.constant 3 : index
    %c6_95 = arith.constant 6 : index
    %c0_96 = arith.constant 0 : index
    %93 = vector.load %arg11[%c3_94, %c6_95, %c0_96] : memref<14x24x4xf32, #tpu.memory_space<vmem>>, vector<8x16x4xf32>
    %c0_97 = arith.constant 0 : index
    %c0_98 = arith.constant 0 : index
    %c20_99 = arith.constant 20 : index
    %94 = vector.load %arg12[%c0_97, %c0_98, %c20_99] : memref<8x16x36xf32, #tpu.memory_space<vmem>>, vector<8x16x4xf32>
    tpu.vector_store %arg12[%c0_97, %c0_98, %c20_99], %93 {strides = array<i32>} : memref<8x16x36xf32, #tpu.memory_space<vmem>>, vector<8x16x4xf32>,
    %c6_100 = arith.constant 6 : index
    %c0_101 = arith.constant 0 : index
    %c0_102 = arith.constant 0 : index
    %95 = vector.load %arg11[%c6_100, %c0_101, %c0_102] : memref<14x24x4xf32, #tpu.memory_space<vmem>>, vector<8x16x4xf32>
    %c0_103 = arith.constant 0 : index
    %c0_104 = arith.constant 0 : index
    %c24_105 = arith.constant 24 : index
    %96 = vector.load %arg12[%c0_103, %c0_104, %c24_105] : memref<8x16x36xf32, #tpu.memory_space<vmem>>, vector<8x16x4xf32>
    tpu.vector_store %arg12[%c0_103, %c0_104, %c24_105], %95 {strides = array<i32>} : memref<8x16x36xf32, #tpu.memory_space<vmem>>, vector<8x16x4xf32>,
    %c6_106 = arith.constant 6 : index
    %c3_107 = arith.constant 3 : index
    %c0_108 = arith.constant 0 : index
    %97 = vector.load %arg11[%c6_106, %c3_107, %c0_108] : memref<14x24x4xf32, #tpu.memory_space<vmem>>, vector<8x16x4xf32>
    %c0_109 = arith.constant 0 : index
    %c0_110 = arith.constant 0 : index
    %c28_111 = arith.constant 28 : index
    %98 = vector.load %arg12[%c0_109, %c0_110, %c28_111] : memref<8x16x36xf32, #tpu.memory_space<vmem>>, vector<8x16x4xf32>
    tpu.vector_store %arg12[%c0_109, %c0_110, %c28_111], %97 {strides = array<i32>} : memref<8x16x36xf32, #tpu.memory_space<vmem>>, vector<8x16x4xf32>,
    %c6_112 = arith.constant 6 : index
    %c6_113 = arith.constant 6 : index
    %c0_114 = arith.constant 0 : index
    %99 = vector.load %arg11[%c6_112, %c6_113, %c0_114] : memref<14x24x4xf32, #tpu.memory_space<vmem>>, vector<8x16x4xf32>
    %c0_115 = arith.constant 0 : index
    %c0_116 = arith.constant 0 : index
    %c32_117 = arith.constant 32 : index
    %100 = vector.load %arg12[%c0_115, %c0_116, %c32_117] : memref<8x16x36xf32, #tpu.memory_space<vmem>>, vector<8x16x4xf32>
    tpu.vector_store %arg12[%c0_115, %c0_116, %c32_117], %99 {strides = array<i32>} : memref<8x16x36xf32, #tpu.memory_space<vmem>>, vector<8x16x4xf32>,
    %c0_118 = arith.constant 0 : index
    %c0_119 = arith.constant 0 : index
    %c0_120 = arith.constant 0 : index
    %101 = vector.load %arg12[%c0_118, %c0_119, %c0_120] : memref<8x16x36xf32, #tpu.memory_space<vmem>>, vector<8x16x36xf32>
    %c0_121 = arith.constant 0 : index
    %c0_122 = arith.constant 0 : index
    %102 = vector.load %arg6[%c0_121, %c0_122] : memref<36x8xf32, #tpu.memory_space<vmem>>, vector<36x8xf32>
    "tpu.trace_start"() <{level = 10 : i32, message = "rck,ko->rco"}> : () -> ()
    %cst_123 = arith.constant dense<0.000000e+00> : vector<8x16x8xf32>
    %103 = tpu.matmul %101, %102, %cst_123 {dimension_numbers = #tpu.dot_dimension_numbers<[2], [0], [0, 1], [1], [0, 0, 0, 1, 1, 1], [], []>} : vector<8x16x36xf32>, vector<36x8xf32>, vector<8x16x8xf32> -> vector<8x16x8xf32>
    "tpu.trace_stop"() : () -> ()
    %c0_124 = arith.constant 0 : index
    %c0_125 = arith.constant 0 : index
    %104 = vector.load %arg7[%c0_124, %c0_125] : memref<1x8xf32, #tpu.memory_space<vmem>>, vector<1x8xf32>
    %105 = vector.shape_cast %104 : vector<1x8xf32> to vector<8xf32>
    %106 = vector.shape_cast %105 : vector<8xf32> to vector<1x1x8xf32>
    %107 = vector.broadcast %106 : vector<1x1x8xf32> to vector<8x16x8xf32>
    %108 = arith.mulf %103, %107 : vector<8x16x8xf32>
    %c0_126 = arith.constant 0 : index
    %c0_127 = arith.constant 0 : index
    %109 = vector.load %arg8[%c0_126, %c0_127] : memref<1x8xf32, #tpu.memory_space<vmem>>, vector<1x8xf32>
    %110 = vector.shape_cast %109 : vector<1x8xf32> to vector<8xf32>
    %111 = vector.shape_cast %110 : vector<8xf32> to vector<1x1x8xf32>
    %112 = vector.broadcast %111 : vector<1x1x8xf32> to vector<8x16x8xf32>
    %113 = arith.addf %108, %112 : vector<8x16x8xf32>
    %cst_128 = arith.constant 0.000000e+00 : f32
    %114 = vector.broadcast %cst_128 : f32 to vector<8x16x8xf32>
    %115 = arith.maximumf %113, %114 : vector<8x16x8xf32>
    %c0_129 = arith.constant 0 : index
    %c0_130 = arith.constant 0 : index
    %c0_131 = arith.constant 0 : index
    %c0_132 = arith.constant 0 : index
    %116 = vector.load %arg9[%c0_129, %c0_130, %c0_131, %c0_132] : memref<1x8x16x8xf32, #tpu.memory_space<vmem>>, vector<1x8x16x8xf32>
    %117 = vector.shape_cast %116 : vector<1x8x16x8xf32> to vector<8x16x8xf32>
    %118 = vector.shape_cast %115 : vector<8x16x8xf32> to vector<1x8x16x8xf32>
    tpu.vector_store %arg9[%c0_129, %c0_130, %c0_131, %c0_132], %118 {strides = array<i32>} : memref<1x8x16x8xf32, #tpu.memory_space<vmem>>, vector<1x8x16x8xf32>,
    return
  }
  func.func @transform_0(%arg0: i32, %arg1: i32) -> (i32, i32, i32, i32) {
    %c0_i32 = arith.constant 0 : i32
    %c0_i32_0 = arith.constant 0 : i32
    %c0_i32_1 = arith.constant 0 : i32
    %c0_i32_2 = arith.constant 0 : i32
    return %arg0, %c0_i32, %c0_i32_0, %c0_i32_1 : i32, i32, i32, i32
  }
  func.func @transform_1(%arg0: i32, %arg1: i32) -> (i32, i32) {
    %c0_i32 = arith.constant 0 : i32
    %c0_i32_0 = arith.constant 0 : i32
    %c0_i32_1 = arith.constant 0 : i32
    return %c0_i32, %c0_i32_0 : i32, i32
  }
  func.func @transform_2(%arg0: i32, %arg1: i32) -> (i32, i32) {
    %c0_i32 = arith.constant 0 : i32
    %c0_i32_0 = arith.constant 0 : i32
    %c0_i32_1 = arith.constant 0 : i32
    return %c0_i32, %c0_i32_0 : i32, i32
  }
  func.func @transform_3(%arg0: i32, %arg1: i32) -> (i32, i32) {
    %c0_i32 = arith.constant 0 : i32
    %c0_i32_0 = arith.constant 0 : i32
    %c0_i32_1 = arith.constant 0 : i32
    return %c0_i32, %c0_i32_0 : i32, i32
  }
  func.func @transform_4(%arg0: i32, %arg1: i32) -> (i32, i32) {
    %c0_i32 = arith.constant 0 : i32
    %c0_i32_0 = arith.constant 0 : i32
    %c0_i32_1 = arith.constant 0 : i32
    return %c0_i32, %c0_i32_0 : i32, i32
  }
  func.func @transform_5(%arg0: i32, %arg1: i32) -> (i32, i32) {
    %c0_i32 = arith.constant 0 : i32
    %c0_i32_0 = arith.constant 0 : i32
    %c0_i32_1 = arith.constant 0 : i32
    return %c0_i32, %c0_i32_0 : i32, i32
  }
  func.func @transform_6(%arg0: i32, %arg1: i32) -> (i32, i32) {
    %c0_i32 = arith.constant 0 : i32
    %c0_i32_0 = arith.constant 0 : i32
    %c0_i32_1 = arith.constant 0 : i32
    return %c0_i32, %c0_i32_0 : i32, i32
  }
  func.func @transform_7(%arg0: i32, %arg1: i32) -> (i32, i32, i32, i32) {
    %c0_i32 = arith.constant 0 : i32
    %c0_i32_0 = arith.constant 0 : i32
    %c0_i32_1 = arith.constant 0 : i32
    return %arg0, %arg1, %c0_i32, %c0_i32_0 : i32, i32, i32, i32
  }
}

</mosaic_0001>

<llo_original>
// kernel: tpu_custom_call.1
$region0: #{tpu_custom_call.1}
  #allocation0 [shape = 'u32[]', space=smem, size = 0x4, offset = 0x4, fixed_abs, tag = 'smem constant byte address 0x4 - core index']
  #allocation1 [shape = 'u32[144,128]{1,0:T(1,128)}', space=vmem, size = 0x12000, scoped, tag = 'internal scratch']
  #allocation2 [shape = 'f32[14,24,36]{2,1,0:T(8,128)}', space=vmem, size = 0x2a000, scoped, tag = 'scratch operand']
  #allocation3 [shape = 'f32[14,24,4]{2,1,0:T(8,128)}', space=vmem, size = 0x2a000, scoped, tag = 'scratch operand']
  #allocation4 [shape = 'f32[8,16,36]{2,1,0:T(8,128)}', space=vmem, size = 0x10000, scoped, tag = 'scratch operand']
  %s0 = inlined_call_operand.hbm [shape: f32[2,26,28,4], index: 0, kind: input, shape index: {}]
  %s1 = inlined_call_operand.hbm [shape: f32[36,4], index: 1, kind: input, shape index: {}]
  %s2 = inlined_call_operand.hbm [shape: f32[1,4], index: 2, kind: input, shape index: {}]
  %s3 = inlined_call_operand.hbm [shape: f32[1,4], index: 3, kind: input, shape index: {}]
  %s4 = inlined_call_operand.hbm [shape: f32[36,8], index: 4, kind: input, shape index: {}]
  %s5 = inlined_call_operand.hbm [shape: f32[1,8], index: 5, kind: input, shape index: {}]
  %s6 = inlined_call_operand.hbm [shape: f32[1,8], index: 6, kind: input, shape index: {}]
  %s7 = inlined_call_operand.hbm [shape: f32[2,16,16,8], index: 7, kind: output, shape index: {}]
  %s8 = sld [smem:[#allocation0]]
  $region89: #{tpu_custom_call.1} parent=0
    _
  %s10 = ssub.s32 1, %s8
  %s11 = scalar_select 0, %s10, %s8
  $region1: #{tpu_custom_call.1} parent=0
    #allocation5 [shape = 'u8[851968]{0}', space=vmem, size = 0xd0000, scoped, tag = 'input window, operand 0']
    #allocation6 [shape = 's32[2]{0}', space=sflag, size = 0x8, scoped, tag = 'scoped memory for tpu_custom_call.1']
    #allocation7 [shape = 's32[2]{0}', space=sflag, size = 0x8, scoped, tag = 'scoped memory for tpu_custom_call.1']
    #allocation8 [shape = 'u8[20480]{0}', space=vmem, size = 0x5000, scoped, tag = 'input window, operand 1, single buffered']
    #allocation9 [shape = 's32[1]{0}', space=sflag, size = 0x4, scoped, tag = 'scoped memory for tpu_custom_call.1']
    #allocation10 [shape = 'u8[512]{0}', space=vmem, size = 0x400, scoped, tag = 'input window, operand 2, single buffered']
    #allocation11 [shape = 'u8[512]{0}', space=vmem, size = 0x400, scoped, tag = 'input window, operand 3, single buffered']
    #allocation12 [shape = 's32[1]{0}', space=sflag, size = 0x4, scoped, tag = 'scoped memory for tpu_custom_call.1']
    #allocation13 [shape = 'u8[20480]{0}', space=vmem, size = 0x5000, scoped, tag = 'input window, operand 4, single buffered']
    #allocation14 [shape = 'u8[512]{0}', space=vmem, size = 0x400, scoped, tag = 'input window, operand 5, single buffered']
    #allocation15 [shape = 's32[1]{0}', space=sflag, size = 0x4, scoped, tag = 'scoped memory for tpu_custom_call.1']
    #allocation16 [shape = 'u8[512]{0}', space=vmem, size = 0x400, scoped, tag = 'input window, operand 6, single buffered']
    #allocation17 [shape = 'u8[131072]{0}', space=vmem, size = 0x20000, scoped, tag = 'output window, operand 0']
    %12 = vsyncpa [#allocation6], 0
    %s13 = scalar_lea.sflag [#allocation6], 1
    %14 = vsyncpa %s13, 0
    %15 = vsyncpa [#allocation9], 0
    %16 = vsyncpa [#allocation12], 0
    %17 = vsyncpa [#allocation15], 0
    %18 = vsyncpa [#allocation7], 0
    %s19 = scalar_lea.sflag [#allocation7], 1
    %20 = vsyncpa %s19, 0
    loop: start=0, step=1, limit=6
    $region2: #{tpu_custom_call.1} parent=1 // loop_pre_header
      _
    $region3: #{tpu_custom_call.1} parent=1 // loop_header
      %s22 = sphi 0, %s26
      %p23 = scmp.ge.s32.totalorder %s22, 6
      %s29 = sphi 0, %s41
      %s30 = sphi 0, %s37
      %s31 = sphi 0, %s29
      %s32 = sphi 0, %s30
      %s33 = sphi 0, %s31
      %s34 = sphi 0, %s32
      %s44 = sphi 0, %s46
      %s47 = sphi 0, %s44
      %s48 = sphi 0, %s47
      %s64 = sphi 0, %s48
      %s68 = sphi 0, %s68
      %s70 = sphi 0, %s68
      %s71 = sphi 0, %s70
      %s85 = sphi 0, %s71
      %s89 = sphi 0, %s89
      %s91 = sphi 0, %s89
      %s92 = sphi 0, %s91
      %s106 = sphi 0, %s92
      %s110 = sphi 0, %s110
      %s112 = sphi 0, %s110
      %s113 = sphi 0, %s112
      %s127 = sphi 0, %s113
      %s131 = sphi 0, %s131
      %s133 = sphi 0, %s131
      %s134 = sphi 0, %s133
      %s148 = sphi 0, %s134
      %s152 = sphi 0, %s152
      %s154 = sphi 0, %s152
      %s155 = sphi 0, %s154
      %s169 = sphi 0, %s155
      %s173 = sphi 0, %s173
      %s175 = sphi 0, %s173
      %s176 = sphi 0, %s175
      %s190 = sphi 0, %s176
      %s198 = sphi 0, %s200
      %s201 = sphi 0, %s198
      %s202 = sphi 0, %s201
      %s218 = sphi 0, %s202
    $region4: #{tpu_custom_call.1} parent=1 // loop_header_branch
      %25 = sbr.rel (%p23) target = $region8
    $region5: #{tpu_custom_call.1} parent=1 // loop_body
      %s27 = ssub.s32 %s22, 1
      %s28 = ssub.s32 %s22, 2
      %s35 = sadd.s32 1, %s30
      %p36 = scmp.ge.s32.totalorder %s35, 2
      %s37 = scalar_select %p36, 0, %s35
      %s38 = sadd.s32 1, %s29
      %s39 = scalar_select %p36, %s38, %s29
      %p40 = scmp.ge.s32.totalorder %s39, 2
      %s41 = scalar_select %p40, 0, %s39
      %s42 = ssub.s32 %s29, %s41
      %p43 = scmp.eq.s32.totalorder %s42, 0
      %s45 = sadd.s32 %s44, 1
      %s46 = scalar_select %p43, %s44, %s45
      %p49 = pneg %p43
      %p50 = scmp.eq.s32.totalorder %s22, 3
      %p51 = por %p49, %p50
      %p52 = scmp.ne.s32.totalorder %s44, %s47
      %p53 = scmp.eq.s32.totalorder %s22, 0
      %p54 = por %p52, %p53
      %p55 = scmp.ne.s32.totalorder %s44, %s47
      %p56 = scmp.eq.s32.totalorder %s27, 3
      %p57 = por %p55, %p56
      %p58 = scmp.ne.s32.totalorder %s47, %s48
      %p59 = scmp.eq.s32.totalorder %s27, 0
      %p60 = por %p58, %p59
      %p61 = scmp.ne.s32.totalorder %s47, %s48
      %p62 = scmp.eq.s32.totalorder %s28, 3
      %p63 = por %p61, %p62
      %p65 = scmp.ne.s32.totalorder %s48, %s64
      %p66 = scmp.eq.s32.totalorder %s28, 0
      %p67 = por %p65, %p66
      %s69 = sadd.s32 %s68, 1
      %p72 = scmp.eq.s32.totalorder %s22, 3
      %p73 = scmp.ne.s32.totalorder %s68, %s70
      %p74 = scmp.eq.s32.totalorder %s22, 0
      %p75 = por %p73, %p74
      %p76 = scmp.ne.s32.totalorder %s68, %s70
      %p77 = scmp.eq.s32.totalorder %s27, 3
      %p78 = por %p76, %p77
      %p79 = scmp.ne.s32.totalorder %s70, %s71
      %p80 = scmp.eq.s32.totalorder %s27, 0
      %p81 = por %p79, %p80
      %p82 = scmp.ne.s32.totalorder %s70, %s71
      %p83 = scmp.eq.s32.totalorder %s28, 3
      %p84 = por %p82, %p83
      %p86 = scmp.ne.s32.totalorder %s71, %s85
      %p87 = scmp.eq.s32.totalorder %s28, 0
      %p88 = por %p86, %p87
      %s90 = sadd.s32 %s89, 1
      %p93 = scmp.eq.s32.totalorder %s22, 3
      %p94 = scmp.ne.s32.totalorder %s89, %s91
      %p95 = scmp.eq.s32.totalorder %s22, 0
      %p96 = por %p94, %p95
      %p97 = scmp.ne.s32.totalorder %s89, %s91
      %p98 = scmp.eq.s32.totalorder %s27, 3
      %p99 = por %p97, %p98
      %p100 = scmp.ne.s32.totalorder %s91, %s92
      %p101 = scmp.eq.s32.totalorder %s27, 0
      %p102 = por %p100, %p101
      %p103 = scmp.ne.s32.totalorder %s91, %s92
      %p104 = scmp.eq.s32.totalorder %s28, 3
      %p105 = por %p103, %p104
      %p107 = scmp.ne.s32.totalorder %s92, %s106
      %p108 = scmp.eq.s32.totalorder %s28, 0
      %p109 = por %p107, %p108
      %s111 = sadd.s32 %s110, 1
      %p114 = scmp.eq.s32.totalorder %s22, 3
      %p115 = scmp.ne.s32.totalorder %s110, %s112
      %p116 = scmp.eq.s32.totalorder %s22, 0
      %p117 = por %p115, %p116
      %p118 = scmp.ne.s32.totalorder %s110, %s112
      %p119 = scmp.eq.s32.totalorder %s27, 3
      %p120 = por %p118, %p119
      %p121 = scmp.ne.s32.totalorder %s112, %s113
      %p122 = scmp.eq.s32.totalorder %s27, 0
      %p123 = por %p121, %p122
      %p124 = scmp.ne.s32.totalorder %s112, %s113
      %p125 = scmp.eq.s32.totalorder %s28, 3
      %p126 = por %p124, %p125
      %p128 = scmp.ne.s32.totalorder %s113, %s127
      %p129 = scmp.eq.s32.totalorder %s28, 0
      %p130 = por %p128, %p129
      %s132 = sadd.s32 %s131, 1
      %p135 = scmp.eq.s32.totalorder %s22, 3
      %p136 = scmp.ne.s32.totalorder %s131, %s133
      %p137 = scmp.eq.s32.totalorder %s22, 0
      %p138 = por %p136, %p137
      %p139 = scmp.ne.s32.totalorder %s131, %s133
      %p140 = scmp.eq.s32.totalorder %s27, 3
      %p141 = por %p139, %p140
      %p142 = scmp.ne.s32.totalorder %s133, %s134
      %p143 = scmp.eq.s32.totalorder %s27, 0
      %p144 = por %p142, %p143
      %p145 = scmp.ne.s32.totalorder %s133, %s134
      %p146 = scmp.eq.s32.totalorder %s28, 3
      %p147 = por %p145, %p146
      %p149 = scmp.ne.s32.totalorder %s134, %s148
      %p150 = scmp.eq.s32.totalorder %s28, 0
      %p151 = por %p149, %p150
      %s153 = sadd.s32 %s152, 1
      %p156 = scmp.eq.s32.totalorder %s22, 3
      %p157 = scmp.ne.s32.totalorder %s152, %s154
      %p158 = scmp.eq.s32.totalorder %s22, 0
      %p159 = por %p157, %p158
      %p160 = scmp.ne.s32.totalorder %s152, %s154
      %p161 = scmp.eq.s32.totalorder %s27, 3
      %p162 = por %p160, %p161
      %p163 = scmp.ne.s32.totalorder %s154, %s155
      %p164 = scmp.eq.s32.totalorder %s27, 0
      %p165 = por %p163, %p164
      %p166 = scmp.ne.s32.totalorder %s154, %s155
      %p167 = scmp.eq.s32.totalorder %s28, 3
      %p168 = por %p166, %p167
      %p170 = scmp.ne.s32.totalorder %s155, %s169
      %p171 = scmp.eq.s32.totalorder %s28, 0
      %p172 = por %p170, %p171
      %s174 = sadd.s32 %s173, 1
      %p177 = scmp.eq.s32.totalorder %s22, 3
      %p178 = scmp.ne.s32.totalorder %s173, %s175
      %p179 = scmp.eq.s32.totalorder %s22, 0
      %p180 = por %p178, %p179
      %p181 = scmp.ne.s32.totalorder %s173, %s175
      %p182 = scmp.eq.s32.totalorder %s27, 3
      %p183 = por %p181, %p182
      %p184 = scmp.ne.s32.totalorder %s175, %s176
      %p185 = scmp.eq.s32.totalorder %s27, 0
      %p186 = por %p184, %p185
      %p187 = scmp.ne.s32.totalorder %s175, %s176
      %p188 = scmp.eq.s32.totalorder %s28, 3
      %p189 = por %p187, %p188
      %p191 = scmp.ne.s32.totalorder %s176, %s190
      %p192 = scmp.eq.s32.totalorder %s28, 0
      %p193 = por %p191, %p192
      %s194 = ssub.s32 %s29, %s41
      %s195 = ssub.s32 %s30, %s37
      %s196 = sor.u32 %s194, %s195
      %p197 = scmp.eq.s32.totalorder %s196, 0
      %s199 = sadd.s32 %s198, 1
      %s200 = scalar_select %p197, %s198, %s199
      %p203 = pneg %p197
      %p204 = scmp.eq.s32.totalorder %s22, 3
      %p205 = por %p203, %p204
      %p206 = scmp.ne.s32.totalorder %s198, %s201
      %p207 = scmp.eq.s32.totalorder %s22, 0
      %p208 = por %p206, %p207
      %p209 = scmp.ne.s32.totalorder %s198, %s201
      %p210 = scmp.eq.s32.totalorder %s27, 3
      %p211 = por %p209, %p210
      %p212 = scmp.ne.s32.totalorder %s201, %s202
      %p213 = scmp.eq.s32.totalorder %s27, 0
      %p214 = por %p212, %p213
      %p215 = scmp.ne.s32.totalorder %s201, %s202
      %p216 = scmp.eq.s32.totalorder %s28, 3
      %p217 = por %p215, %p216
      %p219 = scmp.ne.s32.totalorder %s202, %s218
      %p220 = scmp.eq.s32.totalorder %s28, 0
      %p221 = por %p219, %p220
      %p222 = scmp.le.s32.totalorder 1, %s22
      %p223 = scmp.lt.s32.totalorder %s22, 5
      %p224 = pnand %p222, %p223
      %p225 = pneg %p224
      // Predicated region
      $region9: #{tpu_custom_call.1} parent=5 // pred_check
        _
      $region10: #{tpu_custom_call.1} parent=5 // pred_check_branch
        %227 = sbr.rel (%p224) target = $region12
      $region11: #{tpu_custom_call.1} parent=5 // pred_region
        %s228 = ssub.s32 %s22, 1
        // Predicated region
        $region13: #{tpu_custom_call.1} parent=11 // pred_check
          %p229 = pneg %p81
        $region14: #{tpu_custom_call.1} parent=11 // pred_check_branch
          %231 = sbr.rel (%p229) target = $region16
        $region15: #{tpu_custom_call.1} parent=11 // pred_region
          %s233 = ssub.s32 640, 640
          %234 = vsyncadd [#allocation9], %s233
          %s235 = sshll.u32 [#allocation8], 4
          %s236 = int_to_ptr.vmem [resolvable:$true] %s235
          %241 = dma.hbm_to_vmem [thread:$0]  %s1, 640, %s236, [#allocation9], 128, 128, 8
        $region16: #{tpu_custom_call.1} parent=11 // pred_fallthru
          _
        // Predicated region
        $region17: #{tpu_custom_call.1} parent=11 // pred_check
          %p242 = pneg %p102
        $region18: #{tpu_custom_call.1} parent=11 // pred_check_branch
          %244 = sbr.rel (%p242) target = $region20
        $region19: #{tpu_custom_call.1} parent=11 // pred_region
          %s246 = ssub.s32 16, 16
          %247 = vsyncadd [#allocation9], %s246
          %s249 = sshll.u32 [#allocation10], 4
          %s250 = int_to_ptr.vmem [resolvable:$true] %s249
          %252 = dma.hbm_to_vmem [thread:$0]  %s2, 16, %s250, [#allocation9]
        $region20: #{tpu_custom_call.1} parent=11 // pred_fallthru
          _
        // Predicated region
        $region21: #{tpu_custom_call.1} parent=11 // pred_check
          %p253 = pneg %p123
        $region22: #{tpu_custom_call.1} parent=11 // pred_check_branch
          %255 = sbr.rel (%p253) target = $region24
        $region23: #{tpu_custom_call.1} parent=11 // pred_region
          %s257 = ssub.s32 16, 16
          %258 = vsyncadd [#allocation12], %s257
          %s260 = sshll.u32 [#allocation11], 4
          %s261 = int_to_ptr.vmem [resolvable:$true] %s260
          %263 = dma.hbm_to_vmem [thread:$0]  %s3, 16, %s261, [#allocation12]
        $region24: #{tpu_custom_call.1} parent=11 // pred_fallthru
          _
        // Predicated region
        $region25: #{tpu_custom_call.1} parent=11 // pred_check
          %p264 = pneg %p144
        $region26: #{tpu_custom_call.1} parent=11 // pred_check_branch
          %266 = sbr.rel (%p264) target = $region28
        $region27: #{tpu_custom_call.1} parent=11 // pred_region
          %s268 = ssub.s32 640, 640
          %269 = vsyncadd [#allocation12], %s268
          %s270 = sshll.u32 [#allocation13], 4
          %s271 = int_to_ptr.vmem [resolvable:$true] %s270
          %276 = dma.hbm_to_vmem [thread:$0]  %s4, 640, %s271, [#allocation12], 128, 128, 8
        $region28: #{tpu_custom_call.1} parent=11 // pred_fallthru
          _
        // Predicated region
        $region29: #{tpu_custom_call.1} parent=11 // pred_check
          %p277 = pneg %p165
        $region30: #{tpu_custom_call.1} parent=11 // pred_check_branch
          %279 = sbr.rel (%p277) target = $region32
        $region31: #{tpu_custom_call.1} parent=11 // pred_region
          %s281 = ssub.s32 16, 16
          %282 = vsyncadd [#allocation15], %s281
          %s284 = sshll.u32 [#allocation14], 4
          %s285 = int_to_ptr.vmem [resolvable:$true] %s284
          %287 = dma.hbm_to_vmem [thread:$0]  %s5, 16, %s285, [#allocation15]
        $region32: #{tpu_custom_call.1} parent=11 // pred_fallthru
          _
        // Predicated region
        $region33: #{tpu_custom_call.1} parent=11 // pred_check
          %p288 = pneg %p186
        $region34: #{tpu_custom_call.1} parent=11 // pred_check_branch
          %290 = sbr.rel (%p288) target = $region36
        $region35: #{tpu_custom_call.1} parent=11 // pred_region
          %s292 = ssub.s32 16, 16
          %293 = vsyncadd [#allocation15], %s292
          %s295 = sshll.u32 [#allocation16], 4
          %s296 = int_to_ptr.vmem [resolvable:$true] %s295
          %298 = dma.hbm_to_vmem [thread:$0]  %s6, 16, %s296, [#allocation15]
        $region36: #{tpu_custom_call.1} parent=11 // pred_fallthru
          _
      $region12: #{tpu_custom_call.1} parent=5 // pred_fallthru
        _
      %p299 = scmp.lt.s32.totalorder %s22, 4
      // Predicated region
      $region37: #{tpu_custom_call.1} parent=5 // pred_check
        %p300 = pneg %p299
      $region38: #{tpu_custom_call.1} parent=5 // pred_check_branch
        %302 = sbr.rel (%p300) target = $region40
      $region39: #{tpu_custom_call.1} parent=5 // pred_region
        // Predicated region
        $region41: #{tpu_custom_call.1} parent=39 // pred_check
          %p303 = pneg %p54
        $region42: #{tpu_custom_call.1} parent=39 // pred_check_branch
          %305 = sbr.rel (%p303) target = $region44
        $region43: #{tpu_custom_call.1} parent=39 // pred_region
          %s306 = sand.u32 %s44, 1
          %s307 = scalar_lea.sflag [#allocation6], %s306
          %s308 = sand.u32 %s44, 1
          %s309 = smul.addr %s308, 832
          %s310 = scalar_lea.vmem [#allocation5], %s309
          %s312 = ssub.s32 13312, 13312
          %313 = vsyncadd %s307, %s312
          %s314 = smul.addr %s29, 104
          %s315 = smul.addr %s314, 128
          %s316 = scalar_lea.hbm %s0, %s315
          %s317 = sshll.u32 %s310, 4
          %s318 = int_to_ptr.vmem [resolvable:$true] %s317
          %323 = dma.hbm_to_vmem [thread:$0]  %s316, 13312, %s318, %s307, 128, 128, 8
        $region44: #{tpu_custom_call.1} parent=39 // pred_fallthru
          _
      $region40: #{tpu_custom_call.1} parent=5 // pred_fallthru
        _
      %p324 = scmp.le.s32.totalorder 1, %s22
      %p325 = scmp.lt.s32.totalorder %s22, 5
      %p326 = pnand %p324, %p325
      %p327 = pneg %p326
      // Predicated region
      $region45: #{tpu_custom_call.1} parent=5 // pred_check
        _
      $region46: #{tpu_custom_call.1} parent=5 // pred_check_branch
        %329 = sbr.rel (%p326) target = $region48
      $region47: #{tpu_custom_call.1} parent=5 // pred_region
        %s330 = ssub.s32 %s22, 1
        %s331 = sand.u32 %s47, 1
        %s332 = scalar_lea.sflag [#allocation6], %s331
        %s333 = sand.u32 %s47, 1
        %s334 = smul.addr %s333, 832
        %s335 = scalar_lea.vmem [#allocation5], %s334
        // Predicated region
        $region49: #{tpu_custom_call.1} parent=47 // pred_check
          %p336 = pneg %p60
        $region50: #{tpu_custom_call.1} parent=47 // pred_check_branch
          %338 = sbr.rel (%p336) target = $region52
        $region51: #{tpu_custom_call.1} parent=47 // pred_region
          %339 = dma.done %s332, 13312
        $region52: #{tpu_custom_call.1} parent=47 // pred_fallthru
          _
        // Predicated region
        $region53: #{tpu_custom_call.1} parent=47 // pred_check
          %p340 = pneg %p81
        $region54: #{tpu_custom_call.1} parent=47 // pred_check_branch
          %342 = sbr.rel (%p340) target = $region56
        $region55: #{tpu_custom_call.1} parent=47 // pred_region
          %343 = dma.done [#allocation9], 640
        $region56: #{tpu_custom_call.1} parent=47 // pred_fallthru
          _
        // Predicated region
        $region57: #{tpu_custom_call.1} parent=47 // pred_check
          %p344 = pneg %p102
        $region58: #{tpu_custom_call.1} parent=47 // pred_check_branch
          %346 = sbr.rel (%p344) target = $region60
        $region59: #{tpu_custom_call.1} parent=47 // pred_region
          %347 = dma.done [#allocation9], 16
        $region60: #{tpu_custom_call.1} parent=47 // pred_fallthru
          _
        // Predicated region
        $region61: #{tpu_custom_call.1} parent=47 // pred_check
          %p348 = pneg %p123
        $region62: #{tpu_custom_call.1} parent=47 // pred_check_branch
          %350 = sbr.rel (%p348) target = $region64
        $region63: #{tpu_custom_call.1} parent=47 // pred_region
          %351 = dma.done [#allocation12], 16
        $region64: #{tpu_custom_call.1} parent=47 // pred_fallthru
          _
        // Predicated region
        $region65: #{tpu_custom_call.1} parent=47 // pred_check
          %p352 = pneg %p144
        $region66: #{tpu_custom_call.1} parent=47 // pred_check_branch
          %354 = sbr.rel (%p352) target = $region68
        $region67: #{tpu_custom_call.1} parent=47 // pred_region
          %355 = dma.done [#allocation12], 640
        $region68: #{tpu_custom_call.1} parent=47 // pred_fallthru
          _
        // Predicated region
        $region69: #{tpu_custom_call.1} parent=47 // pred_check
          %p356 = pneg %p165
        $region70: #{tpu_custom_call.1} parent=47 // pred_check_branch
          %358 = sbr.rel (%p356) target = $region72
        $region71: #{tpu_custom_call.1} parent=47 // pred_region
          %359 = dma.done [#allocation15], 16
        $region72: #{tpu_custom_call.1} parent=47 // pred_fallthru
          _
        // Predicated region
        $region73: #{tpu_custom_call.1} parent=47 // pred_check
          %p360 = pneg %p186
        $region74: #{tpu_custom_call.1} parent=47 // pred_check_branch
          %362 = sbr.rel (%p360) target = $region76
        $region75: #{tpu_custom_call.1} parent=47 // pred_region
          %363 = dma.done [#allocation15], 16
        $region76: #{tpu_custom_call.1} parent=47 // pred_fallthru
          _
        %s364 = sand.u32 %s47, 1
        %s365 = scalar_lea.sflag [#allocation6], %s364
        %s366 = sand.u32 %s47, 1
        %s367 = smul.addr %s366, 832
        %s368 = scalar_lea.vmem [#allocation5], %s367
        %p369 = pneg %p60
        %p370 = pneg %p57
        %p371 = pneg %p81
        %p372 = pneg %p78
        %p373 = pneg %p102
        %p374 = pneg %p99
        %p375 = pneg %p123
        %p376 = pneg %p120
        %p377 = pneg %p144
        %p378 = pneg %p141
        %p379 = pneg %p165
        %p380 = pneg %p162
        %p381 = pneg %p186
        %p382 = pneg %p183
        %p383 = pneg %p214
        %p384 = pneg %p211
        %s385 = sand.u32 %s201, 1
        %s386 = scalar_lea.sflag [#allocation7], %s385
        %s387 = sand.u32 %s201, 1
        %s388 = smul.addr %s387, 128
        %s389 = scalar_lea.vmem [#allocation17], %s388
        %s390 = smul.u32 8, %s32
        %s391 = smul.u32 %s32, 8
        %s392 = smul.u32 %s391, 32
        %s393 = scalar_lea.vmem %s335, %s392 [#allocation5]
        %v394 = vld [vmem:[%s393] sm:$0xff]
        %v395 = vld [vmem:[%s393 + $0x8] sm:$0xff]
        %v396 = vld [vmem:[%s393 + $0x10] sm:$0xff]
        %v397 = vld [vmem:[%s393 + $0x20] sm:$0xff]
        %v398 = vld [vmem:[%s393 + $0x28] sm:$0xff]
        %v399 = vld [vmem:[%s393 + $0x30] sm:$0xff]
        %v400 = vld [vmem:[%s393 + $0x40] sm:$0xff]
        %v401 = vld [vmem:[%s393 + $0x48] sm:$0xff]
        %v402 = vld [vmem:[%s393 + $0x50] sm:$0xff]
        %v403 = vld [vmem:[%s393 + $0x60] sm:$0xff]
        %v404 = vld [vmem:[%s393 + $0x68] sm:$0xff]
        %v405 = vld [vmem:[%s393 + $0x70] sm:$0xff]
        %v406 = vld [vmem:[%s393 + $0x80] sm:$0xff]
        %v407 = vld [vmem:[%s393 + $0x88] sm:$0xff]
        %v408 = vld [vmem:[%s393 + $0x90] sm:$0xff]
        %v409 = vld [vmem:[%s393 + $0xa0] sm:$0xff]
        %v410 = vld [vmem:[%s393 + $0xa8] sm:$0xff]
        %v411 = vld [vmem:[%s393 + $0xb0] sm:$0xff]
        %v412 = vld [vmem:[%s393 + $0xc0] sm:$0xff]
        %v413 = vld [vmem:[%s393 + $0xc8] sm:$0xff]
        %v414 = vld [vmem:[%s393 + $0xd0] sm:$0xff]
        %v415 = vld [vmem:[%s393 + $0xe0] sm:$0xff]
        %v416 = vld [vmem:[%s393 + $0xe8] sm:$0xff]
        %v417 = vld [vmem:[%s393 + $0xf0] sm:$0xff]
        %v418 = vld [vmem:[%s393 + $0x100] sm:$0xff]
        %v419 = vld [vmem:[%s393 + $0x108] sm:$0xff]
        %v420 = vld [vmem:[%s393 + $0x110] sm:$0xff]
        %v421 = vld [vmem:[%s393 + $0x120] sm:$0xff]
        %v422 = vld [vmem:[%s393 + $0x128] sm:$0xff]
        %v423 = vld [vmem:[%s393 + $0x130] sm:$0xff]
        %v424 = vld [vmem:[%s393 + $0x140] sm:$0xff]
        %v425 = vld [vmem:[%s393 + $0x148] sm:$0xff]
        %v426 = vld [vmem:[%s393 + $0x150] sm:$0xff]
        %v427 = vld [vmem:[%s393 + $0x160] sm:$0xff]
        %v428 = vld [vmem:[%s393 + $0x168] sm:$0xff]
        %v429 = vld [vmem:[%s393 + $0x170] sm:$0xff]
        %v430 = vld [vmem:[%s393 + $0x180] sm:$0xff]
        %v431 = vld [vmem:[%s393 + $0x188] sm:$0xff]
        %v432 = vld [vmem:[%s393 + $0x190] sm:$0xff]
        %v433 = vld [vmem:[%s393 + $0x1a0] sm:$0xff]
        %v434 = vld [vmem:[%s393 + $0x1a8] sm:$0xff]
        %v435 = vld [vmem:[%s393 + $0x1b0] sm:$0xff]
        %vm436 = vcmask 31744
        %437 = vst.msk [vmem:[#allocation2] sm:$0xff] %vm436, %v394
        %438 = vst.msk [vmem:[#allocation2 + $0x8] sm:$0xff] %vm436, %v395
        %439 = vst.msk [vmem:[#allocation2 + $0x10] sm:$0xff] %vm436, %v396
        %440 = vst.msk [vmem:[#allocation2 + $0x18] sm:$0xff] %vm436, %v397
        %441 = vst.msk [vmem:[#allocation2 + $0x20] sm:$0xff] %vm436, %v398
        %442 = vst.msk [vmem:[#allocation2 + $0x28] sm:$0xff] %vm436, %v399
        %443 = vst.msk [vmem:[#allocation2 + $0x30] sm:$0xff] %vm436, %v400
        %444 = vst.msk [vmem:[#allocation2 + $0x38] sm:$0xff] %vm436, %v401
        %445 = vst.msk [vmem:[#allocation2 + $0x40] sm:$0xff] %vm436, %v402
        %446 = vst.msk [vmem:[#allocation2 + $0x48] sm:$0xff] %vm436, %v403
        %447 = vst.msk [vmem:[#allocation2 + $0x50] sm:$0xff] %vm436, %v404
        %448 = vst.msk [vmem:[#allocation2 + $0x58] sm:$0xff] %vm436, %v405
        %449 = vst.msk [vmem:[#allocation2 + $0x60] sm:$0xff] %vm436, %v406
        %450 = vst.msk [vmem:[#allocation2 + $0x68] sm:$0xff] %vm436, %v407
        %451 = vst.msk [vmem:[#allocation2 + $0x70] sm:$0xff] %vm436, %v408
        %452 = vst.msk [vmem:[#allocation2 + $0x78] sm:$0xff] %vm436, %v409
        %453 = vst.msk [vmem:[#allocation2 + $0x80] sm:$0xff] %vm436, %v410
        %454 = vst.msk [vmem:[#allocation2 + $0x88] sm:$0xff] %vm436, %v411
        %455 = vst.msk [vmem:[#allocation2 + $0x90] sm:$0xff] %vm436, %v412
        %456 = vst.msk [vmem:[#allocation2 + $0x98] sm:$0xff] %vm436, %v413
        %457 = vst.msk [vmem:[#allocation2 + $0xa0] sm:$0xff] %vm436, %v414
        %458 = vst.msk [vmem:[#allocation2 + $0xa8] sm:$0xff] %vm436, %v415
        %459 = vst.msk [vmem:[#allocation2 + $0xb0] sm:$0xff] %vm436, %v416
        %460 = vst.msk [vmem:[#allocation2 + $0xb8] sm:$0xff] %vm436, %v417
        %461 = vst.msk [vmem:[#allocation2 + $0xc0] sm:$0xff] %vm436, %v418
        %462 = vst.msk [vmem:[#allocation2 + $0xc8] sm:$0xff] %vm436, %v419
        %463 = vst.msk [vmem:[#allocation2 + $0xd0] sm:$0xff] %vm436, %v420
        %464 = vst.msk [vmem:[#allocation2 + $0xd8] sm:$0xff] %vm436, %v421
        %465 = vst.msk [vmem:[#allocation2 + $0xe0] sm:$0xff] %vm436, %v422
        %466 = vst.msk [vmem:[#allocation2 + $0xe8] sm:$0xff] %vm436, %v423
        %467 = vst.msk [vmem:[#allocation2 + $0xf0] sm:$0xff] %vm436, %v424
        %468 = vst.msk [vmem:[#allocation2 + $0xf8] sm:$0xff] %vm436, %v425
        %469 = vst.msk [vmem:[#allocation2 + $0x100] sm:$0xff] %vm436, %v426
        %470 = vst.msk [vmem:[#allocation2 + $0x108] sm:$0xff] %vm436, %v427
        %471 = vst.msk [vmem:[#allocation2 + $0x110] sm:$0xff] %vm436, %v428
        %472 = vst.msk [vmem:[#allocation2 + $0x118] sm:$0xff] %vm436, %v429
        %473 = vst.msk [vmem:[#allocation2 + $0x120] sm:$0xff] %vm436, %v430
        %474 = vst.msk [vmem:[#allocation2 + $0x128] sm:$0xff] %vm436, %v431
        %475 = vst.msk [vmem:[#allocation2 + $0x130] sm:$0xff] %vm436, %v432
        %476 = vst.msk [vmem:[#allocation2 + $0x138] sm:$0xff] %vm436, %v433
        %477 = vst.msk [vmem:[#allocation2 + $0x140] sm:$0xff] %vm436, %v434
        %478 = vst.msk [vmem:[#allocation2 + $0x148] sm:$0xff] %vm436, %v435
        %v479 = vld [vmem:[%s393 + $0x2] sm:$0xff]
        %v480 = vld [vmem:[%s393 + $0xa] sm:$0xff]
        %v481 = vld [vmem:[%s393 + $0x12] sm:$0xff]
        %v482 = vld [vmem:[%s393 + $0x22] sm:$0xff]
        %v483 = vld [vmem:[%s393 + $0x2a] sm:$0xff]
        %v484 = vld [vmem:[%s393 + $0x32] sm:$0xff]
        %v485 = vld [vmem:[%s393 + $0x42] sm:$0xff]
        %v486 = vld [vmem:[%s393 + $0x4a] sm:$0xff]
        %v487 = vld [vmem:[%s393 + $0x52] sm:$0xff]
        %v488 = vld [vmem:[%s393 + $0x62] sm:$0xff]
        %v489 = vld [vmem:[%s393 + $0x6a] sm:$0xff]
        %v490 = vld [vmem:[%s393 + $0x72] sm:$0xff]
        %v491 = vld [vmem:[%s393 + $0x82] sm:$0xff]
        %v492 = vld [vmem:[%s393 + $0x8a] sm:$0xff]
        %v493 = vld [vmem:[%s393 + $0x92] sm:$0xff]
        %v494 = vld [vmem:[%s393 + $0xa2] sm:$0xff]
        %v495 = vld [vmem:[%s393 + $0xaa] sm:$0xff]
        %v496 = vld [vmem:[%s393 + $0xb2] sm:$0xff]
        %v497 = vld [vmem:[%s393 + $0xc2] sm:$0xff]
        %v498 = vld [vmem:[%s393 + $0xca] sm:$0xff]
        %v499 = vld [vmem:[%s393 + $0xd2] sm:$0xff]
        %v500 = vld [vmem:[%s393 + $0xe2] sm:$0xff]
        %v501 = vld [vmem:[%s393 + $0xea] sm:$0xff]
        %v502 = vld [vmem:[%s393 + $0xf2] sm:$0xff]
        %v503 = vld [vmem:[%s393 + $0x102] sm:$0xff]
        %v504 = vld [vmem:[%s393 + $0x10a] sm:$0xff]
        %v505 = vld [vmem:[%s393 + $0x112] sm:$0xff]
        %v506 = vld [vmem:[%s393 + $0x122] sm:$0xff]
        %v507 = vld [vmem:[%s393 + $0x12a] sm:$0xff]
        %v508 = vld [vmem:[%s393 + $0x132] sm:$0xff]
        %v509 = vld [vmem:[%s393 + $0x142] sm:$0xff]
        %v510 = vld [vmem:[%s393 + $0x14a] sm:$0xff]
        %v511 = vld [vmem:[%s393 + $0x152] sm:$0xff]
        %v512 = vld [vmem:[%s393 + $0x162] sm:$0xff]
        %v513 = vld [vmem:[%s393 + $0x16a] sm:$0xff]
        %v514 = vld [vmem:[%s393 + $0x172] sm:$0xff]
        %v515 = vld [vmem:[%s393 + $0x182] sm:$0xff]
        %v516 = vld [vmem:[%s393 + $0x18a] sm:$0xff]
        %v517 = vld [vmem:[%s393 + $0x192] sm:$0xff]
        %v518 = vld [vmem:[%s393 + $0x1a2] sm:$0xff]
        %v519 = vld [vmem:[%s393 + $0x1aa] sm:$0xff]
        %v520 = vld [vmem:[%s393 + $0x1b2] sm:$0xff]
        %563 = vrot.lane.b32.xlu0 %v479, 4
        %v564 = vpop.permute.xlu0 %563
        %565 = vrot.lane.b32.xlu0 %v480, 4
        %v566 = vpop.permute.xlu0 %565
        %567 = vrot.lane.b32.xlu0 %v481, 4
        %v568 = vpop.permute.xlu0 %567
        %569 = vrot.lane.b32.xlu0 %v482, 4
        %v570 = vpop.permute.xlu0 %569
        %571 = vrot.lane.b32.xlu0 %v483, 4
        %v572 = vpop.permute.xlu0 %571
        %573 = vrot.lane.b32.xlu0 %v484, 4
        %v574 = vpop.permute.xlu0 %573
        %575 = vrot.lane.b32.xlu0 %v485, 4
        %v576 = vpop.permute.xlu0 %575
        %577 = vrot.lane.b32.xlu0 %v486, 4
        %v578 = vpop.permute.xlu0 %577
        %579 = vrot.lane.b32.xlu0 %v487, 4
        %v580 = vpop.permute.xlu0 %579
        %581 = vrot.lane.b32.xlu0 %v488, 4
        %v582 = vpop.permute.xlu0 %581
        %583 = vrot.lane.b32.xlu0 %v489, 4
        %v584 = vpop.permute.xlu0 %583
        %585 = vrot.lane.b32.xlu0 %v490, 4
        %v586 = vpop.permute.xlu0 %585
        %587 = vrot.lane.b32.xlu0 %v491, 4
        %v588 = vpop.permute.xlu0 %587
        %589 = vrot.lane.b32.xlu0 %v492, 4
        %v590 = vpop.permute.xlu0 %589
        %591 = vrot.lane.b32.xlu0 %v493, 4
        %v592 = vpop.permute.xlu0 %591
        %593 = vrot.lane.b32.xlu0 %v494, 4
        %v594 = vpop.permute.xlu0 %593
        %595 = vrot.lane.b32.xlu0 %v495, 4
        %v596 = vpop.permute.xlu0 %595
        %597 = vrot.lane.b32.xlu0 %v496, 4
        %v598 = vpop.permute.xlu0 %597
        %599 = vrot.lane.b32.xlu0 %v497, 4
        %v600 = vpop.permute.xlu0 %599
        %601 = vrot.lane.b32.xlu0 %v498, 4
        %v602 = vpop.permute.xlu0 %601
        %603 = vrot.lane.b32.xlu0 %v499, 4
        %v604 = vpop.permute.xlu0 %603
        %605 = vrot.lane.b32.xlu0 %v500, 4
        %v606 = vpop.permute.xlu0 %605
        %607 = vrot.lane.b32.xlu0 %v501, 4
        %v608 = vpop.permute.xlu0 %607
        %609 = vrot.lane.b32.xlu0 %v502, 4
        %v610 = vpop.permute.xlu0 %609
        %611 = vrot.lane.b32.xlu0 %v503, 4
        %v612 = vpop.permute.xlu0 %611
        %613 = vrot.lane.b32.xlu0 %v504, 4
        %v614 = vpop.permute.xlu0 %613
        %615 = vrot.lane.b32.xlu0 %v505, 4
        %v616 = vpop.permute.xlu0 %615
        %617 = vrot.lane.b32.xlu0 %v506, 4
        %v618 = vpop.permute.xlu0 %617
        %619 = vrot.lane.b32.xlu0 %v507, 4
        %v620 = vpop.permute.xlu0 %619
        %621 = vrot.lane.b32.xlu0 %v508, 4
        %v622 = vpop.permute.xlu0 %621
        %623 = vrot.lane.b32.xlu0 %v509, 4
        %v624 = vpop.permute.xlu0 %623
        %625 = vrot.lane.b32.xlu0 %v510, 4
        %v626 = vpop.permute.xlu0 %625
        %627 = vrot.lane.b32.xlu0 %v511, 4
        %v628 = vpop.permute.xlu0 %627
        %629 = vrot.lane.b32.xlu0 %v512, 4
        %v630 = vpop.permute.xlu0 %629
        %631 = vrot.lane.b32.xlu0 %v513, 4
        %v632 = vpop.permute.xlu0 %631
        %633 = vrot.lane.b32.xlu0 %v514, 4
        %v634 = vpop.permute.xlu0 %633
        %635 = vrot.lane.b32.xlu0 %v515, 4
        %v636 = vpop.permute.xlu0 %635
        %637 = vrot.lane.b32.xlu0 %v516, 4
        %v638 = vpop.permute.xlu0 %637
        %639 = vrot.lane.b32.xlu0 %v517, 4
        %v640 = vpop.permute.xlu0 %639
        %641 = vrot.lane.b32.xlu0 %v518, 4
        %v642 = vpop.permute.xlu0 %641
        %643 = vrot.lane.b32.xlu0 %v519, 4
        %v644 = vpop.permute.xlu0 %643
        %645 = vrot.lane.b32.xlu0 %v520, 4
        %v646 = vpop.permute.xlu0 %645
        %vm689 = vcmask 64544
        %690 = vst.msk [vmem:[#allocation2] sm:$0xff] %vm689, %v564
        %691 = vst.msk [vmem:[#allocation2 + $0x8] sm:$0xff] %vm689, %v566
        %692 = vst.msk [vmem:[#allocation2 + $0x10] sm:$0xff] %vm689, %v568
        %693 = vst.msk [vmem:[#allocation2 + $0x18] sm:$0xff] %vm689, %v570
        %694 = vst.msk [vmem:[#allocation2 + $0x20] sm:$0xff] %vm689, %v572
        %695 = vst.msk [vmem:[#allocation2 + $0x28] sm:$0xff] %vm689, %v574
        %696 = vst.msk [vmem:[#allocation2 + $0x30] sm:$0xff] %vm689, %v576
        %697 = vst.msk [vmem:[#allocation2 + $0x38] sm:$0xff] %vm689, %v578
        %698 = vst.msk [vmem:[#allocation2 + $0x40] sm:$0xff] %vm689, %v580
        %699 = vst.msk [vmem:[#allocation2 + $0x48] sm:$0xff] %vm689, %v582
        %700 = vst.msk [vmem:[#allocation2 + $0x50] sm:$0xff] %vm689, %v584
        %701 = vst.msk [vmem:[#allocation2 + $0x58] sm:$0xff] %vm689, %v586
        %702 = vst.msk [vmem:[#allocation2 + $0x60] sm:$0xff] %vm689, %v588
        %703 = vst.msk [vmem:[#allocation2 + $0x68] sm:$0xff] %vm689, %v590
        %704 = vst.msk [vmem:[#allocation2 + $0x70] sm:$0xff] %vm689, %v592
        %705 = vst.msk [vmem:[#allocation2 + $0x78] sm:$0xff] %vm689, %v594
        %706 = vst.msk [vmem:[#allocation2 + $0x80] sm:$0xff] %vm689, %v596
        %707 = vst.msk [vmem:[#allocation2 + $0x88] sm:$0xff] %vm689, %v598
        %708 = vst.msk [vmem:[#allocation2 + $0x90] sm:$0xff] %vm689, %v600
        %709 = vst.msk [vmem:[#allocation2 + $0x98] sm:$0xff] %vm689, %v602
        %710 = vst.msk [vmem:[#allocation2 + $0xa0] sm:$0xff] %vm689, %v604
        %711 = vst.msk [vmem:[#allocation2 + $0xa8] sm:$0xff] %vm689, %v606
        %712 = vst.msk [vmem:[#allocation2 + $0xb0] sm:$0xff] %vm689, %v608
        %713 = vst.msk [vmem:[#allocation2 + $0xb8] sm:$0xff] %vm689, %v610
        %714 = vst.msk [vmem:[#allocation2 + $0xc0] sm:$0xff] %vm689, %v612
        %715 = vst.msk [vmem:[#allocation2 + $0xc8] sm:$0xff] %vm689, %v614
        %716 = vst.msk [vmem:[#allocation2 + $0xd0] sm:$0xff] %vm689, %v616
        %717 = vst.msk [vmem:[#allocation2 + $0xd8] sm:$0xff] %vm689, %v618
        %718 = vst.msk [vmem:[#allocation2 + $0xe0] sm:$0xff] %vm689, %v620
        %719 = vst.msk [vmem:[#allocation2 + $0xe8] sm:$0xff] %vm689, %v622
        %720 = vst.msk [vmem:[#allocation2 + $0xf0] sm:$0xff] %vm689, %v624
        %721 = vst.msk [vmem:[#allocation2 + $0xf8] sm:$0xff] %vm689, %v626
        %722 = vst.msk [vmem:[#allocation2 + $0x100] sm:$0xff] %vm689, %v628
        %723 = vst.msk [vmem:[#allocation2 + $0x108] sm:$0xff] %vm689, %v630
        %724 = vst.msk [vmem:[#allocation2 + $0x110] sm:$0xff] %vm689, %v632
        %725 = vst.msk [vmem:[#allocation2 + $0x118] sm:$0xff] %vm689, %v634
        %726 = vst.msk [vmem:[#allocation2 + $0x120] sm:$0xff] %vm689, %v636
        %727 = vst.msk [vmem:[#allocation2 + $0x128] sm:$0xff] %vm689, %v638
        %728 = vst.msk [vmem:[#allocation2 + $0x130] sm:$0xff] %vm689, %v640
        %729 = vst.msk [vmem:[#allocation2 + $0x138] sm:$0xff] %vm689, %v642
        %730 = vst.msk [vmem:[#allocation2 + $0x140] sm:$0xff] %vm689, %v644
        %731 = vst.msk [vmem:[#allocation2 + $0x148] sm:$0xff] %vm689, %v646
        %v732 = vld [vmem:[%s393 + $0x4] sm:$0xff]
        %v733 = vld [vmem:[%s393 + $0xc] sm:$0xff]
        %v734 = vld [vmem:[%s393 + $0x14] sm:$0xff]
        %v735 = vld [vmem:[%s393 + $0x24] sm:$0xff]
        %v736 = vld [vmem:[%s393 + $0x2c] sm:$0xff]
        %v737 = vld [vmem:[%s393 + $0x34] sm:$0xff]
        %v738 = vld [vmem:[%s393 + $0x44] sm:$0xff]
        %v739 = vld [vmem:[%s393 + $0x4c] sm:$0xff]
        %v740 = vld [vmem:[%s393 + $0x54] sm:$0xff]
        %v741 = vld [vmem:[%s393 + $0x64] sm:$0xff]
        %v742 = vld [vmem:[%s393 + $0x6c] sm:$0xff]
        %v743 = vld [vmem:[%s393 + $0x74] sm:$0xff]
        %v744 = vld [vmem:[%s393 + $0x84] sm:$0xff]
        %v745 = vld [vmem:[%s393 + $0x8c] sm:$0xff]
        %v746 = vld [vmem:[%s393 + $0x94] sm:$0xff]
        %v747 = vld [vmem:[%s393 + $0xa4] sm:$0xff]
        %v748 = vld [vmem:[%s393 + $0xac] sm:$0xff]
        %v749 = vld [vmem:[%s393 + $0xb4] sm:$0xff]
        %v750 = vld [vmem:[%s393 + $0xc4] sm:$0xff]
        %v751 = vld [vmem:[%s393 + $0xcc] sm:$0xff]
        %v752 = vld [vmem:[%s393 + $0xd4] sm:$0xff]
        %v753 = vld [vmem:[%s393 + $0xe4] sm:$0xff]
        %v754 = vld [vmem:[%s393 + $0xec] sm:$0xff]
        %v755 = vld [vmem:[%s393 + $0xf4] sm:$0xff]
        %v756 = vld [vmem:[%s393 + $0x104] sm:$0xff]
        %v757 = vld [vmem:[%s393 + $0x10c] sm:$0xff]
        %v758 = vld [vmem:[%s393 + $0x114] sm:$0xff]
        %v759 = vld [vmem:[%s393 + $0x124] sm:$0xff]
        %v760 = vld [vmem:[%s393 + $0x12c] sm:$0xff]
        %v761 = vld [vmem:[%s393 + $0x134] sm:$0xff]
        %v762 = vld [vmem:[%s393 + $0x144] sm:$0xff]
        %v763 = vld [vmem:[%s393 + $0x14c] sm:$0xff]
        %v764 = vld [vmem:[%s393 + $0x154] sm:$0xff]
        %v765 = vld [vmem:[%s393 + $0x164] sm:$0xff]
        %v766 = vld [vmem:[%s393 + $0x16c] sm:$0xff]
        %v767 = vld [vmem:[%s393 + $0x174] sm:$0xff]
        %v768 = vld [vmem:[%s393 + $0x184] sm:$0xff]
        %v769 = vld [vmem:[%s393 + $0x18c] sm:$0xff]
        %v770 = vld [vmem:[%s393 + $0x194] sm:$0xff]
        %v771 = vld [vmem:[%s393 + $0x1a4] sm:$0xff]
        %v772 = vld [vmem:[%s393 + $0x1ac] sm:$0xff]
        %v773 = vld [vmem:[%s393 + $0x1b4] sm:$0xff]
        %816 = vrot.lane.b32.xlu0 %v732, 8
        %v817 = vpop.permute.xlu0 %816
        %818 = vrot.lane.b32.xlu0 %v733, 8
        %v819 = vpop.permute.xlu0 %818
        %820 = vrot.lane.b32.xlu0 %v734, 8
        %v821 = vpop.permute.xlu0 %820
        %822 = vrot.lane.b32.xlu0 %v735, 8
        %v823 = vpop.permute.xlu0 %822
        %824 = vrot.lane.b32.xlu0 %v736, 8
        %v825 = vpop.permute.xlu0 %824
        %826 = vrot.lane.b32.xlu0 %v737, 8
        %v827 = vpop.permute.xlu0 %826
        %828 = vrot.lane.b32.xlu0 %v738, 8
        %v829 = vpop.permute.xlu0 %828
        %830 = vrot.lane.b32.xlu0 %v739, 8
        %v831 = vpop.permute.xlu0 %830
        %832 = vrot.lane.b32.xlu0 %v740, 8
        %v833 = vpop.permute.xlu0 %832
        %834 = vrot.lane.b32.xlu0 %v741, 8
        %v835 = vpop.permute.xlu0 %834
        %836 = vrot.lane.b32.xlu0 %v742, 8
        %v837 = vpop.permute.xlu0 %836
        %838 = vrot.lane.b32.xlu0 %v743, 8
        %v839 = vpop.permute.xlu0 %838
        %840 = vrot.lane.b32.xlu0 %v744, 8
        %v841 = vpop.permute.xlu0 %840
        %842 = vrot.lane.b32.xlu0 %v745, 8
        %v843 = vpop.permute.xlu0 %842
        %844 = vrot.lane.b32.xlu0 %v746, 8
        %v845 = vpop.permute.xlu0 %844
        %846 = vrot.lane.b32.xlu0 %v747, 8
        %v847 = vpop.permute.xlu0 %846
        %848 = vrot.lane.b32.xlu0 %v748, 8
        %v849 = vpop.permute.xlu0 %848
        %850 = vrot.lane.b32.xlu0 %v749, 8
        %v851 = vpop.permute.xlu0 %850
        %852 = vrot.lane.b32.xlu0 %v750, 8
        %v853 = vpop.permute.xlu0 %852
        %854 = vrot.lane.b32.xlu0 %v751, 8
        %v855 = vpop.permute.xlu0 %854
        %856 = vrot.lane.b32.xlu0 %v752, 8
        %v857 = vpop.permute.xlu0 %856
        %858 = vrot.lane.b32.xlu0 %v753, 8
        %v859 = vpop.permute.xlu0 %858
        %860 = vrot.lane.b32.xlu0 %v754, 8
        %v861 = vpop.permute.xlu0 %860
        %862 = vrot.lane.b32.xlu0 %v755, 8
        %v863 = vpop.permute.xlu0 %862
        %864 = vrot.lane.b32.xlu0 %v756, 8
        %v865 = vpop.permute.xlu0 %864
        %866 = vrot.lane.b32.xlu0 %v757, 8
        %v867 = vpop.permute.xlu0 %866
        %868 = vrot.lane.b32.xlu0 %v758, 8
        %v869 = vpop.permute.xlu0 %868
        %870 = vrot.lane.b32.xlu0 %v759, 8
        %v871 = vpop.permute.xlu0 %870
        %872 = vrot.lane.b32.xlu0 %v760, 8
        %v873 = vpop.permute.xlu0 %872
        %874 = vrot.lane.b32.xlu0 %v761, 8
        %v875 = vpop.permute.xlu0 %874
        %876 = vrot.lane.b32.xlu0 %v762, 8
        %v877 = vpop.permute.xlu0 %876
        %878 = vrot.lane.b32.xlu0 %v763, 8
        %v879 = vpop.permute.xlu0 %878
        %880 = vrot.lane.b32.xlu0 %v764, 8
        %v881 = vpop.permute.xlu0 %880
        %882 = vrot.lane.b32.xlu0 %v765, 8
        %v883 = vpop.permute.xlu0 %882
        %884 = vrot.lane.b32.xlu0 %v766, 8
        %v885 = vpop.permute.xlu0 %884
        %886 = vrot.lane.b32.xlu0 %v767, 8
        %v887 = vpop.permute.xlu0 %886
        %888 = vrot.lane.b32.xlu0 %v768, 8
        %v889 = vpop.permute.xlu0 %888
        %890 = vrot.lane.b32.xlu0 %v769, 8
        %v891 = vpop.permute.xlu0 %890
        %892 = vrot.lane.b32.xlu0 %v770, 8
        %v893 = vpop.permute.xlu0 %892
        %894 = vrot.lane.b32.xlu0 %v771, 8
        %v895 = vpop.permute.xlu0 %894
        %896 = vrot.lane.b32.xlu0 %v772, 8
        %v897 = vpop.permute.xlu0 %896
        %898 = vrot.lane.b32.xlu0 %v773, 8
        %v899 = vpop.permute.xlu0 %898
        %vm942 = vcmask 97344
        %943 = vst.msk [vmem:[#allocation2] sm:$0xff] %vm942, %v817
        %944 = vst.msk [vmem:[#allocation2 + $0x8] sm:$0xff] %vm942, %v819
        %945 = vst.msk [vmem:[#allocation2 + $0x10] sm:$0xff] %vm942, %v821
        %946 = vst.msk [vmem:[#allocation2 + $0x18] sm:$0xff] %vm942, %v823
        %947 = vst.msk [vmem:[#allocation2 + $0x20] sm:$0xff] %vm942, %v825
        %948 = vst.msk [vmem:[#allocation2 + $0x28] sm:$0xff] %vm942, %v827
        %949 = vst.msk [vmem:[#allocation2 + $0x30] sm:$0xff] %vm942, %v829
        %950 = vst.msk [vmem:[#allocation2 + $0x38] sm:$0xff] %vm942, %v831
        %951 = vst.msk [vmem:[#allocation2 + $0x40] sm:$0xff] %vm942, %v833
        %952 = vst.msk [vmem:[#allocation2 + $0x48] sm:$0xff] %vm942, %v835
        %953 = vst.msk [vmem:[#allocation2 + $0x50] sm:$0xff] %vm942, %v837
        %954 = vst.msk [vmem:[#allocation2 + $0x58] sm:$0xff] %vm942, %v839
        %955 = vst.msk [vmem:[#allocation2 + $0x60] sm:$0xff] %vm942, %v841
        %956 = vst.msk [vmem:[#allocation2 + $0x68] sm:$0xff] %vm942, %v843
        %957 = vst.msk [vmem:[#allocation2 + $0x70] sm:$0xff] %vm942, %v845
        %958 = vst.msk [vmem:[#allocation2 + $0x78] sm:$0xff] %vm942, %v847
        %959 = vst.msk [vmem:[#allocation2 + $0x80] sm:$0xff] %vm942, %v849
        %960 = vst.msk [vmem:[#allocation2 + $0x88] sm:$0xff] %vm942, %v851
        %961 = vst.msk [vmem:[#allocation2 + $0x90] sm:$0xff] %vm942, %v853
        %962 = vst.msk [vmem:[#allocation2 + $0x98] sm:$0xff] %vm942, %v855
        %963 = vst.msk [vmem:[#allocation2 + $0xa0] sm:$0xff] %vm942, %v857
        %964 = vst.msk [vmem:[#allocation2 + $0xa8] sm:$0xff] %vm942, %v859
        %965 = vst.msk [vmem:[#allocation2 + $0xb0] sm:$0xff] %vm942, %v861
        %966 = vst.msk [vmem:[#allocation2 + $0xb8] sm:$0xff] %vm942, %v863
        %967 = vst.msk [vmem:[#allocation2 + $0xc0] sm:$0xff] %vm942, %v865
        %968 = vst.msk [vmem:[#allocation2 + $0xc8] sm:$0xff] %vm942, %v867
        %969 = vst.msk [vmem:[#allocation2 + $0xd0] sm:$0xff] %vm942, %v869
        %970 = vst.msk [vmem:[#allocation2 + $0xd8] sm:$0xff] %vm942, %v871
        %971 = vst.msk [vmem:[#allocation2 + $0xe0] sm:$0xff] %vm942, %v873
        %972 = vst.msk [vmem:[#allocation2 + $0xe8] sm:$0xff] %vm942, %v875
        %973 = vst.msk [vmem:[#allocation2 + $0xf0] sm:$0xff] %vm942, %v877
        %974 = vst.msk [vmem:[#allocation2 + $0xf8] sm:$0xff] %vm942, %v879
        %975 = vst.msk [vmem:[#allocation2 + $0x100] sm:$0xff] %vm942, %v881
        %976 = vst.msk [vmem:[#allocation2 + $0x108] sm:$0xff] %vm942, %v883
        %977 = vst.msk [vmem:[#allocation2 + $0x110] sm:$0xff] %vm942, %v885
        %978 = vst.msk [vmem:[#allocation2 + $0x118] sm:$0xff] %vm942, %v887
        %979 = vst.msk [vmem:[#allocation2 + $0x120] sm:$0xff] %vm942, %v889
        %980 = vst.msk [vmem:[#allocation2 + $0x128] sm:$0xff] %vm942, %v891
        %981 = vst.msk [vmem:[#allocation2 + $0x130] sm:$0xff] %vm942, %v893
        %982 = vst.msk [vmem:[#allocation2 + $0x138] sm:$0xff] %vm942, %v895
        %983 = vst.msk [vmem:[#allocation2 + $0x140] sm:$0xff] %vm942, %v897
        %984 = vst.msk [vmem:[#allocation2 + $0x148] sm:$0xff] %vm942, %v899
        %s985 = sadd.s32 %s391, 2
        %s986 = smul.u32 %s985, 32
        %s987 = scalar_lea.vmem %s335, %s986 [#allocation5]
        %v988 = vld [vmem:[%s987] sm:$0xff]
        %v989 = vld [vmem:[%s987 + $0x8] sm:$0xff]
        %v990 = vld [vmem:[%s987 + $0x10] sm:$0xff]
        %v991 = vld [vmem:[%s987 + $0x20] sm:$0xff]
        %v992 = vld [vmem:[%s987 + $0x28] sm:$0xff]
        %v993 = vld [vmem:[%s987 + $0x30] sm:$0xff]
        %v994 = vld [vmem:[%s987 + $0x40] sm:$0xff]
        %v995 = vld [vmem:[%s987 + $0x48] sm:$0xff]
        %v996 = vld [vmem:[%s987 + $0x50] sm:$0xff]
        %v997 = vld [vmem:[%s987 + $0x60] sm:$0xff]
        %v998 = vld [vmem:[%s987 + $0x68] sm:$0xff]
        %v999 = vld [vmem:[%s987 + $0x70] sm:$0xff]
        %v1000 = vld [vmem:[%s987 + $0x80] sm:$0xff]
        %v1001 = vld [vmem:[%s987 + $0x88] sm:$0xff]
        %v1002 = vld [vmem:[%s987 + $0x90] sm:$0xff]
        %v1003 = vld [vmem:[%s987 + $0xa0] sm:$0xff]
        %v1004 = vld [vmem:[%s987 + $0xa8] sm:$0xff]
        %v1005 = vld [vmem:[%s987 + $0xb0] sm:$0xff]
        %v1006 = vld [vmem:[%s987 + $0xc0] sm:$0xff]
        %v1007 = vld [vmem:[%s987 + $0xc8] sm:$0xff]
        %v1008 = vld [vmem:[%s987 + $0xd0] sm:$0xff]
        %v1009 = vld [vmem:[%s987 + $0xe0] sm:$0xff]
        %v1010 = vld [vmem:[%s987 + $0xe8] sm:$0xff]
        %v1011 = vld [vmem:[%s987 + $0xf0] sm:$0xff]
        %v1012 = vld [vmem:[%s987 + $0x100] sm:$0xff]
        %v1013 = vld [vmem:[%s987 + $0x108] sm:$0xff]
        %v1014 = vld [vmem:[%s987 + $0x110] sm:$0xff]
        %v1015 = vld [vmem:[%s987 + $0x120] sm:$0xff]
        %v1016 = vld [vmem:[%s987 + $0x128] sm:$0xff]
        %v1017 = vld [vmem:[%s987 + $0x130] sm:$0xff]
        %v1018 = vld [vmem:[%s987 + $0x140] sm:$0xff]
        %v1019 = vld [vmem:[%s987 + $0x148] sm:$0xff]
        %v1020 = vld [vmem:[%s987 + $0x150] sm:$0xff]
        %v1021 = vld [vmem:[%s987 + $0x160] sm:$0xff]
        %v1022 = vld [vmem:[%s987 + $0x168] sm:$0xff]
        %v1023 = vld [vmem:[%s987 + $0x170] sm:$0xff]
        %v1024 = vld [vmem:[%s987 + $0x180] sm:$0xff]
        %v1025 = vld [vmem:[%s987 + $0x188] sm:$0xff]
        %v1026 = vld [vmem:[%s987 + $0x190] sm:$0xff]
        %v1027 = vld [vmem:[%s987 + $0x1a0] sm:$0xff]
        %v1028 = vld [vmem:[%s987 + $0x1a8] sm:$0xff]
        %v1029 = vld [vmem:[%s987 + $0x1b0] sm:$0xff]
        %1072 = vrot.lane.b32.xlu0 %v988, 12
        %v1073 = vpop.permute.xlu0 %1072
        %1074 = vrot.lane.b32.xlu0 %v989, 12
        %v1075 = vpop.permute.xlu0 %1074
        %1076 = vrot.lane.b32.xlu0 %v990, 12
        %v1077 = vpop.permute.xlu0 %1076
        %1078 = vrot.lane.b32.xlu0 %v991, 12
        %v1079 = vpop.permute.xlu0 %1078
        %1080 = vrot.lane.b32.xlu0 %v992, 12
        %v1081 = vpop.permute.xlu0 %1080
        %1082 = vrot.lane.b32.xlu0 %v993, 12
        %v1083 = vpop.permute.xlu0 %1082
        %1084 = vrot.lane.b32.xlu0 %v994, 12
        %v1085 = vpop.permute.xlu0 %1084
        %1086 = vrot.lane.b32.xlu0 %v995, 12
        %v1087 = vpop.permute.xlu0 %1086
        %1088 = vrot.lane.b32.xlu0 %v996, 12
        %v1089 = vpop.permute.xlu0 %1088
        %1090 = vrot.lane.b32.xlu0 %v997, 12
        %v1091 = vpop.permute.xlu0 %1090
        %1092 = vrot.lane.b32.xlu0 %v998, 12
        %v1093 = vpop.permute.xlu0 %1092
        %1094 = vrot.lane.b32.xlu0 %v999, 12
        %v1095 = vpop.permute.xlu0 %1094
        %1096 = vrot.lane.b32.xlu0 %v1000, 12
        %v1097 = vpop.permute.xlu0 %1096
        %1098 = vrot.lane.b32.xlu0 %v1001, 12
        %v1099 = vpop.permute.xlu0 %1098
        %1100 = vrot.lane.b32.xlu0 %v1002, 12
        %v1101 = vpop.permute.xlu0 %1100
        %1102 = vrot.lane.b32.xlu0 %v1003, 12
        %v1103 = vpop.permute.xlu0 %1102
        %1104 = vrot.lane.b32.xlu0 %v1004, 12
        %v1105 = vpop.permute.xlu0 %1104
        %1106 = vrot.lane.b32.xlu0 %v1005, 12
        %v1107 = vpop.permute.xlu0 %1106
        %1108 = vrot.lane.b32.xlu0 %v1006, 12
        %v1109 = vpop.permute.xlu0 %1108
        %1110 = vrot.lane.b32.xlu0 %v1007, 12
        %v1111 = vpop.permute.xlu0 %1110
        %1112 = vrot.lane.b32.xlu0 %v1008, 12
        %v1113 = vpop.permute.xlu0 %1112
        %1114 = vrot.lane.b32.xlu0 %v1009, 12
        %v1115 = vpop.permute.xlu0 %1114
        %1116 = vrot.lane.b32.xlu0 %v1010, 12
        %v1117 = vpop.permute.xlu0 %1116
        %1118 = vrot.lane.b32.xlu0 %v1011, 12
        %v1119 = vpop.permute.xlu0 %1118
        %1120 = vrot.lane.b32.xlu0 %v1012, 12
        %v1121 = vpop.permute.xlu0 %1120
        %1122 = vrot.lane.b32.xlu0 %v1013, 12
        %v1123 = vpop.permute.xlu0 %1122
        %1124 = vrot.lane.b32.xlu0 %v1014, 12
        %v1125 = vpop.permute.xlu0 %1124
        %1126 = vrot.lane.b32.xlu0 %v1015, 12
        %v1127 = vpop.permute.xlu0 %1126
        %1128 = vrot.lane.b32.xlu0 %v1016, 12
        %v1129 = vpop.permute.xlu0 %1128
        %1130 = vrot.lane.b32.xlu0 %v1017, 12
        %v1131 = vpop.permute.xlu0 %1130
        %1132 = vrot.lane.b32.xlu0 %v1018, 12
        %v1133 = vpop.permute.xlu0 %1132
        %1134 = vrot.lane.b32.xlu0 %v1019, 12
        %v1135 = vpop.permute.xlu0 %1134
        %1136 = vrot.lane.b32.xlu0 %v1020, 12
        %v1137 = vpop.permute.xlu0 %1136
        %1138 = vrot.lane.b32.xlu0 %v1021, 12
        %v1139 = vpop.permute.xlu0 %1138
        %1140 = vrot.lane.b32.xlu0 %v1022, 12
        %v1141 = vpop.permute.xlu0 %1140
        %1142 = vrot.lane.b32.xlu0 %v1023, 12
        %v1143 = vpop.permute.xlu0 %1142
        %1144 = vrot.lane.b32.xlu0 %v1024, 12
        %v1145 = vpop.permute.xlu0 %1144
        %1146 = vrot.lane.b32.xlu0 %v1025, 12
        %v1147 = vpop.permute.xlu0 %1146
        %1148 = vrot.lane.b32.xlu0 %v1026, 12
        %v1149 = vpop.permute.xlu0 %1148
        %1150 = vrot.lane.b32.xlu0 %v1027, 12
        %v1151 = vpop.permute.xlu0 %1150
        %1152 = vrot.lane.b32.xlu0 %v1028, 12
        %v1153 = vpop.permute.xlu0 %1152
        %1154 = vrot.lane.b32.xlu0 %v1029, 12
        %v1155 = vpop.permute.xlu0 %1154
        %vm1198 = vcmask 130144
        %1199 = vst.msk [vmem:[#allocation2] sm:$0xff] %vm1198, %v1073
        %1200 = vst.msk [vmem:[#allocation2 + $0x8] sm:$0xff] %vm1198, %v1075
        %1201 = vst.msk [vmem:[#allocation2 + $0x10] sm:$0xff] %vm1198, %v1077
        %1202 = vst.msk [vmem:[#allocation2 + $0x18] sm:$0xff] %vm1198, %v1079
        %1203 = vst.msk [vmem:[#allocation2 + $0x20] sm:$0xff] %vm1198, %v1081
        %1204 = vst.msk [vmem:[#allocation2 + $0x28] sm:$0xff] %vm1198, %v1083
        %1205 = vst.msk [vmem:[#allocation2 + $0x30] sm:$0xff] %vm1198, %v1085
        %1206 = vst.msk [vmem:[#allocation2 + $0x38] sm:$0xff] %vm1198, %v1087
        %1207 = vst.msk [vmem:[#allocation2 + $0x40] sm:$0xff] %vm1198, %v1089
        %1208 = vst.msk [vmem:[#allocation2 + $0x48] sm:$0xff] %vm1198, %v1091
        %1209 = vst.msk [vmem:[#allocation2 + $0x50] sm:$0xff] %vm1198, %v1093
        %1210 = vst.msk [vmem:[#allocation2 + $0x58] sm:$0xff] %vm1198, %v1095
        %1211 = vst.msk [vmem:[#allocation2 + $0x60] sm:$0xff] %vm1198, %v1097
        %1212 = vst.msk [vmem:[#allocation2 + $0x68] sm:$0xff] %vm1198, %v1099
        %1213 = vst.msk [vmem:[#allocation2 + $0x70] sm:$0xff] %vm1198, %v1101
        %1214 = vst.msk [vmem:[#allocation2 + $0x78] sm:$0xff] %vm1198, %v1103
        %1215 = vst.msk [vmem:[#allocation2 + $0x80] sm:$0xff] %vm1198, %v1105
        %1216 = vst.msk [vmem:[#allocation2 + $0x88] sm:$0xff] %vm1198, %v1107
        %1217 = vst.msk [vmem:[#allocation2 + $0x90] sm:$0xff] %vm1198, %v1109
        %1218 = vst.msk [vmem:[#allocation2 + $0x98] sm:$0xff] %vm1198, %v1111
        %1219 = vst.msk [vmem:[#allocation2 + $0xa0] sm:$0xff] %vm1198, %v1113
        %1220 = vst.msk [vmem:[#allocation2 + $0xa8] sm:$0xff] %vm1198, %v1115
        %1221 = vst.msk [vmem:[#allocation2 + $0xb0] sm:$0xff] %vm1198, %v1117
        %1222 = vst.msk [vmem:[#allocation2 + $0xb8] sm:$0xff] %vm1198, %v1119
        %1223 = vst.msk [vmem:[#allocation2 + $0xc0] sm:$0xff] %vm1198, %v1121
        %1224 = vst.msk [vmem:[#allocation2 + $0xc8] sm:$0xff] %vm1198, %v1123
        %1225 = vst.msk [vmem:[#allocation2 + $0xd0] sm:$0xff] %vm1198, %v1125
        %1226 = vst.msk [vmem:[#allocation2 + $0xd8] sm:$0xff] %vm1198, %v1127
        %1227 = vst.msk [vmem:[#allocation2 + $0xe0] sm:$0xff] %vm1198, %v1129
        %1228 = vst.msk [vmem:[#allocation2 + $0xe8] sm:$0xff] %vm1198, %v1131
        %1229 = vst.msk [vmem:[#allocation2 + $0xf0] sm:$0xff] %vm1198, %v1133
        %1230 = vst.msk [vmem:[#allocation2 + $0xf8] sm:$0xff] %vm1198, %v1135
        %1231 = vst.msk [vmem:[#allocation2 + $0x100] sm:$0xff] %vm1198, %v1137
        %1232 = vst.msk [vmem:[#allocation2 + $0x108] sm:$0xff] %vm1198, %v1139
        %1233 = vst.msk [vmem:[#allocation2 + $0x110] sm:$0xff] %vm1198, %v1141
        %1234 = vst.msk [vmem:[#allocation2 + $0x118] sm:$0xff] %vm1198, %v1143
        %1235 = vst.msk [vmem:[#allocation2 + $0x120] sm:$0xff] %vm1198, %v1145
        %1236 = vst.msk [vmem:[#allocation2 + $0x128] sm:$0xff] %vm1198, %v1147
        %1237 = vst.msk [vmem:[#allocation2 + $0x130] sm:$0xff] %vm1198, %v1149
        %1238 = vst.msk [vmem:[#allocation2 + $0x138] sm:$0xff] %vm1198, %v1151
        %1239 = vst.msk [vmem:[#allocation2 + $0x140] sm:$0xff] %vm1198, %v1153
        %1240 = vst.msk [vmem:[#allocation2 + $0x148] sm:$0xff] %vm1198, %v1155
        %v1241 = vld [vmem:[%s987 + $0x2] sm:$0xff]
        %v1242 = vld [vmem:[%s987 + $0xa] sm:$0xff]
        %v1243 = vld [vmem:[%s987 + $0x12] sm:$0xff]
        %v1244 = vld [vmem:[%s987 + $0x22] sm:$0xff]
        %v1245 = vld [vmem:[%s987 + $0x2a] sm:$0xff]
        %v1246 = vld [vmem:[%s987 + $0x32] sm:$0xff]
        %v1247 = vld [vmem:[%s987 + $0x42] sm:$0xff]
        %v1248 = vld [vmem:[%s987 + $0x4a] sm:$0xff]
        %v1249 = vld [vmem:[%s987 + $0x52] sm:$0xff]
        %v1250 = vld [vmem:[%s987 + $0x62] sm:$0xff]
        %v1251 = vld [vmem:[%s987 + $0x6a] sm:$0xff]
        %v1252 = vld [vmem:[%s987 + $0x72] sm:$0xff]
        %v1253 = vld [vmem:[%s987 + $0x82] sm:$0xff]
        %v1254 = vld [vmem:[%s987 + $0x8a] sm:$0xff]
        %v1255 = vld [vmem:[%s987 + $0x92] sm:$0xff]
        %v1256 = vld [vmem:[%s987 + $0xa2] sm:$0xff]
        %v1257 = vld [vmem:[%s987 + $0xaa] sm:$0xff]
        %v1258 = vld [vmem:[%s987 + $0xb2] sm:$0xff]
        %v1259 = vld [vmem:[%s987 + $0xc2] sm:$0xff]
        %v1260 = vld [vmem:[%s987 + $0xca] sm:$0xff]
        %v1261 = vld [vmem:[%s987 + $0xd2] sm:$0xff]
        %v1262 = vld [vmem:[%s987 + $0xe2] sm:$0xff]
        %v1263 = vld [vmem:[%s987 + $0xea] sm:$0xff]
        %v1264 = vld [vmem:[%s987 + $0xf2] sm:$0xff]
        %v1265 = vld [vmem:[%s987 + $0x102] sm:$0xff]
        %v1266 = vld [vmem:[%s987 + $0x10a] sm:$0xff]
        %v1267 = vld [vmem:[%s987 + $0x112] sm:$0xff]
        %v1268 = vld [vmem:[%s987 + $0x122] sm:$0xff]
        %v1269 = vld [vmem:[%s987 + $0x12a] sm:$0xff]
        %v1270 = vld [vmem:[%s987 + $0x132] sm:$0xff]
        %v1271 = vld [vmem:[%s987 + $0x142] sm:$0xff]
        %v1272 = vld [vmem:[%s987 + $0x14a] sm:$0xff]
        %v1273 = vld [vmem:[%s987 + $0x152] sm:$0xff]
        %v1274 = vld [vmem:[%s987 + $0x162] sm:$0xff]
        %v1275 = vld [vmem:[%s987 + $0x16a] sm:$0xff]
        %v1276 = vld [vmem:[%s987 + $0x172] sm:$0xff]
        %v1277 = vld [vmem:[%s987 + $0x182] sm:$0xff]
        %v1278 = vld [vmem:[%s987 + $0x18a] sm:$0xff]
        %v1279 = vld [vmem:[%s987 + $0x192] sm:$0xff]
        %v1280 = vld [vmem:[%s987 + $0x1a2] sm:$0xff]
        %v1281 = vld [vmem:[%s987 + $0x1aa] sm:$0xff]
        %v1282 = vld [vmem:[%s987 + $0x1b2] sm:$0xff]
        %1325 = vrot.lane.b32.xlu0 %v1241, 16
        %v1326 = vpop.permute.xlu0 %1325
        %1327 = vrot.lane.b32.xlu0 %v1242, 16
        %v1328 = vpop.permute.xlu0 %1327
        %1329 = vrot.lane.b32.xlu0 %v1243, 16
        %v1330 = vpop.permute.xlu0 %1329
        %1331 = vrot.lane.b32.xlu0 %v1244, 16
        %v1332 = vpop.permute.xlu0 %1331
        %1333 = vrot.lane.b32.xlu0 %v1245, 16
        %v1334 = vpop.permute.xlu0 %1333
        %1335 = vrot.lane.b32.xlu0 %v1246, 16
        %v1336 = vpop.permute.xlu0 %1335
        %1337 = vrot.lane.b32.xlu0 %v1247, 16
        %v1338 = vpop.permute.xlu0 %1337
        %1339 = vrot.lane.b32.xlu0 %v1248, 16
        %v1340 = vpop.permute.xlu0 %1339
        %1341 = vrot.lane.b32.xlu0 %v1249, 16
        %v1342 = vpop.permute.xlu0 %1341
        %1343 = vrot.lane.b32.xlu0 %v1250, 16
        %v1344 = vpop.permute.xlu0 %1343
        %1345 = vrot.lane.b32.xlu0 %v1251, 16
        %v1346 = vpop.permute.xlu0 %1345
        %1347 = vrot.lane.b32.xlu0 %v1252, 16
        %v1348 = vpop.permute.xlu0 %1347
        %1349 = vrot.lane.b32.xlu0 %v1253, 16
        %v1350 = vpop.permute.xlu0 %1349
        %1351 = vrot.lane.b32.xlu0 %v1254, 16
        %v1352 = vpop.permute.xlu0 %1351
        %1353 = vrot.lane.b32.xlu0 %v1255, 16
        %v1354 = vpop.permute.xlu0 %1353
        %1355 = vrot.lane.b32.xlu0 %v1256, 16
        %v1356 = vpop.permute.xlu0 %1355
        %1357 = vrot.lane.b32.xlu0 %v1257, 16
        %v1358 = vpop.permute.xlu0 %1357
        %1359 = vrot.lane.b32.xlu0 %v1258, 16
        %v1360 = vpop.permute.xlu0 %1359
        %1361 = vrot.lane.b32.xlu0 %v1259, 16
        %v1362 = vpop.permute.xlu0 %1361
        %1363 = vrot.lane.b32.xlu0 %v1260, 16
        %v1364 = vpop.permute.xlu0 %1363
        %1365 = vrot.lane.b32.xlu0 %v1261, 16
        %v1366 = vpop.permute.xlu0 %1365
        %1367 = vrot.lane.b32.xlu0 %v1262, 16
        %v1368 = vpop.permute.xlu0 %1367
        %1369 = vrot.lane.b32.xlu0 %v1263, 16
        %v1370 = vpop.permute.xlu0 %1369
        %1371 = vrot.lane.b32.xlu0 %v1264, 16
        %v1372 = vpop.permute.xlu0 %1371
        %1373 = vrot.lane.b32.xlu0 %v1265, 16
        %v1374 = vpop.permute.xlu0 %1373
        %1375 = vrot.lane.b32.xlu0 %v1266, 16
        %v1376 = vpop.permute.xlu0 %1375
        %1377 = vrot.lane.b32.xlu0 %v1267, 16
        %v1378 = vpop.permute.xlu0 %1377
        %1379 = vrot.lane.b32.xlu0 %v1268, 16
        %v1380 = vpop.permute.xlu0 %1379
        %1381 = vrot.lane.b32.xlu0 %v1269, 16
        %v1382 = vpop.permute.xlu0 %1381
        %1383 = vrot.lane.b32.xlu0 %v1270, 16
        %v1384 = vpop.permute.xlu0 %1383
        %1385 = vrot.lane.b32.xlu0 %v1271, 16
        %v1386 = vpop.permute.xlu0 %1385
        %1387 = vrot.lane.b32.xlu0 %v1272, 16
        %v1388 = vpop.permute.xlu0 %1387
        %1389 = vrot.lane.b32.xlu0 %v1273, 16
        %v1390 = vpop.permute.xlu0 %1389
        %1391 = vrot.lane.b32.xlu0 %v1274, 16
        %v1392 = vpop.permute.xlu0 %1391
        %1393 = vrot.lane.b32.xlu0 %v1275, 16
        %v1394 = vpop.permute.xlu0 %1393
        %1395 = vrot.lane.b32.xlu0 %v1276, 16
        %v1396 = vpop.permute.xlu0 %1395
        %1397 = vrot.lane.b32.xlu0 %v1277, 16
        %v1398 = vpop.permute.xlu0 %1397
        %1399 = vrot.lane.b32.xlu0 %v1278, 16
        %v1400 = vpop.permute.xlu0 %1399
        %1401 = vrot.lane.b32.xlu0 %v1279, 16
        %v1402 = vpop.permute.xlu0 %1401
        %1403 = vrot.lane.b32.xlu0 %v1280, 16
        %v1404 = vpop.permute.xlu0 %1403
        %1405 = vrot.lane.b32.xlu0 %v1281, 16
        %v1406 = vpop.permute.xlu0 %1405
        %1407 = vrot.lane.b32.xlu0 %v1282, 16
        %v1408 = vpop.permute.xlu0 %1407
        %vm1451 = vcmask 162944
        %1452 = vst.msk [vmem:[#allocation2] sm:$0xff] %vm1451, %v1326
        %1453 = vst.msk [vmem:[#allocation2 + $0x8] sm:$0xff] %vm1451, %v1328
        %1454 = vst.msk [vmem:[#allocation2 + $0x10] sm:$0xff] %vm1451, %v1330
        %1455 = vst.msk [vmem:[#allocation2 + $0x18] sm:$0xff] %vm1451, %v1332
        %1456 = vst.msk [vmem:[#allocation2 + $0x20] sm:$0xff] %vm1451, %v1334
        %1457 = vst.msk [vmem:[#allocation2 + $0x28] sm:$0xff] %vm1451, %v1336
        %1458 = vst.msk [vmem:[#allocation2 + $0x30] sm:$0xff] %vm1451, %v1338
        %1459 = vst.msk [vmem:[#allocation2 + $0x38] sm:$0xff] %vm1451, %v1340
        %1460 = vst.msk [vmem:[#allocation2 + $0x40] sm:$0xff] %vm1451, %v1342
        %1461 = vst.msk [vmem:[#allocation2 + $0x48] sm:$0xff] %vm1451, %v1344
        %1462 = vst.msk [vmem:[#allocation2 + $0x50] sm:$0xff] %vm1451, %v1346
        %1463 = vst.msk [vmem:[#allocation2 + $0x58] sm:$0xff] %vm1451, %v1348
        %1464 = vst.msk [vmem:[#allocation2 + $0x60] sm:$0xff] %vm1451, %v1350
        %1465 = vst.msk [vmem:[#allocation2 + $0x68] sm:$0xff] %vm1451, %v1352
        %1466 = vst.msk [vmem:[#allocation2 + $0x70] sm:$0xff] %vm1451, %v1354
        %1467 = vst.msk [vmem:[#allocation2 + $0x78] sm:$0xff] %vm1451, %v1356
        %1468 = vst.msk [vmem:[#allocation2 + $0x80] sm:$0xff] %vm1451, %v1358
        %1469 = vst.msk [vmem:[#allocation2 + $0x88] sm:$0xff] %vm1451, %v1360
        %1470 = vst.msk [vmem:[#allocation2 + $0x90] sm:$0xff] %vm1451, %v1362
        %1471 = vst.msk [vmem:[#allocation2 + $0x98] sm:$0xff] %vm1451, %v1364
        %1472 = vst.msk [vmem:[#allocation2 + $0xa0] sm:$0xff] %vm1451, %v1366
        %1473 = vst.msk [vmem:[#allocation2 + $0xa8] sm:$0xff] %vm1451, %v1368
        %1474 = vst.msk [vmem:[#allocation2 + $0xb0] sm:$0xff] %vm1451, %v1370
        %1475 = vst.msk [vmem:[#allocation2 + $0xb8] sm:$0xff] %vm1451, %v1372
        %1476 = vst.msk [vmem:[#allocation2 + $0xc0] sm:$0xff] %vm1451, %v1374
        %1477 = vst.msk [vmem:[#allocation2 + $0xc8] sm:$0xff] %vm1451, %v1376
        %1478 = vst.msk [vmem:[#allocation2 + $0xd0] sm:$0xff] %vm1451, %v1378
        %1479 = vst.msk [vmem:[#allocation2 + $0xd8] sm:$0xff] %vm1451, %v1380
        %1480 = vst.msk [vmem:[#allocation2 + $0xe0] sm:$0xff] %vm1451, %v1382
        %1481 = vst.msk [vmem:[#allocation2 + $0xe8] sm:$0xff] %vm1451, %v1384
        %1482 = vst.msk [vmem:[#allocation2 + $0xf0] sm:$0xff] %vm1451, %v1386
        %1483 = vst.msk [vmem:[#allocation2 + $0xf8] sm:$0xff] %vm1451, %v1388
        %1484 = vst.msk [vmem:[#allocation2 + $0x100] sm:$0xff] %vm1451, %v1390
        %1485 = vst.msk [vmem:[#allocation2 + $0x108] sm:$0xff] %vm1451, %v1392
        %1486 = vst.msk [vmem:[#allocation2 + $0x110] sm:$0xff] %vm1451, %v1394
        %1487 = vst.msk [vmem:[#allocation2 + $0x118] sm:$0xff] %vm1451, %v1396
        %1488 = vst.msk [vmem:[#allocation2 + $0x120] sm:$0xff] %vm1451, %v1398
        %1489 = vst.msk [vmem:[#allocation2 + $0x128] sm:$0xff] %vm1451, %v1400
        %1490 = vst.msk [vmem:[#allocation2 + $0x130] sm:$0xff] %vm1451, %v1402
        %1491 = vst.msk [vmem:[#allocation2 + $0x138] sm:$0xff] %vm1451, %v1404
        %1492 = vst.msk [vmem:[#allocation2 + $0x140] sm:$0xff] %vm1451, %v1406
        %1493 = vst.msk [vmem:[#allocation2 + $0x148] sm:$0xff] %vm1451, %v1408
        %v1494 = vld [vmem:[%s987 + $0x4] sm:$0xff]
        %v1495 = vld [vmem:[%s987 + $0xc] sm:$0xff]
        %v1496 = vld [vmem:[%s987 + $0x14] sm:$0xff]
        %v1497 = vld [vmem:[%s987 + $0x24] sm:$0xff]
        %v1498 = vld [vmem:[%s987 + $0x2c] sm:$0xff]
        %v1499 = vld [vmem:[%s987 + $0x34] sm:$0xff]
        %v1500 = vld [vmem:[%s987 + $0x44] sm:$0xff]
        %v1501 = vld [vmem:[%s987 + $0x4c] sm:$0xff]
        %v1502 = vld [vmem:[%s987 + $0x54] sm:$0xff]
        %v1503 = vld [vmem:[%s987 + $0x64] sm:$0xff]
        %v1504 = vld [vmem:[%s987 + $0x6c] sm:$0xff]
        %v1505 = vld [vmem:[%s987 + $0x74] sm:$0xff]
        %v1506 = vld [vmem:[%s987 + $0x84] sm:$0xff]
        %v1507 = vld [vmem:[%s987 + $0x8c] sm:$0xff]
        %v1508 = vld [vmem:[%s987 + $0x94] sm:$0xff]
        %v1509 = vld [vmem:[%s987 + $0xa4] sm:$0xff]
        %v1510 = vld [vmem:[%s987 + $0xac] sm:$0xff]
        %v1511 = vld [vmem:[%s987 + $0xb4] sm:$0xff]
        %v1512 = vld [vmem:[%s987 + $0xc4] sm:$0xff]
        %v1513 = vld [vmem:[%s987 + $0xcc] sm:$0xff]
        %v1514 = vld [vmem:[%s987 + $0xd4] sm:$0xff]
        %v1515 = vld [vmem:[%s987 + $0xe4] sm:$0xff]
        %v1516 = vld [vmem:[%s987 + $0xec] sm:$0xff]
        %v1517 = vld [vmem:[%s987 + $0xf4] sm:$0xff]
        %v1518 = vld [vmem:[%s987 + $0x104] sm:$0xff]
        %v1519 = vld [vmem:[%s987 + $0x10c] sm:$0xff]
        %v1520 = vld [vmem:[%s987 + $0x114] sm:$0xff]
        %v1521 = vld [vmem:[%s987 + $0x124] sm:$0xff]
        %v1522 = vld [vmem:[%s987 + $0x12c] sm:$0xff]
        %v1523 = vld [vmem:[%s987 + $0x134] sm:$0xff]
        %v1524 = vld [vmem:[%s987 + $0x144] sm:$0xff]
        %v1525 = vld [vmem:[%s987 + $0x14c] sm:$0xff]
        %v1526 = vld [vmem:[%s987 + $0x154] sm:$0xff]
        %v1527 = vld [vmem:[%s987 + $0x164] sm:$0xff]
        %v1528 = vld [vmem:[%s987 + $0x16c] sm:$0xff]
        %v1529 = vld [vmem:[%s987 + $0x174] sm:$0xff]
        %v1530 = vld [vmem:[%s987 + $0x184] sm:$0xff]
        %v1531 = vld [vmem:[%s987 + $0x18c] sm:$0xff]
        %v1532 = vld [vmem:[%s987 + $0x194] sm:$0xff]
        %v1533 = vld [vmem:[%s987 + $0x1a4] sm:$0xff]
        %v1534 = vld [vmem:[%s987 + $0x1ac] sm:$0xff]
        %v1535 = vld [vmem:[%s987 + $0x1b4] sm:$0xff]
        %1578 = vrot.lane.b32.xlu0 %v1494, 20
        %v1579 = vpop.permute.xlu0 %1578
        %1580 = vrot.lane.b32.xlu0 %v1495, 20
        %v1581 = vpop.permute.xlu0 %1580
        %1582 = vrot.lane.b32.xlu0 %v1496, 20
        %v1583 = vpop.permute.xlu0 %1582
        %1584 = vrot.lane.b32.xlu0 %v1497, 20
        %v1585 = vpop.permute.xlu0 %1584
        %1586 = vrot.lane.b32.xlu0 %v1498, 20
        %v1587 = vpop.permute.xlu0 %1586
        %1588 = vrot.lane.b32.xlu0 %v1499, 20
        %v1589 = vpop.permute.xlu0 %1588
        %1590 = vrot.lane.b32.xlu0 %v1500, 20
        %v1591 = vpop.permute.xlu0 %1590
        %1592 = vrot.lane.b32.xlu0 %v1501, 20
        %v1593 = vpop.permute.xlu0 %1592
        %1594 = vrot.lane.b32.xlu0 %v1502, 20
        %v1595 = vpop.permute.xlu0 %1594
        %1596 = vrot.lane.b32.xlu0 %v1503, 20
        %v1597 = vpop.permute.xlu0 %1596
        %1598 = vrot.lane.b32.xlu0 %v1504, 20
        %v1599 = vpop.permute.xlu0 %1598
        %1600 = vrot.lane.b32.xlu0 %v1505, 20
        %v1601 = vpop.permute.xlu0 %1600
        %1602 = vrot.lane.b32.xlu0 %v1506, 20
        %v1603 = vpop.permute.xlu0 %1602
        %1604 = vrot.lane.b32.xlu0 %v1507, 20
        %v1605 = vpop.permute.xlu0 %1604
        %1606 = vrot.lane.b32.xlu0 %v1508, 20
        %v1607 = vpop.permute.xlu0 %1606
        %1608 = vrot.lane.b32.xlu0 %v1509, 20
        %v1609 = vpop.permute.xlu0 %1608
        %1610 = vrot.lane.b32.xlu0 %v1510, 20
        %v1611 = vpop.permute.xlu0 %1610
        %1612 = vrot.lane.b32.xlu0 %v1511, 20
        %v1613 = vpop.permute.xlu0 %1612
        %1614 = vrot.lane.b32.xlu0 %v1512, 20
        %v1615 = vpop.permute.xlu0 %1614
        %1616 = vrot.lane.b32.xlu0 %v1513, 20
        %v1617 = vpop.permute.xlu0 %1616
        %1618 = vrot.lane.b32.xlu0 %v1514, 20
        %v1619 = vpop.permute.xlu0 %1618
        %1620 = vrot.lane.b32.xlu0 %v1515, 20
        %v1621 = vpop.permute.xlu0 %1620
        %1622 = vrot.lane.b32.xlu0 %v1516, 20
        %v1623 = vpop.permute.xlu0 %1622
        %1624 = vrot.lane.b32.xlu0 %v1517, 20
        %v1625 = vpop.permute.xlu0 %1624
        %1626 = vrot.lane.b32.xlu0 %v1518, 20
        %v1627 = vpop.permute.xlu0 %1626
        %1628 = vrot.lane.b32.xlu0 %v1519, 20
        %v1629 = vpop.permute.xlu0 %1628
        %1630 = vrot.lane.b32.xlu0 %v1520, 20
        %v1631 = vpop.permute.xlu0 %1630
        %1632 = vrot.lane.b32.xlu0 %v1521, 20
        %v1633 = vpop.permute.xlu0 %1632
        %1634 = vrot.lane.b32.xlu0 %v1522, 20
        %v1635 = vpop.permute.xlu0 %1634
        %1636 = vrot.lane.b32.xlu0 %v1523, 20
        %v1637 = vpop.permute.xlu0 %1636
        %1638 = vrot.lane.b32.xlu0 %v1524, 20
        %v1639 = vpop.permute.xlu0 %1638
        %1640 = vrot.lane.b32.xlu0 %v1525, 20
        %v1641 = vpop.permute.xlu0 %1640
        %1642 = vrot.lane.b32.xlu0 %v1526, 20
        %v1643 = vpop.permute.xlu0 %1642
        %1644 = vrot.lane.b32.xlu0 %v1527, 20
        %v1645 = vpop.permute.xlu0 %1644
        %1646 = vrot.lane.b32.xlu0 %v1528, 20
        %v1647 = vpop.permute.xlu0 %1646
        %1648 = vrot.lane.b32.xlu0 %v1529, 20
        %v1649 = vpop.permute.xlu0 %1648
        %1650 = vrot.lane.b32.xlu0 %v1530, 20
        %v1651 = vpop.permute.xlu0 %1650
        %1652 = vrot.lane.b32.xlu0 %v1531, 20
        %v1653 = vpop.permute.xlu0 %1652
        %1654 = vrot.lane.b32.xlu0 %v1532, 20
        %v1655 = vpop.permute.xlu0 %1654
        %1656 = vrot.lane.b32.xlu0 %v1533, 20
        %v1657 = vpop.permute.xlu0 %1656
        %1658 = vrot.lane.b32.xlu0 %v1534, 20
        %v1659 = vpop.permute.xlu0 %1658
        %1660 = vrot.lane.b32.xlu0 %v1535, 20
        %v1661 = vpop.permute.xlu0 %1660
        %vm1704 = vcmask 195744
        %1705 = vst.msk [vmem:[#allocation2] sm:$0xff] %vm1704, %v1579
        %1706 = vst.msk [vmem:[#allocation2 + $0x8] sm:$0xff] %vm1704, %v1581
        %1707 = vst.msk [vmem:[#allocation2 + $0x10] sm:$0xff] %vm1704, %v1583
        %1708 = vst.msk [vmem:[#allocation2 + $0x18] sm:$0xff] %vm1704, %v1585
        %1709 = vst.msk [vmem:[#allocation2 + $0x20] sm:$0xff] %vm1704, %v1587
        %1710 = vst.msk [vmem:[#allocation2 + $0x28] sm:$0xff] %vm1704, %v1589
        %1711 = vst.msk [vmem:[#allocation2 + $0x30] sm:$0xff] %vm1704, %v1591
        %1712 = vst.msk [vmem:[#allocation2 + $0x38] sm:$0xff] %vm1704, %v1593
        %1713 = vst.msk [vmem:[#allocation2 + $0x40] sm:$0xff] %vm1704, %v1595
        %1714 = vst.msk [vmem:[#allocation2 + $0x48] sm:$0xff] %vm1704, %v1597
        %1715 = vst.msk [vmem:[#allocation2 + $0x50] sm:$0xff] %vm1704, %v1599
        %1716 = vst.msk [vmem:[#allocation2 + $0x58] sm:$0xff] %vm1704, %v1601
        %1717 = vst.msk [vmem:[#allocation2 + $0x60] sm:$0xff] %vm1704, %v1603
        %1718 = vst.msk [vmem:[#allocation2 + $0x68] sm:$0xff] %vm1704, %v1605
        %1719 = vst.msk [vmem:[#allocation2 + $0x70] sm:$0xff] %vm1704, %v1607
        %1720 = vst.msk [vmem:[#allocation2 + $0x78] sm:$0xff] %vm1704, %v1609
        %1721 = vst.msk [vmem:[#allocation2 + $0x80] sm:$0xff] %vm1704, %v1611
        %1722 = vst.msk [vmem:[#allocation2 + $0x88] sm:$0xff] %vm1704, %v1613
        %1723 = vst.msk [vmem:[#allocation2 + $0x90] sm:$0xff] %vm1704, %v1615
        %1724 = vst.msk [vmem:[#allocation2 + $0x98] sm:$0xff] %vm1704, %v1617
        %1725 = vst.msk [vmem:[#allocation2 + $0xa0] sm:$0xff] %vm1704, %v1619
        %1726 = vst.msk [vmem:[#allocation2 + $0xa8] sm:$0xff] %vm1704, %v1621
        %1727 = vst.msk [vmem:[#allocation2 + $0xb0] sm:$0xff] %vm1704, %v1623
        %1728 = vst.msk [vmem:[#allocation2 + $0xb8] sm:$0xff] %vm1704, %v1625
        %1729 = vst.msk [vmem:[#allocation2 + $0xc0] sm:$0xff] %vm1704, %v1627
        %1730 = vst.msk [vmem:[#allocation2 + $0xc8] sm:$0xff] %vm1704, %v1629
        %1731 = vst.msk [vmem:[#allocation2 + $0xd0] sm:$0xff] %vm1704, %v1631
        %1732 = vst.msk [vmem:[#allocation2 + $0xd8] sm:$0xff] %vm1704, %v1633
        %1733 = vst.msk [vmem:[#allocation2 + $0xe0] sm:$0xff] %vm1704, %v1635
        %1734 = vst.msk [vmem:[#allocation2 + $0xe8] sm:$0xff] %vm1704, %v1637
        %1735 = vst.msk [vmem:[#allocation2 + $0xf0] sm:$0xff] %vm1704, %v1639
        %1736 = vst.msk [vmem:[#allocation2 + $0xf8] sm:$0xff] %vm1704, %v1641
        %1737 = vst.msk [vmem:[#allocation2 + $0x100] sm:$0xff] %vm1704, %v1643
        %1738 = vst.msk [vmem:[#allocation2 + $0x108] sm:$0xff] %vm1704, %v1645
        %1739 = vst.msk [vmem:[#allocation2 + $0x110] sm:$0xff] %vm1704, %v1647
        %1740 = vst.msk [vmem:[#allocation2 + $0x118] sm:$0xff] %vm1704, %v1649
        %1741 = vst.msk [vmem:[#allocation2 + $0x120] sm:$0xff] %vm1704, %v1651
        %1742 = vst.msk [vmem:[#allocation2 + $0x128] sm:$0xff] %vm1704, %v1653
        %1743 = vst.msk [vmem:[#allocation2 + $0x130] sm:$0xff] %vm1704, %v1655
        %1744 = vst.msk [vmem:[#allocation2 + $0x138] sm:$0xff] %vm1704, %v1657
        %1745 = vst.msk [vmem:[#allocation2 + $0x140] sm:$0xff] %vm1704, %v1659
        %1746 = vst.msk [vmem:[#allocation2 + $0x148] sm:$0xff] %vm1704, %v1661
        %s1747 = sadd.s32 %s391, 4
        %s1748 = smul.u32 %s1747, 32
        %s1749 = scalar_lea.vmem %s335, %s1748 [#allocation5]
        %v1750 = vld [vmem:[%s1749] sm:$0xff]
        %v1751 = vld [vmem:[%s1749 + $0x8] sm:$0xff]
        %v1752 = vld [vmem:[%s1749 + $0x10] sm:$0xff]
        %v1753 = vld [vmem:[%s1749 + $0x20] sm:$0xff]
        %v1754 = vld [vmem:[%s1749 + $0x28] sm:$0xff]
        %v1755 = vld [vmem:[%s1749 + $0x30] sm:$0xff]
        %v1756 = vld [vmem:[%s1749 + $0x40] sm:$0xff]
        %v1757 = vld [vmem:[%s1749 + $0x48] sm:$0xff]
        %v1758 = vld [vmem:[%s1749 + $0x50] sm:$0xff]
        %v1759 = vld [vmem:[%s1749 + $0x60] sm:$0xff]
        %v1760 = vld [vmem:[%s1749 + $0x68] sm:$0xff]
        %v1761 = vld [vmem:[%s1749 + $0x70] sm:$0xff]
        %v1762 = vld [vmem:[%s1749 + $0x80] sm:$0xff]
        %v1763 = vld [vmem:[%s1749 + $0x88] sm:$0xff]
        %v1764 = vld [vmem:[%s1749 + $0x90] sm:$0xff]
        %v1765 = vld [vmem:[%s1749 + $0xa0] sm:$0xff]
        %v1766 = vld [vmem:[%s1749 + $0xa8] sm:$0xff]
        %v1767 = vld [vmem:[%s1749 + $0xb0] sm:$0xff]
        %v1768 = vld [vmem:[%s1749 + $0xc0] sm:$0xff]
        %v1769 = vld [vmem:[%s1749 + $0xc8] sm:$0xff]
        %v1770 = vld [vmem:[%s1749 + $0xd0] sm:$0xff]
        %v1771 = vld [vmem:[%s1749 + $0xe0] sm:$0xff]
        %v1772 = vld [vmem:[%s1749 + $0xe8] sm:$0xff]
        %v1773 = vld [vmem:[%s1749 + $0xf0] sm:$0xff]
        %v1774 = vld [vmem:[%s1749 + $0x100] sm:$0xff]
        %v1775 = vld [vmem:[%s1749 + $0x108] sm:$0xff]
        %v1776 = vld [vmem:[%s1749 + $0x110] sm:$0xff]
        %v1777 = vld [vmem:[%s1749 + $0x120] sm:$0xff]
        %v1778 = vld [vmem:[%s1749 + $0x128] sm:$0xff]
        %v1779 = vld [vmem:[%s1749 + $0x130] sm:$0xff]
        %v1780 = vld [vmem:[%s1749 + $0x140] sm:$0xff]
        %v1781 = vld [vmem:[%s1749 + $0x148] sm:$0xff]
        %v1782 = vld [vmem:[%s1749 + $0x150] sm:$0xff]
        %v1783 = vld [vmem:[%s1749 + $0x160] sm:$0xff]
        %v1784 = vld [vmem:[%s1749 + $0x168] sm:$0xff]
        %v1785 = vld [vmem:[%s1749 + $0x170] sm:$0xff]
        %v1786 = vld [vmem:[%s1749 + $0x180] sm:$0xff]
        %v1787 = vld [vmem:[%s1749 + $0x188] sm:$0xff]
        %v1788 = vld [vmem:[%s1749 + $0x190] sm:$0xff]
        %v1789 = vld [vmem:[%s1749 + $0x1a0] sm:$0xff]
        %v1790 = vld [vmem:[%s1749 + $0x1a8] sm:$0xff]
        %v1791 = vld [vmem:[%s1749 + $0x1b0] sm:$0xff]
        %1834 = vrot.lane.b32.xlu0 %v1750, 24
        %v1835 = vpop.permute.xlu0 %1834
        %1836 = vrot.lane.b32.xlu0 %v1751, 24
        %v1837 = vpop.permute.xlu0 %1836
        %1838 = vrot.lane.b32.xlu0 %v1752, 24
        %v1839 = vpop.permute.xlu0 %1838
        %1840 = vrot.lane.b32.xlu0 %v1753, 24
        %v1841 = vpop.permute.xlu0 %1840
        %1842 = vrot.lane.b32.xlu0 %v1754, 24
        %v1843 = vpop.permute.xlu0 %1842
        %1844 = vrot.lane.b32.xlu0 %v1755, 24
        %v1845 = vpop.permute.xlu0 %1844
        %1846 = vrot.lane.b32.xlu0 %v1756, 24
        %v1847 = vpop.permute.xlu0 %1846
        %1848 = vrot.lane.b32.xlu0 %v1757, 24
        %v1849 = vpop.permute.xlu0 %1848
        %1850 = vrot.lane.b32.xlu0 %v1758, 24
        %v1851 = vpop.permute.xlu0 %1850
        %1852 = vrot.lane.b32.xlu0 %v1759, 24
        %v1853 = vpop.permute.xlu0 %1852
        %1854 = vrot.lane.b32.xlu0 %v1760, 24
        %v1855 = vpop.permute.xlu0 %1854
        %1856 = vrot.lane.b32.xlu0 %v1761, 24
        %v1857 = vpop.permute.xlu0 %1856
        %1858 = vrot.lane.b32.xlu0 %v1762, 24
        %v1859 = vpop.permute.xlu0 %1858
        %1860 = vrot.lane.b32.xlu0 %v1763, 24
        %v1861 = vpop.permute.xlu0 %1860
        %1862 = vrot.lane.b32.xlu0 %v1764, 24
        %v1863 = vpop.permute.xlu0 %1862
        %1864 = vrot.lane.b32.xlu0 %v1765, 24
        %v1865 = vpop.permute.xlu0 %1864
        %1866 = vrot.lane.b32.xlu0 %v1766, 24
        %v1867 = vpop.permute.xlu0 %1866
        %1868 = vrot.lane.b32.xlu0 %v1767, 24
        %v1869 = vpop.permute.xlu0 %1868
        %1870 = vrot.lane.b32.xlu0 %v1768, 24
        %v1871 = vpop.permute.xlu0 %1870
        %1872 = vrot.lane.b32.xlu0 %v1769, 24
        %v1873 = vpop.permute.xlu0 %1872
        %1874 = vrot.lane.b32.xlu0 %v1770, 24
        %v1875 = vpop.permute.xlu0 %1874
        %1876 = vrot.lane.b32.xlu0 %v1771, 24
        %v1877 = vpop.permute.xlu0 %1876
        %1878 = vrot.lane.b32.xlu0 %v1772, 24
        %v1879 = vpop.permute.xlu0 %1878
        %1880 = vrot.lane.b32.xlu0 %v1773, 24
        %v1881 = vpop.permute.xlu0 %1880
        %1882 = vrot.lane.b32.xlu0 %v1774, 24
        %v1883 = vpop.permute.xlu0 %1882
        %1884 = vrot.lane.b32.xlu0 %v1775, 24
        %v1885 = vpop.permute.xlu0 %1884
        %1886 = vrot.lane.b32.xlu0 %v1776, 24
        %v1887 = vpop.permute.xlu0 %1886
        %1888 = vrot.lane.b32.xlu0 %v1777, 24
        %v1889 = vpop.permute.xlu0 %1888
        %1890 = vrot.lane.b32.xlu0 %v1778, 24
        %v1891 = vpop.permute.xlu0 %1890
        %1892 = vrot.lane.b32.xlu0 %v1779, 24
        %v1893 = vpop.permute.xlu0 %1892
        %1894 = vrot.lane.b32.xlu0 %v1780, 24
        %v1895 = vpop.permute.xlu0 %1894
        %1896 = vrot.lane.b32.xlu0 %v1781, 24
        %v1897 = vpop.permute.xlu0 %1896
        %1898 = vrot.lane.b32.xlu0 %v1782, 24
        %v1899 = vpop.permute.xlu0 %1898
        %1900 = vrot.lane.b32.xlu0 %v1783, 24
        %v1901 = vpop.permute.xlu0 %1900
        %1902 = vrot.lane.b32.xlu0 %v1784, 24
        %v1903 = vpop.permute.xlu0 %1902
        %1904 = vrot.lane.b32.xlu0 %v1785, 24
        %v1905 = vpop.permute.xlu0 %1904
        %1906 = vrot.lane.b32.xlu0 %v1786, 24
        %v1907 = vpop.permute.xlu0 %1906
        %1908 = vrot.lane.b32.xlu0 %v1787, 24
        %v1909 = vpop.permute.xlu0 %1908
        %1910 = vrot.lane.b32.xlu0 %v1788, 24
        %v1911 = vpop.permute.xlu0 %1910
        %1912 = vrot.lane.b32.xlu0 %v1789, 24
        %v1913 = vpop.permute.xlu0 %1912
        %1914 = vrot.lane.b32.xlu0 %v1790, 24
        %v1915 = vpop.permute.xlu0 %1914
        %1916 = vrot.lane.b32.xlu0 %v1791, 24
        %v1917 = vpop.permute.xlu0 %1916
        %vm1960 = vcmask 228544
        %1961 = vst.msk [vmem:[#allocation2] sm:$0xff] %vm1960, %v1835
        %1962 = vst.msk [vmem:[#allocation2 + $0x8] sm:$0xff] %vm1960, %v1837
        %1963 = vst.msk [vmem:[#allocation2 + $0x10] sm:$0xff] %vm1960, %v1839
        %1964 = vst.msk [vmem:[#allocation2 + $0x18] sm:$0xff] %vm1960, %v1841
        %1965 = vst.msk [vmem:[#allocation2 + $0x20] sm:$0xff] %vm1960, %v1843
        %1966 = vst.msk [vmem:[#allocation2 + $0x28] sm:$0xff] %vm1960, %v1845
        %1967 = vst.msk [vmem:[#allocation2 + $0x30] sm:$0xff] %vm1960, %v1847
        %1968 = vst.msk [vmem:[#allocation2 + $0x38] sm:$0xff] %vm1960, %v1849
        %1969 = vst.msk [vmem:[#allocation2 + $0x40] sm:$0xff] %vm1960, %v1851
        %1970 = vst.msk [vmem:[#allocation2 + $0x48] sm:$0xff] %vm1960, %v1853
        %1971 = vst.msk [vmem:[#allocation2 + $0x50] sm:$0xff] %vm1960, %v1855
        %1972 = vst.msk [vmem:[#allocation2 + $0x58] sm:$0xff] %vm1960, %v1857
        %1973 = vst.msk [vmem:[#allocation2 + $0x60] sm:$0xff] %vm1960, %v1859
        %1974 = vst.msk [vmem:[#allocation2 + $0x68] sm:$0xff] %vm1960, %v1861
        %1975 = vst.msk [vmem:[#allocation2 + $0x70] sm:$0xff] %vm1960, %v1863
        %1976 = vst.msk [vmem:[#allocation2 + $0x78] sm:$0xff] %vm1960, %v1865
        %1977 = vst.msk [vmem:[#allocation2 + $0x80] sm:$0xff] %vm1960, %v1867
        %1978 = vst.msk [vmem:[#allocation2 + $0x88] sm:$0xff] %vm1960, %v1869
        %1979 = vst.msk [vmem:[#allocation2 + $0x90] sm:$0xff] %vm1960, %v1871
        %1980 = vst.msk [vmem:[#allocation2 + $0x98] sm:$0xff] %vm1960, %v1873
        %1981 = vst.msk [vmem:[#allocation2 + $0xa0] sm:$0xff] %vm1960, %v1875
        %1982 = vst.msk [vmem:[#allocation2 + $0xa8] sm:$0xff] %vm1960, %v1877
        %1983 = vst.msk [vmem:[#allocation2 + $0xb0] sm:$0xff] %vm1960, %v1879
        %1984 = vst.msk [vmem:[#allocation2 + $0xb8] sm:$0xff] %vm1960, %v1881
        %1985 = vst.msk [vmem:[#allocation2 + $0xc0] sm:$0xff] %vm1960, %v1883
        %1986 = vst.msk [vmem:[#allocation2 + $0xc8] sm:$0xff] %vm1960, %v1885
        %1987 = vst.msk [vmem:[#allocation2 + $0xd0] sm:$0xff] %vm1960, %v1887
        %1988 = vst.msk [vmem:[#allocation2 + $0xd8] sm:$0xff] %vm1960, %v1889
        %1989 = vst.msk [vmem:[#allocation2 + $0xe0] sm:$0xff] %vm1960, %v1891
        %1990 = vst.msk [vmem:[#allocation2 + $0xe8] sm:$0xff] %vm1960, %v1893
        %1991 = vst.msk [vmem:[#allocation2 + $0xf0] sm:$0xff] %vm1960, %v1895
        %1992 = vst.msk [vmem:[#allocation2 + $0xf8] sm:$0xff] %vm1960, %v1897
        %1993 = vst.msk [vmem:[#allocation2 + $0x100] sm:$0xff] %vm1960, %v1899
        %1994 = vst.msk [vmem:[#allocation2 + $0x108] sm:$0xff] %vm1960, %v1901
        %1995 = vst.msk [vmem:[#allocation2 + $0x110] sm:$0xff] %vm1960, %v1903
        %1996 = vst.msk [vmem:[#allocation2 + $0x118] sm:$0xff] %vm1960, %v1905
        %1997 = vst.msk [vmem:[#allocation2 + $0x120] sm:$0xff] %vm1960, %v1907
        %1998 = vst.msk [vmem:[#allocation2 + $0x128] sm:$0xff] %vm1960, %v1909
        %1999 = vst.msk [vmem:[#allocation2 + $0x130] sm:$0xff] %vm1960, %v1911
        %2000 = vst.msk [vmem:[#allocation2 + $0x138] sm:$0xff] %vm1960, %v1913
        %2001 = vst.msk [vmem:[#allocation2 + $0x140] sm:$0xff] %vm1960, %v1915
        %2002 = vst.msk [vmem:[#allocation2 + $0x148] sm:$0xff] %vm1960, %v1917
        %v2003 = vld [vmem:[%s1749 + $0x2] sm:$0xff]
        %v2004 = vld [vmem:[%s1749 + $0xa] sm:$0xff]
        %v2005 = vld [vmem:[%s1749 + $0x12] sm:$0xff]
        %v2006 = vld [vmem:[%s1749 + $0x22] sm:$0xff]
        %v2007 = vld [vmem:[%s1749 + $0x2a] sm:$0xff]
        %v2008 = vld [vmem:[%s1749 + $0x32] sm:$0xff]
        %v2009 = vld [vmem:[%s1749 + $0x42] sm:$0xff]
        %v2010 = vld [vmem:[%s1749 + $0x4a] sm:$0xff]
        %v2011 = vld [vmem:[%s1749 + $0x52] sm:$0xff]
        %v2012 = vld [vmem:[%s1749 + $0x62] sm:$0xff]
        %v2013 = vld [vmem:[%s1749 + $0x6a] sm:$0xff]
        %v2014 = vld [vmem:[%s1749 + $0x72] sm:$0xff]
        %v2015 = vld [vmem:[%s1749 + $0x82] sm:$0xff]
        %v2016 = vld [vmem:[%s1749 + $0x8a] sm:$0xff]
        %v2017 = vld [vmem:[%s1749 + $0x92] sm:$0xff]
        %v2018 = vld [vmem:[%s1749 + $0xa2] sm:$0xff]
        %v2019 = vld [vmem:[%s1749 + $0xaa] sm:$0xff]
        %v2020 = vld [vmem:[%s1749 + $0xb2] sm:$0xff]
        %v2021 = vld [vmem:[%s1749 + $0xc2] sm:$0xff]
        %v2022 = vld [vmem:[%s1749 + $0xca] sm:$0xff]
        %v2023 = vld [vmem:[%s1749 + $0xd2] sm:$0xff]
        %v2024 = vld [vmem:[%s1749 + $0xe2] sm:$0xff]
        %v2025 = vld [vmem:[%s1749 + $0xea] sm:$0xff]
        %v2026 = vld [vmem:[%s1749 + $0xf2] sm:$0xff]
        %v2027 = vld [vmem:[%s1749 + $0x102] sm:$0xff]
        %v2028 = vld [vmem:[%s1749 + $0x10a] sm:$0xff]
        %v2029 = vld [vmem:[%s1749 + $0x112] sm:$0xff]
        %v2030 = vld [vmem:[%s1749 + $0x122] sm:$0xff]
        %v2031 = vld [vmem:[%s1749 + $0x12a] sm:$0xff]
        %v2032 = vld [vmem:[%s1749 + $0x132] sm:$0xff]
        %v2033 = vld [vmem:[%s1749 + $0x142] sm:$0xff]
        %v2034 = vld [vmem:[%s1749 + $0x14a] sm:$0xff]
        %v2035 = vld [vmem:[%s1749 + $0x152] sm:$0xff]
        %v2036 = vld [vmem:[%s1749 + $0x162] sm:$0xff]
        %v2037 = vld [vmem:[%s1749 + $0x16a] sm:$0xff]
        %v2038 = vld [vmem:[%s1749 + $0x172] sm:$0xff]
        %v2039 = vld [vmem:[%s1749 + $0x182] sm:$0xff]
        %v2040 = vld [vmem:[%s1749 + $0x18a] sm:$0xff]
        %v2041 = vld [vmem:[%s1749 + $0x192] sm:$0xff]
        %v2042 = vld [vmem:[%s1749 + $0x1a2] sm:$0xff]
        %v2043 = vld [vmem:[%s1749 + $0x1aa] sm:$0xff]
        %v2044 = vld [vmem:[%s1749 + $0x1b2] sm:$0xff]
        %2087 = vrot.lane.b32.xlu0 %v2003, 28
        %v2088 = vpop.permute.xlu0 %2087
        %2089 = vrot.lane.b32.xlu0 %v2004, 28
        %v2090 = vpop.permute.xlu0 %2089
        %2091 = vrot.lane.b32.xlu0 %v2005, 28
        %v2092 = vpop.permute.xlu0 %2091
        %2093 = vrot.lane.b32.xlu0 %v2006, 28
        %v2094 = vpop.permute.xlu0 %2093
        %2095 = vrot.lane.b32.xlu0 %v2007, 28
        %v2096 = vpop.permute.xlu0 %2095
        %2097 = vrot.lane.b32.xlu0 %v2008, 28
        %v2098 = vpop.permute.xlu0 %2097
        %2099 = vrot.lane.b32.xlu0 %v2009, 28
        %v2100 = vpop.permute.xlu0 %2099
        %2101 = vrot.lane.b32.xlu0 %v2010, 28
        %v2102 = vpop.permute.xlu0 %2101
        %2103 = vrot.lane.b32.xlu0 %v2011, 28
        %v2104 = vpop.permute.xlu0 %2103
        %2105 = vrot.lane.b32.xlu0 %v2012, 28
        %v2106 = vpop.permute.xlu0 %2105
        %2107 = vrot.lane.b32.xlu0 %v2013, 28
        %v2108 = vpop.permute.xlu0 %2107
        %2109 = vrot.lane.b32.xlu0 %v2014, 28
        %v2110 = vpop.permute.xlu0 %2109
        %2111 = vrot.lane.b32.xlu0 %v2015, 28
        %v2112 = vpop.permute.xlu0 %2111
        %2113 = vrot.lane.b32.xlu0 %v2016, 28
        %v2114 = vpop.permute.xlu0 %2113
        %2115 = vrot.lane.b32.xlu0 %v2017, 28
        %v2116 = vpop.permute.xlu0 %2115
        %2117 = vrot.lane.b32.xlu0 %v2018, 28
        %v2118 = vpop.permute.xlu0 %2117
        %2119 = vrot.lane.b32.xlu0 %v2019, 28
        %v2120 = vpop.permute.xlu0 %2119
        %2121 = vrot.lane.b32.xlu0 %v2020, 28
        %v2122 = vpop.permute.xlu0 %2121
        %2123 = vrot.lane.b32.xlu0 %v2021, 28
        %v2124 = vpop.permute.xlu0 %2123
        %2125 = vrot.lane.b32.xlu0 %v2022, 28
        %v2126 = vpop.permute.xlu0 %2125
        %2127 = vrot.lane.b32.xlu0 %v2023, 28
        %v2128 = vpop.permute.xlu0 %2127
        %2129 = vrot.lane.b32.xlu0 %v2024, 28
        %v2130 = vpop.permute.xlu0 %2129
        %2131 = vrot.lane.b32.xlu0 %v2025, 28
        %v2132 = vpop.permute.xlu0 %2131
        %2133 = vrot.lane.b32.xlu0 %v2026, 28
        %v2134 = vpop.permute.xlu0 %2133
        %2135 = vrot.lane.b32.xlu0 %v2027, 28
        %v2136 = vpop.permute.xlu0 %2135
        %2137 = vrot.lane.b32.xlu0 %v2028, 28
        %v2138 = vpop.permute.xlu0 %2137
        %2139 = vrot.lane.b32.xlu0 %v2029, 28
        %v2140 = vpop.permute.xlu0 %2139
        %2141 = vrot.lane.b32.xlu0 %v2030, 28
        %v2142 = vpop.permute.xlu0 %2141
        %2143 = vrot.lane.b32.xlu0 %v2031, 28
        %v2144 = vpop.permute.xlu0 %2143
        %2145 = vrot.lane.b32.xlu0 %v2032, 28
        %v2146 = vpop.permute.xlu0 %2145
        %2147 = vrot.lane.b32.xlu0 %v2033, 28
        %v2148 = vpop.permute.xlu0 %2147
        %2149 = vrot.lane.b32.xlu0 %v2034, 28
        %v2150 = vpop.permute.xlu0 %2149
        %2151 = vrot.lane.b32.xlu0 %v2035, 28
        %v2152 = vpop.permute.xlu0 %2151
        %2153 = vrot.lane.b32.xlu0 %v2036, 28
        %v2154 = vpop.permute.xlu0 %2153
        %2155 = vrot.lane.b32.xlu0 %v2037, 28
        %v2156 = vpop.permute.xlu0 %2155
        %2157 = vrot.lane.b32.xlu0 %v2038, 28
        %v2158 = vpop.permute.xlu0 %2157
        %2159 = vrot.lane.b32.xlu0 %v2039, 28
        %v2160 = vpop.permute.xlu0 %2159
        %2161 = vrot.lane.b32.xlu0 %v2040, 28
        %v2162 = vpop.permute.xlu0 %2161
        %2163 = vrot.lane.b32.xlu0 %v2041, 28
        %v2164 = vpop.permute.xlu0 %2163
        %2165 = vrot.lane.b32.xlu0 %v2042, 28
        %v2166 = vpop.permute.xlu0 %2165
        %2167 = vrot.lane.b32.xlu0 %v2043, 28
        %v2168 = vpop.permute.xlu0 %2167
        %2169 = vrot.lane.b32.xlu0 %v2044, 28
        %v2170 = vpop.permute.xlu0 %2169
        %vm2213 = vcmask 261344
        %2214 = vst.msk [vmem:[#allocation2] sm:$0xff] %vm2213, %v2088
        %2215 = vst.msk [vmem:[#allocation2 + $0x8] sm:$0xff] %vm2213, %v2090
        %2216 = vst.msk [vmem:[#allocation2 + $0x10] sm:$0xff] %vm2213, %v2092
        %2217 = vst.msk [vmem:[#allocation2 + $0x18] sm:$0xff] %vm2213, %v2094
        %2218 = vst.msk [vmem:[#allocation2 + $0x20] sm:$0xff] %vm2213, %v2096
        %2219 = vst.msk [vmem:[#allocation2 + $0x28] sm:$0xff] %vm2213, %v2098
        %2220 = vst.msk [vmem:[#allocation2 + $0x30] sm:$0xff] %vm2213, %v2100
        %2221 = vst.msk [vmem:[#allocation2 + $0x38] sm:$0xff] %vm2213, %v2102
        %2222 = vst.msk [vmem:[#allocation2 + $0x40] sm:$0xff] %vm2213, %v2104
        %2223 = vst.msk [vmem:[#allocation2 + $0x48] sm:$0xff] %vm2213, %v2106
        %2224 = vst.msk [vmem:[#allocation2 + $0x50] sm:$0xff] %vm2213, %v2108
        %2225 = vst.msk [vmem:[#allocation2 + $0x58] sm:$0xff] %vm2213, %v2110
        %2226 = vst.msk [vmem:[#allocation2 + $0x60] sm:$0xff] %vm2213, %v2112
        %2227 = vst.msk [vmem:[#allocation2 + $0x68] sm:$0xff] %vm2213, %v2114
        %2228 = vst.msk [vmem:[#allocation2 + $0x70] sm:$0xff] %vm2213, %v2116
        %2229 = vst.msk [vmem:[#allocation2 + $0x78] sm:$0xff] %vm2213, %v2118
        %2230 = vst.msk [vmem:[#allocation2 + $0x80] sm:$0xff] %vm2213, %v2120
        %2231 = vst.msk [vmem:[#allocation2 + $0x88] sm:$0xff] %vm2213, %v2122
        %2232 = vst.msk [vmem:[#allocation2 + $0x90] sm:$0xff] %vm2213, %v2124
        %2233 = vst.msk [vmem:[#allocation2 + $0x98] sm:$0xff] %vm2213, %v2126
        %2234 = vst.msk [vmem:[#allocation2 + $0xa0] sm:$0xff] %vm2213, %v2128
        %2235 = vst.msk [vmem:[#allocation2 + $0xa8] sm:$0xff] %vm2213, %v2130
        %2236 = vst.msk [vmem:[#allocation2 + $0xb0] sm:$0xff] %vm2213, %v2132
        %2237 = vst.msk [vmem:[#allocation2 + $0xb8] sm:$0xff] %vm2213, %v2134
        %2238 = vst.msk [vmem:[#allocation2 + $0xc0] sm:$0xff] %vm2213, %v2136
        %2239 = vst.msk [vmem:[#allocation2 + $0xc8] sm:$0xff] %vm2213, %v2138
        %2240 = vst.msk [vmem:[#allocation2 + $0xd0] sm:$0xff] %vm2213, %v2140
        %2241 = vst.msk [vmem:[#allocation2 + $0xd8] sm:$0xff] %vm2213, %v2142
        %2242 = vst.msk [vmem:[#allocation2 + $0xe0] sm:$0xff] %vm2213, %v2144
        %2243 = vst.msk [vmem:[#allocation2 + $0xe8] sm:$0xff] %vm2213, %v2146
        %2244 = vst.msk [vmem:[#allocation2 + $0xf0] sm:$0xff] %vm2213, %v2148
        %2245 = vst.msk [vmem:[#allocation2 + $0xf8] sm:$0xff] %vm2213, %v2150
        %2246 = vst.msk [vmem:[#allocation2 + $0x100] sm:$0xff] %vm2213, %v2152
        %2247 = vst.msk [vmem:[#allocation2 + $0x108] sm:$0xff] %vm2213, %v2154
        %2248 = vst.msk [vmem:[#allocation2 + $0x110] sm:$0xff] %vm2213, %v2156
        %2249 = vst.msk [vmem:[#allocation2 + $0x118] sm:$0xff] %vm2213, %v2158
        %2250 = vst.msk [vmem:[#allocation2 + $0x120] sm:$0xff] %vm2213, %v2160
        %2251 = vst.msk [vmem:[#allocation2 + $0x128] sm:$0xff] %vm2213, %v2162
        %2252 = vst.msk [vmem:[#allocation2 + $0x130] sm:$0xff] %vm2213, %v2164
        %2253 = vst.msk [vmem:[#allocation2 + $0x138] sm:$0xff] %vm2213, %v2166
        %2254 = vst.msk [vmem:[#allocation2 + $0x140] sm:$0xff] %vm2213, %v2168
        %2255 = vst.msk [vmem:[#allocation2 + $0x148] sm:$0xff] %vm2213, %v2170
        %v2256 = vld [vmem:[%s1749 + $0x4] sm:$0xff]
        %v2257 = vld [vmem:[%s1749 + $0xc] sm:$0xff]
        %v2258 = vld [vmem:[%s1749 + $0x14] sm:$0xff]
        %v2259 = vld [vmem:[%s1749 + $0x24] sm:$0xff]
        %v2260 = vld [vmem:[%s1749 + $0x2c] sm:$0xff]
        %v2261 = vld [vmem:[%s1749 + $0x34] sm:$0xff]
        %v2262 = vld [vmem:[%s1749 + $0x44] sm:$0xff]
        %v2263 = vld [vmem:[%s1749 + $0x4c] sm:$0xff]
        %v2264 = vld [vmem:[%s1749 + $0x54] sm:$0xff]
        %v2265 = vld [vmem:[%s1749 + $0x64] sm:$0xff]
        %v2266 = vld [vmem:[%s1749 + $0x6c] sm:$0xff]
        %v2267 = vld [vmem:[%s1749 + $0x74] sm:$0xff]
        %v2268 = vld [vmem:[%s1749 + $0x84] sm:$0xff]
        %v2269 = vld [vmem:[%s1749 + $0x8c] sm:$0xff]
        %v2270 = vld [vmem:[%s1749 + $0x94] sm:$0xff]
        %v2271 = vld [vmem:[%s1749 + $0xa4] sm:$0xff]
        %v2272 = vld [vmem:[%s1749 + $0xac] sm:$0xff]
        %v2273 = vld [vmem:[%s1749 + $0xb4] sm:$0xff]
        %v2274 = vld [vmem:[%s1749 + $0xc4] sm:$0xff]
        %v2275 = vld [vmem:[%s1749 + $0xcc] sm:$0xff]
        %v2276 = vld [vmem:[%s1749 + $0xd4] sm:$0xff]
        %v2277 = vld [vmem:[%s1749 + $0xe4] sm:$0xff]
        %v2278 = vld [vmem:[%s1749 + $0xec] sm:$0xff]
        %v2279 = vld [vmem:[%s1749 + $0xf4] sm:$0xff]
        %v2280 = vld [vmem:[%s1749 + $0x104] sm:$0xff]
        %v2281 = vld [vmem:[%s1749 + $0x10c] sm:$0xff]
        %v2282 = vld [vmem:[%s1749 + $0x114] sm:$0xff]
        %v2283 = vld [vmem:[%s1749 + $0x124] sm:$0xff]
        %v2284 = vld [vmem:[%s1749 + $0x12c] sm:$0xff]
        %v2285 = vld [vmem:[%s1749 + $0x134] sm:$0xff]
        %v2286 = vld [vmem:[%s1749 + $0x144] sm:$0xff]
        %v2287 = vld [vmem:[%s1749 + $0x14c] sm:$0xff]
        %v2288 = vld [vmem:[%s1749 + $0x154] sm:$0xff]
        %v2289 = vld [vmem:[%s1749 + $0x164] sm:$0xff]
        %v2290 = vld [vmem:[%s1749 + $0x16c] sm:$0xff]
        %v2291 = vld [vmem:[%s1749 + $0x174] sm:$0xff]
        %v2292 = vld [vmem:[%s1749 + $0x184] sm:$0xff]
        %v2293 = vld [vmem:[%s1749 + $0x18c] sm:$0xff]
        %v2294 = vld [vmem:[%s1749 + $0x194] sm:$0xff]
        %v2295 = vld [vmem:[%s1749 + $0x1a4] sm:$0xff]
        %v2296 = vld [vmem:[%s1749 + $0x1ac] sm:$0xff]
        %v2297 = vld [vmem:[%s1749 + $0x1b4] sm:$0xff]
        %2340 = vrot.lane.b32.xlu0 %v2256, 32
        %v2341 = vpop.permute.xlu0 %2340
        %2342 = vrot.lane.b32.xlu0 %v2257, 32
        %v2343 = vpop.permute.xlu0 %2342
        %2344 = vrot.lane.b32.xlu0 %v2258, 32
        %v2345 = vpop.permute.xlu0 %2344
        %2346 = vrot.lane.b32.xlu0 %v2259, 32
        %v2347 = vpop.permute.xlu0 %2346
        %2348 = vrot.lane.b32.xlu0 %v2260, 32
        %v2349 = vpop.permute.xlu0 %2348
        %2350 = vrot.lane.b32.xlu0 %v2261, 32
        %v2351 = vpop.permute.xlu0 %2350
        %2352 = vrot.lane.b32.xlu0 %v2262, 32
        %v2353 = vpop.permute.xlu0 %2352
        %2354 = vrot.lane.b32.xlu0 %v2263, 32
        %v2355 = vpop.permute.xlu0 %2354
        %2356 = vrot.lane.b32.xlu0 %v2264, 32
        %v2357 = vpop.permute.xlu0 %2356
        %2358 = vrot.lane.b32.xlu0 %v2265, 32
        %v2359 = vpop.permute.xlu0 %2358
        %2360 = vrot.lane.b32.xlu0 %v2266, 32
        %v2361 = vpop.permute.xlu0 %2360
        %2362 = vrot.lane.b32.xlu0 %v2267, 32
        %v2363 = vpop.permute.xlu0 %2362
        %2364 = vrot.lane.b32.xlu0 %v2268, 32
        %v2365 = vpop.permute.xlu0 %2364
        %2366 = vrot.lane.b32.xlu0 %v2269, 32
        %v2367 = vpop.permute.xlu0 %2366
        %2368 = vrot.lane.b32.xlu0 %v2270, 32
        %v2369 = vpop.permute.xlu0 %2368
        %2370 = vrot.lane.b32.xlu0 %v2271, 32
        %v2371 = vpop.permute.xlu0 %2370
        %2372 = vrot.lane.b32.xlu0 %v2272, 32
        %v2373 = vpop.permute.xlu0 %2372
        %2374 = vrot.lane.b32.xlu0 %v2273, 32
        %v2375 = vpop.permute.xlu0 %2374
        %2376 = vrot.lane.b32.xlu0 %v2274, 32
        %v2377 = vpop.permute.xlu0 %2376
        %2378 = vrot.lane.b32.xlu0 %v2275, 32
        %v2379 = vpop.permute.xlu0 %2378
        %2380 = vrot.lane.b32.xlu0 %v2276, 32
        %v2381 = vpop.permute.xlu0 %2380
        %2382 = vrot.lane.b32.xlu0 %v2277, 32
        %v2383 = vpop.permute.xlu0 %2382
        %2384 = vrot.lane.b32.xlu0 %v2278, 32
        %v2385 = vpop.permute.xlu0 %2384
        %2386 = vrot.lane.b32.xlu0 %v2279, 32
        %v2387 = vpop.permute.xlu0 %2386
        %2388 = vrot.lane.b32.xlu0 %v2280, 32
        %v2389 = vpop.permute.xlu0 %2388
        %2390 = vrot.lane.b32.xlu0 %v2281, 32
        %v2391 = vpop.permute.xlu0 %2390
        %2392 = vrot.lane.b32.xlu0 %v2282, 32
        %v2393 = vpop.permute.xlu0 %2392
        %2394 = vrot.lane.b32.xlu0 %v2283, 32
        %v2395 = vpop.permute.xlu0 %2394
        %2396 = vrot.lane.b32.xlu0 %v2284, 32
        %v2397 = vpop.permute.xlu0 %2396
        %2398 = vrot.lane.b32.xlu0 %v2285, 32
        %v2399 = vpop.permute.xlu0 %2398
        %2400 = vrot.lane.b32.xlu0 %v2286, 32
        %v2401 = vpop.permute.xlu0 %2400
        %2402 = vrot.lane.b32.xlu0 %v2287, 32
        %v2403 = vpop.permute.xlu0 %2402
        %2404 = vrot.lane.b32.xlu0 %v2288, 32
        %v2405 = vpop.permute.xlu0 %2404
        %2406 = vrot.lane.b32.xlu0 %v2289, 32
        %v2407 = vpop.permute.xlu0 %2406
        %2408 = vrot.lane.b32.xlu0 %v2290, 32
        %v2409 = vpop.permute.xlu0 %2408
        %2410 = vrot.lane.b32.xlu0 %v2291, 32
        %v2411 = vpop.permute.xlu0 %2410
        %2412 = vrot.lane.b32.xlu0 %v2292, 32
        %v2413 = vpop.permute.xlu0 %2412
        %2414 = vrot.lane.b32.xlu0 %v2293, 32
        %v2415 = vpop.permute.xlu0 %2414
        %2416 = vrot.lane.b32.xlu0 %v2294, 32
        %v2417 = vpop.permute.xlu0 %2416
        %2418 = vrot.lane.b32.xlu0 %v2295, 32
        %v2419 = vpop.permute.xlu0 %2418
        %2420 = vrot.lane.b32.xlu0 %v2296, 32
        %v2421 = vpop.permute.xlu0 %2420
        %2422 = vrot.lane.b32.xlu0 %v2297, 32
        %v2423 = vpop.permute.xlu0 %2422
        %vm2466 = vcmask 294144
        %2467 = vst.msk [vmem:[#allocation2] sm:$0xff] %vm2466, %v2341
        %2468 = vst.msk [vmem:[#allocation2 + $0x8] sm:$0xff] %vm2466, %v2343
        %2469 = vst.msk [vmem:[#allocation2 + $0x10] sm:$0xff] %vm2466, %v2345
        %2470 = vst.msk [vmem:[#allocation2 + $0x18] sm:$0xff] %vm2466, %v2347
        %2471 = vst.msk [vmem:[#allocation2 + $0x20] sm:$0xff] %vm2466, %v2349
        %2472 = vst.msk [vmem:[#allocation2 + $0x28] sm:$0xff] %vm2466, %v2351
        %2473 = vst.msk [vmem:[#allocation2 + $0x30] sm:$0xff] %vm2466, %v2353
        %2474 = vst.msk [vmem:[#allocation2 + $0x38] sm:$0xff] %vm2466, %v2355
        %2475 = vst.msk [vmem:[#allocation2 + $0x40] sm:$0xff] %vm2466, %v2357
        %2476 = vst.msk [vmem:[#allocation2 + $0x48] sm:$0xff] %vm2466, %v2359
        %2477 = vst.msk [vmem:[#allocation2 + $0x50] sm:$0xff] %vm2466, %v2361
        %2478 = vst.msk [vmem:[#allocation2 + $0x58] sm:$0xff] %vm2466, %v2363
        %2479 = vst.msk [vmem:[#allocation2 + $0x60] sm:$0xff] %vm2466, %v2365
        %2480 = vst.msk [vmem:[#allocation2 + $0x68] sm:$0xff] %vm2466, %v2367
        %2481 = vst.msk [vmem:[#allocation2 + $0x70] sm:$0xff] %vm2466, %v2369
        %2482 = vst.msk [vmem:[#allocation2 + $0x78] sm:$0xff] %vm2466, %v2371
        %2483 = vst.msk [vmem:[#allocation2 + $0x80] sm:$0xff] %vm2466, %v2373
        %2484 = vst.msk [vmem:[#allocation2 + $0x88] sm:$0xff] %vm2466, %v2375
        %2485 = vst.msk [vmem:[#allocation2 + $0x90] sm:$0xff] %vm2466, %v2377
        %2486 = vst.msk [vmem:[#allocation2 + $0x98] sm:$0xff] %vm2466, %v2379
        %2487 = vst.msk [vmem:[#allocation2 + $0xa0] sm:$0xff] %vm2466, %v2381
        %2488 = vst.msk [vmem:[#allocation2 + $0xa8] sm:$0xff] %vm2466, %v2383
        %2489 = vst.msk [vmem:[#allocation2 + $0xb0] sm:$0xff] %vm2466, %v2385
        %2490 = vst.msk [vmem:[#allocation2 + $0xb8] sm:$0xff] %vm2466, %v2387
        %2491 = vst.msk [vmem:[#allocation2 + $0xc0] sm:$0xff] %vm2466, %v2389
        %2492 = vst.msk [vmem:[#allocation2 + $0xc8] sm:$0xff] %vm2466, %v2391
        %2493 = vst.msk [vmem:[#allocation2 + $0xd0] sm:$0xff] %vm2466, %v2393
        %2494 = vst.msk [vmem:[#allocation2 + $0xd8] sm:$0xff] %vm2466, %v2395
        %2495 = vst.msk [vmem:[#allocation2 + $0xe0] sm:$0xff] %vm2466, %v2397
        %2496 = vst.msk [vmem:[#allocation2 + $0xe8] sm:$0xff] %vm2466, %v2399
        %2497 = vst.msk [vmem:[#allocation2 + $0xf0] sm:$0xff] %vm2466, %v2401
        %2498 = vst.msk [vmem:[#allocation2 + $0xf8] sm:$0xff] %vm2466, %v2403
        %2499 = vst.msk [vmem:[#allocation2 + $0x100] sm:$0xff] %vm2466, %v2405
        %2500 = vst.msk [vmem:[#allocation2 + $0x108] sm:$0xff] %vm2466, %v2407
        %2501 = vst.msk [vmem:[#allocation2 + $0x110] sm:$0xff] %vm2466, %v2409
        %2502 = vst.msk [vmem:[#allocation2 + $0x118] sm:$0xff] %vm2466, %v2411
        %2503 = vst.msk [vmem:[#allocation2 + $0x120] sm:$0xff] %vm2466, %v2413
        %2504 = vst.msk [vmem:[#allocation2 + $0x128] sm:$0xff] %vm2466, %v2415
        %2505 = vst.msk [vmem:[#allocation2 + $0x130] sm:$0xff] %vm2466, %v2417
        %2506 = vst.msk [vmem:[#allocation2 + $0x138] sm:$0xff] %vm2466, %v2419
        %2507 = vst.msk [vmem:[#allocation2 + $0x140] sm:$0xff] %vm2466, %v2421
        %2508 = vst.msk [vmem:[#allocation2 + $0x148] sm:$0xff] %vm2466, %v2423
        %v2509 = vld [vmem:[#allocation2] sm:$0xff]
        %v2510 = vld [vmem:[#allocation2 + $0x8] sm:$0xff]
        %v2511 = vld [vmem:[#allocation2 + $0x10] sm:$0xff]
        %v2512 = vld [vmem:[#allocation2 + $0x18] sm:$0xff]
        %v2513 = vld [vmem:[#allocation2 + $0x20] sm:$0xff]
        %v2514 = vld [vmem:[#allocation2 + $0x28] sm:$0xff]
        %v2515 = vld [vmem:[#allocation2 + $0x30] sm:$0xff]
        %v2516 = vld [vmem:[#allocation2 + $0x38] sm:$0xff]
        %v2517 = vld [vmem:[#allocation2 + $0x40] sm:$0xff]
        %v2518 = vld [vmem:[#allocation2 + $0x48] sm:$0xff]
        %v2519 = vld [vmem:[#allocation2 + $0x50] sm:$0xff]
        %v2520 = vld [vmem:[#allocation2 + $0x58] sm:$0xff]
        %v2521 = vld [vmem:[#allocation2 + $0x60] sm:$0xff]
        %v2522 = vld [vmem:[#allocation2 + $0x68] sm:$0xff]
        %v2523 = vld [vmem:[#allocation2 + $0x70] sm:$0xff]
        %v2524 = vld [vmem:[#allocation2 + $0x78] sm:$0xff]
        %v2525 = vld [vmem:[#allocation2 + $0x80] sm:$0xff]
        %v2526 = vld [vmem:[#allocation2 + $0x88] sm:$0xff]
        %v2527 = vld [vmem:[#allocation2 + $0x90] sm:$0xff]
        %v2528 = vld [vmem:[#allocation2 + $0x98] sm:$0xff]
        %v2529 = vld [vmem:[#allocation2 + $0xa0] sm:$0xff]
        %v2530 = vld [vmem:[#allocation2 + $0xa8] sm:$0xff]
        %v2531 = vld [vmem:[#allocation2 + $0xb0] sm:$0xff]
        %v2532 = vld [vmem:[#allocation2 + $0xb8] sm:$0xff]
        %v2533 = vld [vmem:[#allocation2 + $0xc0] sm:$0xff]
        %v2534 = vld [vmem:[#allocation2 + $0xc8] sm:$0xff]
        %v2535 = vld [vmem:[#allocation2 + $0xd0] sm:$0xff]
        %v2536 = vld [vmem:[#allocation2 + $0xd8] sm:$0xff]
        %v2537 = vld [vmem:[#allocation2 + $0xe0] sm:$0xff]
        %v2538 = vld [vmem:[#allocation2 + $0xe8] sm:$0xff]
        %v2539 = vld [vmem:[#allocation2 + $0xf0] sm:$0xff]
        %v2540 = vld [vmem:[#allocation2 + $0xf8] sm:$0xff]
        %v2541 = vld [vmem:[#allocation2 + $0x100] sm:$0xff]
        %v2542 = vld [vmem:[#allocation2 + $0x108] sm:$0xff]
        %v2543 = vld [vmem:[#allocation2 + $0x110] sm:$0xff]
        %v2544 = vld [vmem:[#allocation2 + $0x118] sm:$0xff]
        %v2545 = vld [vmem:[#allocation2 + $0x120] sm:$0xff]
        %v2546 = vld [vmem:[#allocation2 + $0x128] sm:$0xff]
        %v2547 = vld [vmem:[#allocation2 + $0x130] sm:$0xff]
        %v2548 = vld [vmem:[#allocation2 + $0x138] sm:$0xff]
        %v2549 = vld [vmem:[#allocation2 + $0x140] sm:$0xff]
        %v2550 = vld [vmem:[#allocation2 + $0x148] sm:$0xff]
        %v2551 = vld [vmem:[#allocation8] sm:$0xff]
        %v2552 = vld [vmem:[#allocation8 + $0x8] sm:$0xff]
        %v2553 = vld [vmem:[#allocation8 + $0x10] sm:$0xff]
        %v2554 = vld [vmem:[#allocation8 + $0x18] sm:$0xff]
        %v2555 = vld [vmem:[#allocation8 + $0x20] sm:$0xf]
        %vm2556 = vcmask 293888
        %v2558 = vsel %vm2556, %v2509, 0
        %v2561 = vsel %vm2556, %v2510, 0
        %v2564 = vsel %vm2556, %v2511, 0
        %v2567 = vsel %vm2556, %v2512, 0
        %v2570 = vsel %vm2556, %v2513, 0
        %v2573 = vsel %vm2556, %v2514, 0
        %v2576 = vsel %vm2556, %v2515, 0
        %v2579 = vsel %vm2556, %v2516, 0
        %v2582 = vsel %vm2556, %v2517, 0
        %v2585 = vsel %vm2556, %v2518, 0
        %v2588 = vsel %vm2556, %v2519, 0
        %v2591 = vsel %vm2556, %v2520, 0
        %v2594 = vsel %vm2556, %v2521, 0
        %v2597 = vsel %vm2556, %v2522, 0
        %v2600 = vsel %vm2556, %v2523, 0
        %v2603 = vsel %vm2556, %v2524, 0
        %v2606 = vsel %vm2556, %v2525, 0
        %v2609 = vsel %vm2556, %v2526, 0
        %v2612 = vsel %vm2556, %v2527, 0
        %v2615 = vsel %vm2556, %v2528, 0
        %v2618 = vsel %vm2556, %v2529, 0
        %v2621 = vsel %vm2556, %v2530, 0
        %v2624 = vsel %vm2556, %v2531, 0
        %v2627 = vsel %vm2556, %v2532, 0
        %v2630 = vsel %vm2556, %v2533, 0
        %v2633 = vsel %vm2556, %v2534, 0
        %v2636 = vsel %vm2556, %v2535, 0
        %v2639 = vsel %vm2556, %v2536, 0
        %v2642 = vsel %vm2556, %v2537, 0
        %v2645 = vsel %vm2556, %v2538, 0
        %v2648 = vsel %vm2556, %v2539, 0
        %v2651 = vsel %vm2556, %v2540, 0
        %v2654 = vsel %vm2556, %v2541, 0
        %v2657 = vsel %vm2556, %v2542, 0
        %v2660 = vsel %vm2556, %v2543, 0
        %v2663 = vsel %vm2556, %v2544, 0
        %v2666 = vsel %vm2556, %v2545, 0
        %v2669 = vsel %vm2556, %v2546, 0
        %v2672 = vsel %vm2556, %v2547, 0
        %v2675 = vsel %vm2556, %v2548, 0
        %v2678 = vsel %vm2556, %v2549, 0
        %v2681 = vsel %vm2556, %v2550, 0
        %vm2683 = vcmask 1043456
        %v2685 = vsel %vm2683, %v2555, 0
        %2687 = vmatprep.subr.mxu0 0.0
        %2688 = vmatpush1.msra.mxu0 %v2551
        %2689 = vmatprep.subr.mxu0 0.0
        %2690 = vmatpush1.msra.mxu0 %v2552
        %2691 = vmatprep.subr.mxu0 0.0
        %2692 = vmatpush1.msra.mxu0 %v2553
        %2693 = vmatprep.subr.mxu0 0.0
        %2694 = vmatpush1.msra.mxu0 %v2554
        %2695 = vmatprep.subr.mxu0 0.0
        %2696 = vmatpush1.msra.mxu0 %v2685
        %2697 = vmatprep.subr.mxu0 0.0
        %2698 = vmatpush1.msra.mxu0 0.0
        %2699 = vmatprep.subr.mxu0 0.0
        %2700 = vmatpush1.msra.mxu0 0.0
        %2701 = vmatprep.subr.mxu0 0.0
        %2702 = vmatpush1.msra.mxu0 0.0
        %2703 = vmatprep.subr.mxu0 0.0
        %2704 = vmatpush1.msra.mxu0 0.0
        %2705 = vmatprep.subr.mxu0 0.0
        %2706 = vmatpush1.msra.mxu0 0.0
        %2707 = vmatprep.subr.mxu0 0.0
        %2708 = vmatpush1.msra.mxu0 0.0
        %2709 = vmatprep.subr.mxu0 0.0
        %2710 = vmatpush1.msra.mxu0 0.0
        %2711 = vmatprep.subr.mxu0 0.0
        %2712 = vmatpush1.msra.mxu0 0.0
        %2713 = vmatprep.subr.mxu0 0.0
        %2714 = vmatpush1.msra.mxu0 0.0
        %2715 = vmatprep.subr.mxu0 0.0
        %2716 = vmatpush1.msra.mxu0 0.0
        %2717 = vmatprep.subr.mxu0 0.0
        %2718 = vmatpush1.msra.mxu0 0.0
        %2719 = vmatprep.subr.mxu0 0.0
        %2720 = vmatpush1.msra.mxu0 0.0
        %2721 = vmatprep.subr.mxu0 0.0
        %2722 = vmatpush1.msra.mxu0 0.0
        %2723 = vmatprep.subr.mxu0 0.0
        %2724 = vmatpush1.msra.mxu0 0.0
        %2725 = vmatprep.subr.mxu0 0.0
        %2726 = vmatpush1.msra.mxu0 0.0
        %2727 = vmatprep.subr.mxu0 0.0
        %2728 = vmatpush1.msra.mxu0 0.0
        %2729 = vmatprep.subr.mxu0 0.0
        %2730 = vmatpush1.msra.mxu0 0.0
        %2731 = vmatprep.subr.mxu0 0.0
        %2732 = vmatpush1.msra.mxu0 0.0
        %2733 = vmatprep.subr.mxu0 0.0
        %2734 = vmatpush1.msra.mxu0 0.0
        %2735 = vmatprep.subr.mxu0 0.0
        %2736 = vmatpush1.msra.mxu0 0.0
        %2737 = vmatprep.subr.mxu0 0.0
        %2738 = vmatpush1.msra.mxu0 0.0
        %2739 = vmatprep.subr.mxu0 0.0
        %2740 = vmatpush1.msra.mxu0 0.0
        %2741 = vmatprep.subr.mxu0 0.0
        %2742 = vmatpush1.msra.mxu0 0.0
        %2743 = vmatprep.subr.mxu0 0.0
        %2744 = vmatpush1.msra.mxu0 0.0
        %2745 = vmatprep.subr.mxu0 0.0
        %2746 = vmatpush1.msra.mxu0 0.0
        %2747 = vmatprep.subr.mxu0 0.0
        %2748 = vmatpush1.msra.mxu0 0.0
        %2749 = vmatprep.subr.mxu0 0.0
        %2750 = vmatpush1.msra.mxu0 0.0
        %2751 = vmatprep.mubr.f32.mxu0 0.0
        %2752 = vmatmul.mubr.f32.gmra.mrb[0].mxu0 %v2558
        %v2753 = vpop.f32.mrb[0].mxu0
        %v2754 = vadd.f32 0.0, %v2753
        %v2755 = vpop.f32.mrb[0].mxu0
        %2756 = vmatprep.mubr.f32.mxu0 0.0
        %2757 = vmatmul.mubr.f32.gmra.mrb[0].mxu0 %v2561
        %v2758 = vpop.f32.mrb[0].mxu0
        %v2759 = vadd.f32 0.0, %v2758
        %v2760 = vpop.f32.mrb[0].mxu0
        %2761 = vmatprep.mubr.f32.mxu0 0.0
        %2762 = vmatmul.mubr.f32.gmra.mrb[0].mxu0 %v2564
        %v2763 = vpop.f32.mrb[0].mxu0
        %v2764 = vadd.f32 0.0, %v2763
        %v2765 = vpop.f32.mrb[0].mxu0
        %2766 = vmatprep.mubr.f32.mxu0 0.0
        %2767 = vmatmul.mubr.f32.gmra.mrb[0].mxu0 %v2567
        %v2768 = vpop.f32.mrb[0].mxu0
        %v2769 = vadd.f32 0.0, %v2768
        %v2770 = vpop.f32.mrb[0].mxu0
        %2771 = vmatprep.mubr.f32.mxu0 0.0
        %2772 = vmatmul.mubr.f32.gmra.mrb[0].mxu0 %v2570
        %v2773 = vpop.f32.mrb[0].mxu0
        %v2774 = vadd.f32 0.0, %v2773
        %v2775 = vpop.f32.mrb[0].mxu0
        %2776 = vmatprep.mubr.f32.mxu0 0.0
        %2777 = vmatmul.mubr.f32.gmra.mrb[0].mxu0 %v2573
        %v2778 = vpop.f32.mrb[0].mxu0
        %v2779 = vadd.f32 0.0, %v2778
        %v2780 = vpop.f32.mrb[0].mxu0
        %2781 = vmatprep.mubr.f32.mxu0 0.0
        %2782 = vmatmul.mubr.f32.gmra.mrb[0].mxu0 %v2576
        %v2783 = vpop.f32.mrb[0].mxu0
        %v2784 = vadd.f32 0.0, %v2783
        %v2785 = vpop.f32.mrb[0].mxu0
        %2786 = vmatprep.mubr.f32.mxu0 0.0
        %2787 = vmatmul.mubr.f32.gmra.mrb[0].mxu0 %v2579
        %v2788 = vpop.f32.mrb[0].mxu0
        %v2789 = vadd.f32 0.0, %v2788
        %v2790 = vpop.f32.mrb[0].mxu0
        %2791 = vmatprep.mubr.f32.mxu0 0.0
        %2792 = vmatmul.mubr.f32.gmra.mrb[0].mxu0 %v2582
        %v2793 = vpop.f32.mrb[0].mxu0
        %v2794 = vadd.f32 0.0, %v2793
        %v2795 = vpop.f32.mrb[0].mxu0
        %2796 = vmatprep.mubr.f32.mxu0 0.0
        %2797 = vmatmul.mubr.f32.gmra.mrb[0].mxu0 %v2585
        %v2798 = vpop.f32.mrb[0].mxu0
        %v2799 = vadd.f32 0.0, %v2798
        %v2800 = vpop.f32.mrb[0].mxu0
        %2801 = vmatprep.mubr.f32.mxu0 0.0
        %2802 = vmatmul.mubr.f32.gmra.mrb[0].mxu0 %v2588
        %v2803 = vpop.f32.mrb[0].mxu0
        %v2804 = vadd.f32 0.0, %v2803
        %v2805 = vpop.f32.mrb[0].mxu0
        %2806 = vmatprep.mubr.f32.mxu0 0.0
        %2807 = vmatmul.mubr.f32.gmra.mrb[0].mxu0 %v2591
        %v2808 = vpop.f32.mrb[0].mxu0
        %v2809 = vadd.f32 0.0, %v2808
        %v2810 = vpop.f32.mrb[0].mxu0
        %2811 = vmatprep.mubr.f32.mxu0 0.0
        %2812 = vmatmul.mubr.f32.gmra.mrb[0].mxu0 %v2594
        %v2813 = vpop.f32.mrb[0].mxu0
        %v2814 = vadd.f32 0.0, %v2813
        %v2815 = vpop.f32.mrb[0].mxu0
        %2816 = vmatprep.mubr.f32.mxu0 0.0
        %2817 = vmatmul.mubr.f32.gmra.mrb[0].mxu0 %v2597
        %v2818 = vpop.f32.mrb[0].mxu0
        %v2819 = vadd.f32 0.0, %v2818
        %v2820 = vpop.f32.mrb[0].mxu0
        %2821 = vmatprep.mubr.f32.mxu0 0.0
        %2822 = vmatmul.mubr.f32.gmra.mrb[0].mxu0 %v2600
        %v2823 = vpop.f32.mrb[0].mxu0
        %v2824 = vadd.f32 0.0, %v2823
        %v2825 = vpop.f32.mrb[0].mxu0
        %2826 = vmatprep.mubr.f32.mxu0 0.0
        %2827 = vmatmul.mubr.f32.gmra.mrb[0].mxu0 %v2603
        %v2828 = vpop.f32.mrb[0].mxu0
        %v2829 = vadd.f32 0.0, %v2828
        %v2830 = vpop.f32.mrb[0].mxu0
        %2831 = vmatprep.mubr.f32.mxu0 0.0
        %2832 = vmatmul.mubr.f32.gmra.mrb[0].mxu0 %v2606
        %v2833 = vpop.f32.mrb[0].mxu0
        %v2834 = vadd.f32 0.0, %v2833
        %v2835 = vpop.f32.mrb[0].mxu0
        %2836 = vmatprep.mubr.f32.mxu0 0.0
        %2837 = vmatmul.mubr.f32.gmra.mrb[0].mxu0 %v2609
        %v2838 = vpop.f32.mrb[0].mxu0
        %v2839 = vadd.f32 0.0, %v2838
        %v2840 = vpop.f32.mrb[0].mxu0
        %2841 = vmatprep.mubr.f32.mxu0 0.0
        %2842 = vmatmul.mubr.f32.gmra.mrb[0].mxu0 %v2612
        %v2843 = vpop.f32.mrb[0].mxu0
        %v2844 = vadd.f32 0.0, %v2843
        %v2845 = vpop.f32.mrb[0].mxu0
        %2846 = vmatprep.mubr.f32.mxu0 0.0
        %2847 = vmatmul.mubr.f32.gmra.mrb[0].mxu0 %v2615
        %v2848 = vpop.f32.mrb[0].mxu0
        %v2849 = vadd.f32 0.0, %v2848
        %v2850 = vpop.f32.mrb[0].mxu0
        %2851 = vmatprep.mubr.f32.mxu0 0.0
        %2852 = vmatmul.mubr.f32.gmra.mrb[0].mxu0 %v2618
        %v2853 = vpop.f32.mrb[0].mxu0
        %v2854 = vadd.f32 0.0, %v2853
        %v2855 = vpop.f32.mrb[0].mxu0
        %2856 = vmatprep.mubr.f32.mxu0 0.0
        %2857 = vmatmul.mubr.f32.gmra.mrb[0].mxu0 %v2621
        %v2858 = vpop.f32.mrb[0].mxu0
        %v2859 = vadd.f32 0.0, %v2858
        %v2860 = vpop.f32.mrb[0].mxu0
        %2861 = vmatprep.mubr.f32.mxu0 0.0
        %2862 = vmatmul.mubr.f32.gmra.mrb[0].mxu0 %v2624
        %v2863 = vpop.f32.mrb[0].mxu0
        %v2864 = vadd.f32 0.0, %v2863
        %v2865 = vpop.f32.mrb[0].mxu0
        %2866 = vmatprep.mubr.f32.mxu0 0.0
        %2867 = vmatmul.mubr.f32.gmra.mrb[0].mxu0 %v2627
        %v2868 = vpop.f32.mrb[0].mxu0
        %v2869 = vadd.f32 0.0, %v2868
        %v2870 = vpop.f32.mrb[0].mxu0
        %2871 = vmatprep.mubr.f32.mxu0 0.0
        %2872 = vmatmul.mubr.f32.gmra.mrb[0].mxu0 %v2630
        %v2873 = vpop.f32.mrb[0].mxu0
        %v2874 = vadd.f32 0.0, %v2873
        %v2875 = vpop.f32.mrb[0].mxu0
        %2876 = vmatprep.mubr.f32.mxu0 0.0
        %2877 = vmatmul.mubr.f32.gmra.mrb[0].mxu0 %v2633
        %v2878 = vpop.f32.mrb[0].mxu0
        %v2879 = vadd.f32 0.0, %v2878
        %v2880 = vpop.f32.mrb[0].mxu0
        %2881 = vmatprep.mubr.f32.mxu0 0.0
        %2882 = vmatmul.mubr.f32.gmra.mrb[0].mxu0 %v2636
        %v2883 = vpop.f32.mrb[0].mxu0
        %v2884 = vadd.f32 0.0, %v2883
        %v2885 = vpop.f32.mrb[0].mxu0
        %2886 = vmatprep.mubr.f32.mxu0 0.0
        %2887 = vmatmul.mubr.f32.gmra.mrb[0].mxu0 %v2639
        %v2888 = vpop.f32.mrb[0].mxu0
        %v2889 = vadd.f32 0.0, %v2888
        %v2890 = vpop.f32.mrb[0].mxu0
        %2891 = vmatprep.mubr.f32.mxu0 0.0
        %2892 = vmatmul.mubr.f32.gmra.mrb[0].mxu0 %v2642
        %v2893 = vpop.f32.mrb[0].mxu0
        %v2894 = vadd.f32 0.0, %v2893
        %v2895 = vpop.f32.mrb[0].mxu0
        %2896 = vmatprep.mubr.f32.mxu0 0.0
        %2897 = vmatmul.mubr.f32.gmra.mrb[0].mxu0 %v2645
        %v2898 = vpop.f32.mrb[0].mxu0
        %v2899 = vadd.f32 0.0, %v2898
        %v2900 = vpop.f32.mrb[0].mxu0
        %2901 = vmatprep.mubr.f32.mxu0 0.0
        %2902 = vmatmul.mubr.f32.gmra.mrb[0].mxu0 %v2648
        %v2903 = vpop.f32.mrb[0].mxu0
        %v2904 = vadd.f32 0.0, %v2903
        %v2905 = vpop.f32.mrb[0].mxu0
        %2906 = vmatprep.mubr.f32.mxu0 0.0
        %2907 = vmatmul.mubr.f32.gmra.mrb[0].mxu0 %v2651
        %v2908 = vpop.f32.mrb[0].mxu0
        %v2909 = vadd.f32 0.0, %v2908
        %v2910 = vpop.f32.mrb[0].mxu0
        %2911 = vmatprep.mubr.f32.mxu0 0.0
        %2912 = vmatmul.mubr.f32.gmra.mrb[0].mxu0 %v2654
        %v2913 = vpop.f32.mrb[0].mxu0
        %v2914 = vadd.f32 0.0, %v2913
        %v2915 = vpop.f32.mrb[0].mxu0
        %2916 = vmatprep.mubr.f32.mxu0 0.0
        %2917 = vmatmul.mubr.f32.gmra.mrb[0].mxu0 %v2657
        %v2918 = vpop.f32.mrb[0].mxu0
        %v2919 = vadd.f32 0.0, %v2918
        %v2920 = vpop.f32.mrb[0].mxu0
        %2921 = vmatprep.mubr.f32.mxu0 0.0
        %2922 = vmatmul.mubr.f32.gmra.mrb[0].mxu0 %v2660
        %v2923 = vpop.f32.mrb[0].mxu0
        %v2924 = vadd.f32 0.0, %v2923
        %v2925 = vpop.f32.mrb[0].mxu0
        %2926 = vmatprep.mubr.f32.mxu0 0.0
        %2927 = vmatmul.mubr.f32.gmra.mrb[0].mxu0 %v2663
        %v2928 = vpop.f32.mrb[0].mxu0
        %v2929 = vadd.f32 0.0, %v2928
        %v2930 = vpop.f32.mrb[0].mxu0
        %2931 = vmatprep.mubr.f32.mxu0 0.0
        %2932 = vmatmul.mubr.f32.gmra.mrb[0].mxu0 %v2666
        %v2933 = vpop.f32.mrb[0].mxu0
        %v2934 = vadd.f32 0.0, %v2933
        %v2935 = vpop.f32.mrb[0].mxu0
        %2936 = vmatprep.mubr.f32.mxu0 0.0
        %2937 = vmatmul.mubr.f32.gmra.mrb[0].mxu0 %v2669
        %v2938 = vpop.f32.mrb[0].mxu0
        %v2939 = vadd.f32 0.0, %v2938
        %v2940 = vpop.f32.mrb[0].mxu0
        %2941 = vmatprep.mubr.f32.mxu0 0.0
        %2942 = vmatmul.mubr.f32.gmra.mrb[0].mxu0 %v2672
        %v2943 = vpop.f32.mrb[0].mxu0
        %v2944 = vadd.f32 0.0, %v2943
        %v2945 = vpop.f32.mrb[0].mxu0
        %2946 = vmatprep.mubr.f32.mxu0 0.0
        %2947 = vmatmul.mubr.f32.gmra.mrb[0].mxu0 %v2675
        %v2948 = vpop.f32.mrb[0].mxu0
        %v2949 = vadd.f32 0.0, %v2948
        %v2950 = vpop.f32.mrb[0].mxu0
        %2951 = vmatprep.mubr.f32.mxu0 0.0
        %2952 = vmatmul.mubr.f32.gmra.mrb[0].mxu0 %v2678
        %v2953 = vpop.f32.mrb[0].mxu0
        %v2954 = vadd.f32 0.0, %v2953
        %v2955 = vpop.f32.mrb[0].mxu0
        %2956 = vmatprep.mubr.f32.mxu0 0.0
        %2957 = vmatmul.mubr.f32.gmra.mrb[0].mxu0 %v2681
        %v2958 = vpop.f32.mrb[0].mxu0
        %v2959 = vadd.f32 0.0, %v2958
        %v2960 = vpop.f32.mrb[0].mxu0
        %2961 = vdwg.mxu0
        %v2962 = vld [vmem:[#allocation10] sm:$0x1]
        %v2964 = vlaneseq
        %v2965 = vshrl.u32 %v2964, 7
        %v2966 = vsub.s32 0, %v2965
        %v2967 = vrot.slane %v2962, %v2966
        %v2969 = vmul.f32 %v2754, %v2967
        %v2970 = vmul.f32 %v2759, %v2967
        %v2971 = vmul.f32 %v2764, %v2967
        %v2972 = vmul.f32 %v2769, %v2967
        %v2973 = vmul.f32 %v2774, %v2967
        %v2974 = vmul.f32 %v2779, %v2967
        %v2975 = vmul.f32 %v2784, %v2967
        %v2976 = vmul.f32 %v2789, %v2967
        %v2977 = vmul.f32 %v2794, %v2967
        %v2978 = vmul.f32 %v2799, %v2967
        %v2979 = vmul.f32 %v2804, %v2967
        %v2980 = vmul.f32 %v2809, %v2967
        %v2981 = vmul.f32 %v2814, %v2967
        %v2982 = vmul.f32 %v2819, %v2967
        %v2983 = vmul.f32 %v2824, %v2967
        %v2984 = vmul.f32 %v2829, %v2967
        %v2985 = vmul.f32 %v2834, %v2967
        %v2986 = vmul.f32 %v2839, %v2967
        %v2987 = vmul.f32 %v2844, %v2967
        %v2988 = vmul.f32 %v2849, %v2967
        %v2989 = vmul.f32 %v2854, %v2967
        %v2990 = vmul.f32 %v2859, %v2967
        %v2991 = vmul.f32 %v2864, %v2967
        %v2992 = vmul.f32 %v2869, %v2967
        %v2993 = vmul.f32 %v2874, %v2967
        %v2994 = vmul.f32 %v2879, %v2967
        %v2995 = vmul.f32 %v2884, %v2967
        %v2996 = vmul.f32 %v2889, %v2967
        %v2997 = vmul.f32 %v2894, %v2967
        %v2998 = vmul.f32 %v2899, %v2967
        %v2999 = vmul.f32 %v2904, %v2967
        %v3000 = vmul.f32 %v2909, %v2967
        %v3001 = vmul.f32 %v2914, %v2967
        %v3002 = vmul.f32 %v2919, %v2967
        %v3003 = vmul.f32 %v2924, %v2967
        %v3004 = vmul.f32 %v2929, %v2967
        %v3005 = vmul.f32 %v2934, %v2967
        %v3006 = vmul.f32 %v2939, %v2967
        %v3007 = vmul.f32 %v2944, %v2967
        %v3008 = vmul.f32 %v2949, %v2967
        %v3009 = vmul.f32 %v2954, %v2967
        %v3010 = vmul.f32 %v2959, %v2967
        %v3011 = vld [vmem:[#allocation11] sm:$0x1]
        %v3013 = vlaneseq
        %v3014 = vshrl.u32 %v3013, 7
        %v3015 = vsub.s32 0, %v3014
        %v3016 = vrot.slane %v3011, %v3015
        %v3018 = vadd.f32 %v2969, %v3016
        %v3019 = vadd.f32 %v2970, %v3016
        %v3020 = vadd.f32 %v2971, %v3016
        %v3021 = vadd.f32 %v2972, %v3016
        %v3022 = vadd.f32 %v2973, %v3016
        %v3023 = vadd.f32 %v2974, %v3016
        %v3024 = vadd.f32 %v2975, %v3016
        %v3025 = vadd.f32 %v2976, %v3016
        %v3026 = vadd.f32 %v2977, %v3016
        %v3027 = vadd.f32 %v2978, %v3016
        %v3028 = vadd.f32 %v2979, %v3016
        %v3029 = vadd.f32 %v2980, %v3016
        %v3030 = vadd.f32 %v2981, %v3016
        %v3031 = vadd.f32 %v2982, %v3016
        %v3032 = vadd.f32 %v2983, %v3016
        %v3033 = vadd.f32 %v2984, %v3016
        %v3034 = vadd.f32 %v2985, %v3016
        %v3035 = vadd.f32 %v2986, %v3016
        %v3036 = vadd.f32 %v2987, %v3016
        %v3037 = vadd.f32 %v2988, %v3016
        %v3038 = vadd.f32 %v2989, %v3016
        %v3039 = vadd.f32 %v2990, %v3016
        %v3040 = vadd.f32 %v2991, %v3016
        %v3041 = vadd.f32 %v2992, %v3016
        %v3042 = vadd.f32 %v2993, %v3016
        %v3043 = vadd.f32 %v2994, %v3016
        %v3044 = vadd.f32 %v2995, %v3016
        %v3045 = vadd.f32 %v2996, %v3016
        %v3046 = vadd.f32 %v2997, %v3016
        %v3047 = vadd.f32 %v2998, %v3016
        %v3048 = vadd.f32 %v2999, %v3016
        %v3049 = vadd.f32 %v3000, %v3016
        %v3050 = vadd.f32 %v3001, %v3016
        %v3051 = vadd.f32 %v3002, %v3016
        %v3052 = vadd.f32 %v3003, %v3016
        %v3053 = vadd.f32 %v3004, %v3016
        %v3054 = vadd.f32 %v3005, %v3016
        %v3055 = vadd.f32 %v3006, %v3016
        %v3056 = vadd.f32 %v3007, %v3016
        %v3057 = vadd.f32 %v3008, %v3016
        %v3058 = vadd.f32 %v3009, %v3016
        %v3059 = vadd.f32 %v3010, %v3016
        %v3060 = vmax.f32 %v3018, 0.0
        %v3061 = vmax.f32 %v3019, 0.0
        %v3062 = vmax.f32 %v3020, 0.0
        %v3063 = vmax.f32 %v3021, 0.0
        %v3064 = vmax.f32 %v3022, 0.0
        %v3065 = vmax.f32 %v3023, 0.0
        %v3066 = vmax.f32 %v3024, 0.0
        %v3067 = vmax.f32 %v3025, 0.0
        %v3068 = vmax.f32 %v3026, 0.0
        %v3069 = vmax.f32 %v3027, 0.0
        %v3070 = vmax.f32 %v3028, 0.0
        %v3071 = vmax.f32 %v3029, 0.0
        %v3072 = vmax.f32 %v3030, 0.0
        %v3073 = vmax.f32 %v3031, 0.0
        %v3074 = vmax.f32 %v3032, 0.0
        %v3075 = vmax.f32 %v3033, 0.0
        %v3076 = vmax.f32 %v3034, 0.0
        %v3077 = vmax.f32 %v3035, 0.0
        %v3078 = vmax.f32 %v3036, 0.0
        %v3079 = vmax.f32 %v3037, 0.0
        %v3080 = vmax.f32 %v3038, 0.0
        %v3081 = vmax.f32 %v3039, 0.0
        %v3082 = vmax.f32 %v3040, 0.0
        %v3083 = vmax.f32 %v3041, 0.0
        %v3084 = vmax.f32 %v3042, 0.0
        %v3085 = vmax.f32 %v3043, 0.0
        %v3086 = vmax.f32 %v3044, 0.0
        %v3087 = vmax.f32 %v3045, 0.0
        %v3088 = vmax.f32 %v3046, 0.0
        %v3089 = vmax.f32 %v3047, 0.0
        %v3090 = vmax.f32 %v3048, 0.0
        %v3091 = vmax.f32 %v3049, 0.0
        %v3092 = vmax.f32 %v3050, 0.0
        %v3093 = vmax.f32 %v3051, 0.0
        %v3094 = vmax.f32 %v3052, 0.0
        %v3095 = vmax.f32 %v3053, 0.0
        %v3096 = vmax.f32 %v3054, 0.0
        %v3097 = vmax.f32 %v3055, 0.0
        %v3098 = vmax.f32 %v3056, 0.0
        %v3099 = vmax.f32 %v3057, 0.0
        %v3100 = vmax.f32 %v3058, 0.0
        %v3101 = vmax.f32 %v3059, 0.0
        %s3102 = ssub.s32 %s391, 3
        %v3103 = vstv %s3102
        %v3104 = vadd.s32 %v3103, 1
        %v3105 = vadd.s32 %v3103, 2
        %v3106 = vadd.s32 %v3103, 3
        %v3107 = vadd.s32 %v3103, 4
        %v3108 = vadd.s32 %v3103, 5
        %v3109 = vadd.s32 %v3103, 6
        %v3110 = vadd.s32 %v3103, 7
        %v3111 = vadd.s32 %v3103, 8
        %v3112 = vadd.s32 %v3103, 9
        %v3113 = vadd.s32 %v3103, 10
        %v3114 = vadd.s32 %v3103, 11
        %v3115 = vadd.s32 %v3103, 12
        %v3116 = vadd.s32 %v3103, 13
        %v3117 = vlaneseq
        %v3118 = vshrl.u32 %v3117, 7
        %v3119 = vadd.s32 %v3118, 8
        %v3120 = vadd.s32 %v3118, 16
        %vm3121 = vcmp.ge.s32.totalorder %v3103, 0
        %vm3122 = vcmp.ge.s32.totalorder %v3104, 0
        %vm3123 = vcmp.ge.s32.totalorder %v3105, 0
        %vm3124 = vcmp.ge.s32.totalorder %v3106, 0
        %vm3125 = vcmp.ge.s32.totalorder %v3107, 0
        %vm3126 = vcmp.ge.s32.totalorder %v3108, 0
        %vm3127 = vcmp.ge.s32.totalorder %v3109, 0
        %vm3128 = vcmp.ge.s32.totalorder %v3110, 0
        %vm3129 = vcmp.ge.s32.totalorder %v3111, 0
        %vm3130 = vcmp.ge.s32.totalorder %v3112, 0
        %vm3131 = vcmp.ge.s32.totalorder %v3113, 0
        %vm3132 = vcmp.ge.s32.totalorder %v3114, 0
        %vm3133 = vcmp.ge.s32.totalorder %v3115, 0
        %vm3134 = vcmp.ge.s32.totalorder %v3116, 0
        %vm3135 = vcmp.lt.s32.totalorder %v3103, 16
        %vm3136 = vcmp.lt.s32.totalorder %v3104, 16
        %vm3137 = vcmp.lt.s32.totalorder %v3105, 16
        %vm3138 = vcmp.lt.s32.totalorder %v3106, 16
        %vm3139 = vcmp.lt.s32.totalorder %v3107, 16
        %vm3140 = vcmp.lt.s32.totalorder %v3108, 16
        %vm3141 = vcmp.lt.s32.totalorder %v3109, 16
        %vm3142 = vcmp.lt.s32.totalorder %v3110, 16
        %vm3143 = vcmp.lt.s32.totalorder %v3111, 16
        %vm3144 = vcmp.lt.s32.totalorder %v3112, 16
        %vm3145 = vcmp.lt.s32.totalorder %v3113, 16
        %vm3146 = vcmp.lt.s32.totalorder %v3114, 16
        %vm3147 = vcmp.lt.s32.totalorder %v3115, 16
        %vm3148 = vcmp.lt.s32.totalorder %v3116, 16
        %vm3149 = vmand %vm3121, %vm3135
        %vm3150 = vmand %vm3122, %vm3136
        %vm3151 = vmand %vm3123, %vm3137
        %vm3152 = vmand %vm3124, %vm3138
        %vm3153 = vmand %vm3125, %vm3139
        %vm3154 = vmand %vm3126, %vm3140
        %vm3155 = vmand %vm3127, %vm3141
        %vm3156 = vmand %vm3128, %vm3142
        %vm3157 = vmand %vm3129, %vm3143
        %vm3158 = vmand %vm3130, %vm3144
        %vm3159 = vmand %vm3131, %vm3145
        %vm3160 = vmand %vm3132, %vm3146
        %vm3161 = vmand %vm3133, %vm3147
        %vm3162 = vmand %vm3134, %vm3148
        %vm3163 = vcmp.ge.s32.totalorder %v3118, 3
        %vm3164 = vcmp.ge.s32.totalorder %v3119, 3
        %vm3165 = vcmp.ge.s32.totalorder %v3120, 3
        %vm3166 = vmand %vm3149, %vm3163
        %vm3167 = vmand %vm3149, %vm3164
        %vm3168 = vmand %vm3149, %vm3165
        %vm3169 = vmand %vm3150, %vm3163
        %vm3170 = vmand %vm3150, %vm3164
        %vm3171 = vmand %vm3150, %vm3165
        %vm3172 = vmand %vm3151, %vm3163
        %vm3173 = vmand %vm3151, %vm3164
        %vm3174 = vmand %vm3151, %vm3165
        %vm3175 = vmand %vm3152, %vm3163
        %vm3176 = vmand %vm3152, %vm3164
        %vm3177 = vmand %vm3152, %vm3165
        %vm3178 = vmand %vm3153, %vm3163
        %vm3179 = vmand %vm3153, %vm3164
        %vm3180 = vmand %vm3153, %vm3165
        %vm3181 = vmand %vm3154, %vm3163
        %vm3182 = vmand %vm3154, %vm3164
        %vm3183 = vmand %vm3154, %vm3165
        %vm3184 = vmand %vm3155, %vm3163
        %vm3185 = vmand %vm3155, %vm3164
        %vm3186 = vmand %vm3155, %vm3165
        %vm3187 = vmand %vm3156, %vm3163
        %vm3188 = vmand %vm3156, %vm3164
        %vm3189 = vmand %vm3156, %vm3165
        %vm3190 = vmand %vm3157, %vm3163
        %vm3191 = vmand %vm3157, %vm3164
        %vm3192 = vmand %vm3157, %vm3165
        %vm3193 = vmand %vm3158, %vm3163
        %vm3194 = vmand %vm3158, %vm3164
        %vm3195 = vmand %vm3158, %vm3165
        %vm3196 = vmand %vm3159, %vm3163
        %vm3197 = vmand %vm3159, %vm3164
        %vm3198 = vmand %vm3159, %vm3165
        %vm3199 = vmand %vm3160, %vm3163
        %vm3200 = vmand %vm3160, %vm3164
        %vm3201 = vmand %vm3160, %vm3165
        %vm3202 = vmand %vm3161, %vm3163
        %vm3203 = vmand %vm3161, %vm3164
        %vm3204 = vmand %vm3161, %vm3165
        %vm3205 = vmand %vm3162, %vm3163
        %vm3206 = vmand %vm3162, %vm3164
        %vm3207 = vmand %vm3162, %vm3165
        %vm3208 = vcmp.lt.s32.totalorder %v3118, 19
        %vm3209 = vcmp.lt.s32.totalorder %v3119, 19
        %vm3210 = vcmp.lt.s32.totalorder %v3120, 19
        %vm3211 = vmand %vm3166, %vm3208
        %vm3212 = vmand %vm3167, %vm3209
        %vm3213 = vmand %vm3168, %vm3210
        %vm3214 = vmand %vm3169, %vm3208
        %vm3215 = vmand %vm3170, %vm3209
        %vm3216 = vmand %vm3171, %vm3210
        %vm3217 = vmand %vm3172, %vm3208
        %vm3218 = vmand %vm3173, %vm3209
        %vm3219 = vmand %vm3174, %vm3210
        %vm3220 = vmand %vm3175, %vm3208
        %vm3221 = vmand %vm3176, %vm3209
        %vm3222 = vmand %vm3177, %vm3210
        %vm3223 = vmand %vm3178, %vm3208
        %vm3224 = vmand %vm3179, %vm3209
        %vm3225 = vmand %vm3180, %vm3210
        %vm3226 = vmand %vm3181, %vm3208
        %vm3227 = vmand %vm3182, %vm3209
        %vm3228 = vmand %vm3183, %vm3210
        %vm3229 = vmand %vm3184, %vm3208
        %vm3230 = vmand %vm3185, %vm3209
        %vm3231 = vmand %vm3186, %vm3210
        %vm3232 = vmand %vm3187, %vm3208
        %vm3233 = vmand %vm3188, %vm3209
        %vm3234 = vmand %vm3189, %vm3210
        %vm3235 = vmand %vm3190, %vm3208
        %vm3236 = vmand %vm3191, %vm3209
        %vm3237 = vmand %vm3192, %vm3210
        %vm3238 = vmand %vm3193, %vm3208
        %vm3239 = vmand %vm3194, %vm3209
        %vm3240 = vmand %vm3195, %vm3210
        %vm3241 = vmand %vm3196, %vm3208
        %vm3242 = vmand %vm3197, %vm3209
        %vm3243 = vmand %vm3198, %vm3210
        %vm3244 = vmand %vm3199, %vm3208
        %vm3245 = vmand %vm3200, %vm3209
        %vm3246 = vmand %vm3201, %vm3210
        %vm3247 = vmand %vm3202, %vm3208
        %vm3248 = vmand %vm3203, %vm3209
        %vm3249 = vmand %vm3204, %vm3210
        %vm3250 = vmand %vm3205, %vm3208
        %vm3251 = vmand %vm3206, %vm3209
        %vm3252 = vmand %vm3207, %vm3210
        %v3253 = vsel %vm3211, 1, 0
        %v3254 = vsel %vm3212, 1, 0
        %v3255 = vsel %vm3213, 1, 0
        %v3256 = vsel %vm3214, 1, 0
        %v3257 = vsel %vm3215, 1, 0
        %v3258 = vsel %vm3216, 1, 0
        %v3259 = vsel %vm3217, 1, 0
        %v3260 = vsel %vm3218, 1, 0
        %v3261 = vsel %vm3219, 1, 0
        %v3262 = vsel %vm3220, 1, 0
        %v3263 = vsel %vm3221, 1, 0
        %v3264 = vsel %vm3222, 1, 0
        %v3265 = vsel %vm3223, 1, 0
        %v3266 = vsel %vm3224, 1, 0
        %v3267 = vsel %vm3225, 1, 0
        %v3268 = vsel %vm3226, 1, 0
        %v3269 = vsel %vm3227, 1, 0
        %v3270 = vsel %vm3228, 1, 0
        %v3271 = vsel %vm3229, 1, 0
        %v3272 = vsel %vm3230, 1, 0
        %v3273 = vsel %vm3231, 1, 0
        %v3274 = vsel %vm3232, 1, 0
        %v3275 = vsel %vm3233, 1, 0
        %v3276 = vsel %vm3234, 1, 0
        %v3277 = vsel %vm3235, 1, 0
        %v3278 = vsel %vm3236, 1, 0
        %v3279 = vsel %vm3237, 1, 0
        %v3280 = vsel %vm3238, 1, 0
        %v3281 = vsel %vm3239, 1, 0
        %v3282 = vsel %vm3240, 1, 0
        %v3283 = vsel %vm3241, 1, 0
        %v3284 = vsel %vm3242, 1, 0
        %v3285 = vsel %vm3243, 1, 0
        %v3286 = vsel %vm3244, 1, 0
        %v3287 = vsel %vm3245, 1, 0
        %v3288 = vsel %vm3246, 1, 0
        %v3289 = vsel %vm3247, 1, 0
        %v3290 = vsel %vm3248, 1, 0
        %v3291 = vsel %vm3249, 1, 0
        %v3292 = vsel %vm3250, 1, 0
        %v3293 = vsel %vm3251, 1, 0
        %v3294 = vsel %vm3252, 1, 0
        %vm3295 = vcmp.eq.s32.totalorder %v3253, 1
        %vm3296 = vcmp.eq.s32.totalorder %v3254, 1
        %vm3297 = vcmp.eq.s32.totalorder %v3255, 1
        %vm3298 = vcmp.eq.s32.totalorder %v3256, 1
        %vm3299 = vcmp.eq.s32.totalorder %v3257, 1
        %vm3300 = vcmp.eq.s32.totalorder %v3258, 1
        %vm3301 = vcmp.eq.s32.totalorder %v3259, 1
        %vm3302 = vcmp.eq.s32.totalorder %v3260, 1
        %vm3303 = vcmp.eq.s32.totalorder %v3261, 1
        %vm3304 = vcmp.eq.s32.totalorder %v3262, 1
        %vm3305 = vcmp.eq.s32.totalorder %v3263, 1
        %vm3306 = vcmp.eq.s32.totalorder %v3264, 1
        %vm3307 = vcmp.eq.s32.totalorder %v3265, 1
        %vm3308 = vcmp.eq.s32.totalorder %v3266, 1
        %vm3309 = vcmp.eq.s32.totalorder %v3267, 1
        %vm3310 = vcmp.eq.s32.totalorder %v3268, 1
        %vm3311 = vcmp.eq.s32.totalorder %v3269, 1
        %vm3312 = vcmp.eq.s32.totalorder %v3270, 1
        %vm3313 = vcmp.eq.s32.totalorder %v3271, 1
        %vm3314 = vcmp.eq.s32.totalorder %v3272, 1
        %vm3315 = vcmp.eq.s32.totalorder %v3273, 1
        %vm3316 = vcmp.eq.s32.totalorder %v3274, 1
        %vm3317 = vcmp.eq.s32.totalorder %v3275, 1
        %vm3318 = vcmp.eq.s32.totalorder %v3276, 1
        %vm3319 = vcmp.eq.s32.totalorder %v3277, 1
        %vm3320 = vcmp.eq.s32.totalorder %v3278, 1
        %vm3321 = vcmp.eq.s32.totalorder %v3279, 1
        %vm3322 = vcmp.eq.s32.totalorder %v3280, 1
        %vm3323 = vcmp.eq.s32.totalorder %v3281, 1
        %vm3324 = vcmp.eq.s32.totalorder %v3282, 1
        %vm3325 = vcmp.eq.s32.totalorder %v3283, 1
        %vm3326 = vcmp.eq.s32.totalorder %v3284, 1
        %vm3327 = vcmp.eq.s32.totalorder %v3285, 1
        %vm3328 = vcmp.eq.s32.totalorder %v3286, 1
        %vm3329 = vcmp.eq.s32.totalorder %v3287, 1
        %vm3330 = vcmp.eq.s32.totalorder %v3288, 1
        %vm3331 = vcmp.eq.s32.totalorder %v3289, 1
        %vm3332 = vcmp.eq.s32.totalorder %v3290, 1
        %vm3333 = vcmp.eq.s32.totalorder %v3291, 1
        %vm3334 = vcmp.eq.s32.totalorder %v3292, 1
        %vm3335 = vcmp.eq.s32.totalorder %v3293, 1
        %vm3336 = vcmp.eq.s32.totalorder %v3294, 1
        %v3337 = vsel %vm3295, %v3060, 0.0
        %v3338 = vsel %vm3296, %v3061, 0.0
        %v3339 = vsel %vm3297, %v3062, 0.0
        %v3340 = vsel %vm3298, %v3063, 0.0
        %v3341 = vsel %vm3299, %v3064, 0.0
        %v3342 = vsel %vm3300, %v3065, 0.0
        %v3343 = vsel %vm3301, %v3066, 0.0
        %v3344 = vsel %vm3302, %v3067, 0.0
        %v3345 = vsel %vm3303, %v3068, 0.0
        %v3346 = vsel %vm3304, %v3069, 0.0
        %v3347 = vsel %vm3305, %v3070, 0.0
        %v3348 = vsel %vm3306, %v3071, 0.0
        %v3349 = vsel %vm3307, %v3072, 0.0
        %v3350 = vsel %vm3308, %v3073, 0.0
        %v3351 = vsel %vm3309, %v3074, 0.0
        %v3352 = vsel %vm3310, %v3075, 0.0
        %v3353 = vsel %vm3311, %v3076, 0.0
        %v3354 = vsel %vm3312, %v3077, 0.0
        %v3355 = vsel %vm3313, %v3078, 0.0
        %v3356 = vsel %vm3314, %v3079, 0.0
        %v3357 = vsel %vm3315, %v3080, 0.0
        %v3358 = vsel %vm3316, %v3081, 0.0
        %v3359 = vsel %vm3317, %v3082, 0.0
        %v3360 = vsel %vm3318, %v3083, 0.0
        %v3361 = vsel %vm3319, %v3084, 0.0
        %v3362 = vsel %vm3320, %v3085, 0.0
        %v3363 = vsel %vm3321, %v3086, 0.0
        %v3364 = vsel %vm3322, %v3087, 0.0
        %v3365 = vsel %vm3323, %v3088, 0.0
        %v3366 = vsel %vm3324, %v3089, 0.0
        %v3367 = vsel %vm3325, %v3090, 0.0
        %v3368 = vsel %vm3326, %v3091, 0.0
        %v3369 = vsel %vm3327, %v3092, 0.0
        %v3370 = vsel %vm3328, %v3093, 0.0
        %v3371 = vsel %vm3329, %v3094, 0.0
        %v3372 = vsel %vm3330, %v3095, 0.0
        %v3373 = vsel %vm3331, %v3096, 0.0
        %v3374 = vsel %vm3332, %v3097, 0.0
        %v3375 = vsel %vm3333, %v3098, 0.0
        %v3376 = vsel %vm3334, %v3099, 0.0
        %v3377 = vsel %vm3335, %v3100, 0.0
        %v3378 = vsel %vm3336, %v3101, 0.0
        %3379 = vst.msk [vmem:[#allocation3] sm:$0xff] %vm436, %v3337
        %3380 = vst.msk [vmem:[#allocation3 + $0x8] sm:$0xff] %vm436, %v3338
        %3381 = vst.msk [vmem:[#allocation3 + $0x10] sm:$0xff] %vm436, %v3339
        %3382 = vst.msk [vmem:[#allocation3 + $0x18] sm:$0xff] %vm436, %v3340
        %3383 = vst.msk [vmem:[#allocation3 + $0x20] sm:$0xff] %vm436, %v3341
        %3384 = vst.msk [vmem:[#allocation3 + $0x28] sm:$0xff] %vm436, %v3342
        %3385 = vst.msk [vmem:[#allocation3 + $0x30] sm:$0xff] %vm436, %v3343
        %3386 = vst.msk [vmem:[#allocation3 + $0x38] sm:$0xff] %vm436, %v3344
        %3387 = vst.msk [vmem:[#allocation3 + $0x40] sm:$0xff] %vm436, %v3345
        %3388 = vst.msk [vmem:[#allocation3 + $0x48] sm:$0xff] %vm436, %v3346
        %3389 = vst.msk [vmem:[#allocation3 + $0x50] sm:$0xff] %vm436, %v3347
        %3390 = vst.msk [vmem:[#allocation3 + $0x58] sm:$0xff] %vm436, %v3348
        %3391 = vst.msk [vmem:[#allocation3 + $0x60] sm:$0xff] %vm436, %v3349
        %3392 = vst.msk [vmem:[#allocation3 + $0x68] sm:$0xff] %vm436, %v3350
        %3393 = vst.msk [vmem:[#allocation3 + $0x70] sm:$0xff] %vm436, %v3351
        %3394 = vst.msk [vmem:[#allocation3 + $0x78] sm:$0xff] %vm436, %v3352
        %3395 = vst.msk [vmem:[#allocation3 + $0x80] sm:$0xff] %vm436, %v3353
        %3396 = vst.msk [vmem:[#allocation3 + $0x88] sm:$0xff] %vm436, %v3354
        %3397 = vst.msk [vmem:[#allocation3 + $0x90] sm:$0xff] %vm436, %v3355
        %3398 = vst.msk [vmem:[#allocation3 + $0x98] sm:$0xff] %vm436, %v3356
        %3399 = vst.msk [vmem:[#allocation3 + $0xa0] sm:$0xff] %vm436, %v3357
        %3400 = vst.msk [vmem:[#allocation3 + $0xa8] sm:$0xff] %vm436, %v3358
        %3401 = vst.msk [vmem:[#allocation3 + $0xb0] sm:$0xff] %vm436, %v3359
        %3402 = vst.msk [vmem:[#allocation3 + $0xb8] sm:$0xff] %vm436, %v3360
        %3403 = vst.msk [vmem:[#allocation3 + $0xc0] sm:$0xff] %vm436, %v3361
        %3404 = vst.msk [vmem:[#allocation3 + $0xc8] sm:$0xff] %vm436, %v3362
        %3405 = vst.msk [vmem:[#allocation3 + $0xd0] sm:$0xff] %vm436, %v3363
        %3406 = vst.msk [vmem:[#allocation3 + $0xd8] sm:$0xff] %vm436, %v3364
        %3407 = vst.msk [vmem:[#allocation3 + $0xe0] sm:$0xff] %vm436, %v3365
        %3408 = vst.msk [vmem:[#allocation3 + $0xe8] sm:$0xff] %vm436, %v3366
        %3409 = vst.msk [vmem:[#allocation3 + $0xf0] sm:$0xff] %vm436, %v3367
        %3410 = vst.msk [vmem:[#allocation3 + $0xf8] sm:$0xff] %vm436, %v3368
        %3411 = vst.msk [vmem:[#allocation3 + $0x100] sm:$0xff] %vm436, %v3369
        %3412 = vst.msk [vmem:[#allocation3 + $0x108] sm:$0xff] %vm436, %v3370
        %3413 = vst.msk [vmem:[#allocation3 + $0x110] sm:$0xff] %vm436, %v3371
        %3414 = vst.msk [vmem:[#allocation3 + $0x118] sm:$0xff] %vm436, %v3372
        %3415 = vst.msk [vmem:[#allocation3 + $0x120] sm:$0xff] %vm436, %v3373
        %3416 = vst.msk [vmem:[#allocation3 + $0x128] sm:$0xff] %vm436, %v3374
        %3417 = vst.msk [vmem:[#allocation3 + $0x130] sm:$0xff] %vm436, %v3375
        %3418 = vst.msk [vmem:[#allocation3 + $0x138] sm:$0xff] %vm436, %v3376
        %3419 = vst.msk [vmem:[#allocation3 + $0x140] sm:$0xff] %vm436, %v3377
        %3420 = vst.msk [vmem:[#allocation3 + $0x148] sm:$0xff] %vm436, %v3378
        %v3421 = vld [vmem:[#allocation3] sm:$0xff]
        %v3422 = vld [vmem:[#allocation3 + $0x8] sm:$0xff]
        %v3423 = vld [vmem:[#allocation3 + $0x18] sm:$0xff]
        %v3424 = vld [vmem:[#allocation3 + $0x20] sm:$0xff]
        %v3425 = vld [vmem:[#allocation3 + $0x30] sm:$0xff]
        %v3426 = vld [vmem:[#allocation3 + $0x38] sm:$0xff]
        %v3427 = vld [vmem:[#allocation3 + $0x48] sm:$0xff]
        %v3428 = vld [vmem:[#allocation3 + $0x50] sm:$0xff]
        %v3429 = vld [vmem:[#allocation3 + $0x60] sm:$0xff]
        %v3430 = vld [vmem:[#allocation3 + $0x68] sm:$0xff]
        %v3431 = vld [vmem:[#allocation3 + $0x78] sm:$0xff]
        %v3432 = vld [vmem:[#allocation3 + $0x80] sm:$0xff]
        %v3433 = vld [vmem:[#allocation3 + $0x90] sm:$0xff]
        %v3434 = vld [vmem:[#allocation3 + $0x98] sm:$0xff]
        %v3435 = vld [vmem:[#allocation3 + $0xa8] sm:$0xff]
        %v3436 = vld [vmem:[#allocation3 + $0xb0] sm:$0xff]
        %3437 = vst.msk [vmem:[#allocation4] sm:$0xff] %vm436, %v3421
        %3438 = vst.msk [vmem:[#allocation4 + $0x8] sm:$0xff] %vm436, %v3422
        %3439 = vst.msk [vmem:[#allocation4 + $0x10] sm:$0xff] %vm436, %v3423
        %3440 = vst.msk [vmem:[#allocation4 + $0x18] sm:$0xff] %vm436, %v3424
        %3441 = vst.msk [vmem:[#allocation4 + $0x20] sm:$0xff] %vm436, %v3425
        %3442 = vst.msk [vmem:[#allocation4 + $0x28] sm:$0xff] %vm436, %v3426
        %3443 = vst.msk [vmem:[#allocation4 + $0x30] sm:$0xff] %vm436, %v3427
        %3444 = vst.msk [vmem:[#allocation4 + $0x38] sm:$0xff] %vm436, %v3428
        %3445 = vst.msk [vmem:[#allocation4 + $0x40] sm:$0xff] %vm436, %v3429
        %3446 = vst.msk [vmem:[#allocation4 + $0x48] sm:$0xff] %vm436, %v3430
        %3447 = vst.msk [vmem:[#allocation4 + $0x50] sm:$0xff] %vm436, %v3431
        %3448 = vst.msk [vmem:[#allocation4 + $0x58] sm:$0xff] %vm436, %v3432
        %3449 = vst.msk [vmem:[#allocation4 + $0x60] sm:$0xff] %vm436, %v3433
        %3450 = vst.msk [vmem:[#allocation4 + $0x68] sm:$0xff] %vm436, %v3434
        %3451 = vst.msk [vmem:[#allocation4 + $0x70] sm:$0xff] %vm436, %v3435
        %3452 = vst.msk [vmem:[#allocation4 + $0x78] sm:$0xff] %vm436, %v3436
        %v3453 = vld [vmem:[#allocation3 + $0x3] sm:$0xff]
        %v3454 = vld [vmem:[#allocation3 + $0xb] sm:$0xff]
        %v3455 = vld [vmem:[#allocation3 + $0x1b] sm:$0xff]
        %v3456 = vld [vmem:[#allocation3 + $0x23] sm:$0xff]
        %v3457 = vld [vmem:[#allocation3 + $0x33] sm:$0xff]
        %v3458 = vld [vmem:[#allocation3 + $0x3b] sm:$0xff]
        %v3459 = vld [vmem:[#allocation3 + $0x4b] sm:$0xff]
        %v3460 = vld [vmem:[#allocation3 + $0x53] sm:$0xff]
        %v3461 = vld [vmem:[#allocation3 + $0x63] sm:$0xff]
        %v3462 = vld [vmem:[#allocation3 + $0x6b] sm:$0xff]
        %v3463 = vld [vmem:[#allocation3 + $0x7b] sm:$0xff]
        %v3464 = vld [vmem:[#allocation3 + $0x83] sm:$0xff]
        %v3465 = vld [vmem:[#allocation3 + $0x93] sm:$0xff]
        %v3466 = vld [vmem:[#allocation3 + $0x9b] sm:$0xff]
        %v3467 = vld [vmem:[#allocation3 + $0xab] sm:$0xff]
        %v3468 = vld [vmem:[#allocation3 + $0xb3] sm:$0xff]
        %3485 = vrot.lane.b32.xlu0 %v3453, 4
        %v3486 = vpop.permute.xlu0 %3485
        %3487 = vrot.lane.b32.xlu0 %v3454, 4
        %v3488 = vpop.permute.xlu0 %3487
        %3489 = vrot.lane.b32.xlu0 %v3455, 4
        %v3490 = vpop.permute.xlu0 %3489
        %3491 = vrot.lane.b32.xlu0 %v3456, 4
        %v3492 = vpop.permute.xlu0 %3491
        %3493 = vrot.lane.b32.xlu0 %v3457, 4
        %v3494 = vpop.permute.xlu0 %3493
        %3495 = vrot.lane.b32.xlu0 %v3458, 4
        %v3496 = vpop.permute.xlu0 %3495
        %3497 = vrot.lane.b32.xlu0 %v3459, 4
        %v3498 = vpop.permute.xlu0 %3497
        %3499 = vrot.lane.b32.xlu0 %v3460, 4
        %v3500 = vpop.permute.xlu0 %3499
        %3501 = vrot.lane.b32.xlu0 %v3461, 4
        %v3502 = vpop.permute.xlu0 %3501
        %3503 = vrot.lane.b32.xlu0 %v3462, 4
        %v3504 = vpop.permute.xlu0 %3503
        %3505 = vrot.lane.b32.xlu0 %v3463, 4
        %v3506 = vpop.permute.xlu0 %3505
        %3507 = vrot.lane.b32.xlu0 %v3464, 4
        %v3508 = vpop.permute.xlu0 %3507
        %3509 = vrot.lane.b32.xlu0 %v3465, 4
        %v3510 = vpop.permute.xlu0 %3509
        %3511 = vrot.lane.b32.xlu0 %v3466, 4
        %v3512 = vpop.permute.xlu0 %3511
        %3513 = vrot.lane.b32.xlu0 %v3467, 4
        %v3514 = vpop.permute.xlu0 %3513
        %3515 = vrot.lane.b32.xlu0 %v3468, 4
        %v3516 = vpop.permute.xlu0 %3515
        %3533 = vst.msk [vmem:[#allocation4] sm:$0xff] %vm689, %v3486
        %3534 = vst.msk [vmem:[#allocation4 + $0x8] sm:$0xff] %vm689, %v3488
        %3535 = vst.msk [vmem:[#allocation4 + $0x10] sm:$0xff] %vm689, %v3490
        %3536 = vst.msk [vmem:[#allocation4 + $0x18] sm:$0xff] %vm689, %v3492
        %3537 = vst.msk [vmem:[#allocation4 + $0x20] sm:$0xff] %vm689, %v3494
        %3538 = vst.msk [vmem:[#allocation4 + $0x28] sm:$0xff] %vm689, %v3496
        %3539 = vst.msk [vmem:[#allocation4 + $0x30] sm:$0xff] %vm689, %v3498
        %3540 = vst.msk [vmem:[#allocation4 + $0x38] sm:$0xff] %vm689, %v3500
        %3541 = vst.msk [vmem:[#allocation4 + $0x40] sm:$0xff] %vm689, %v3502
        %3542 = vst.msk [vmem:[#allocation4 + $0x48] sm:$0xff] %vm689, %v3504
        %3543 = vst.msk [vmem:[#allocation4 + $0x50] sm:$0xff] %vm689, %v3506
        %3544 = vst.msk [vmem:[#allocation4 + $0x58] sm:$0xff] %vm689, %v3508
        %3545 = vst.msk [vmem:[#allocation4 + $0x60] sm:$0xff] %vm689, %v3510
        %3546 = vst.msk [vmem:[#allocation4 + $0x68] sm:$0xff] %vm689, %v3512
        %3547 = vst.msk [vmem:[#allocation4 + $0x70] sm:$0xff] %vm689, %v3514
        %3548 = vst.msk [vmem:[#allocation4 + $0x78] sm:$0xff] %vm689, %v3516
        %v3549 = vld [vmem:[#allocation3 + $0x6] sm:$0xff]
        %v3550 = vld [vmem:[#allocation3 + $0xe] sm:$0xff]
        %v3551 = vld [vmem:[#allocation3 + $0x1e] sm:$0xff]
        %v3552 = vld [vmem:[#allocation3 + $0x26] sm:$0xff]
        %v3553 = vld [vmem:[#allocation3 + $0x36] sm:$0xff]
        %v3554 = vld [vmem:[#allocation3 + $0x3e] sm:$0xff]
        %v3555 = vld [vmem:[#allocation3 + $0x4e] sm:$0xff]
        %v3556 = vld [vmem:[#allocation3 + $0x56] sm:$0xff]
        %v3557 = vld [vmem:[#allocation3 + $0x66] sm:$0xff]
        %v3558 = vld [vmem:[#allocation3 + $0x6e] sm:$0xff]
        %v3559 = vld [vmem:[#allocation3 + $0x7e] sm:$0xff]
        %v3560 = vld [vmem:[#allocation3 + $0x86] sm:$0xff]
        %v3561 = vld [vmem:[#allocation3 + $0x96] sm:$0xff]
        %v3562 = vld [vmem:[#allocation3 + $0x9e] sm:$0xff]
        %v3563 = vld [vmem:[#allocation3 + $0xae] sm:$0xff]
        %v3564 = vld [vmem:[#allocation3 + $0xb6] sm:$0xff]
        %3581 = vrot.lane.b32.xlu0 %v3549, 8
        %v3582 = vpop.permute.xlu0 %3581
        %3583 = vrot.lane.b32.xlu0 %v3550, 8
        %v3584 = vpop.permute.xlu0 %3583
        %3585 = vrot.lane.b32.xlu0 %v3551, 8
        %v3586 = vpop.permute.xlu0 %3585
        %3587 = vrot.lane.b32.xlu0 %v3552, 8
        %v3588 = vpop.permute.xlu0 %3587
        %3589 = vrot.lane.b32.xlu0 %v3553, 8
        %v3590 = vpop.permute.xlu0 %3589
        %3591 = vrot.lane.b32.xlu0 %v3554, 8
        %v3592 = vpop.permute.xlu0 %3591
        %3593 = vrot.lane.b32.xlu0 %v3555, 8
        %v3594 = vpop.permute.xlu0 %3593
        %3595 = vrot.lane.b32.xlu0 %v3556, 8
        %v3596 = vpop.permute.xlu0 %3595
        %3597 = vrot.lane.b32.xlu0 %v3557, 8
        %v3598 = vpop.permute.xlu0 %3597
        %3599 = vrot.lane.b32.xlu0 %v3558, 8
        %v3600 = vpop.permute.xlu0 %3599
        %3601 = vrot.lane.b32.xlu0 %v3559, 8
        %v3602 = vpop.permute.xlu0 %3601
        %3603 = vrot.lane.b32.xlu0 %v3560, 8
        %v3604 = vpop.permute.xlu0 %3603
        %3605 = vrot.lane.b32.xlu0 %v3561, 8
        %v3606 = vpop.permute.xlu0 %3605
        %3607 = vrot.lane.b32.xlu0 %v3562, 8
        %v3608 = vpop.permute.xlu0 %3607
        %3609 = vrot.lane.b32.xlu0 %v3563, 8
        %v3610 = vpop.permute.xlu0 %3609
        %3611 = vrot.lane.b32.xlu0 %v3564, 8
        %v3612 = vpop.permute.xlu0 %3611
        %3629 = vst.msk [vmem:[#allocation4] sm:$0xff] %vm942, %v3582
        %3630 = vst.msk [vmem:[#allocation4 + $0x8] sm:$0xff] %vm942, %v3584
        %3631 = vst.msk [vmem:[#allocation4 + $0x10] sm:$0xff] %vm942, %v3586
        %3632 = vst.msk [vmem:[#allocation4 + $0x18] sm:$0xff] %vm942, %v3588
        %3633 = vst.msk [vmem:[#allocation4 + $0x20] sm:$0xff] %vm942, %v3590
        %3634 = vst.msk [vmem:[#allocation4 + $0x28] sm:$0xff] %vm942, %v3592
        %3635 = vst.msk [vmem:[#allocation4 + $0x30] sm:$0xff] %vm942, %v3594
        %3636 = vst.msk [vmem:[#allocation4 + $0x38] sm:$0xff] %vm942, %v3596
        %3637 = vst.msk [vmem:[#allocation4 + $0x40] sm:$0xff] %vm942, %v3598
        %3638 = vst.msk [vmem:[#allocation4 + $0x48] sm:$0xff] %vm942, %v3600
        %3639 = vst.msk [vmem:[#allocation4 + $0x50] sm:$0xff] %vm942, %v3602
        %3640 = vst.msk [vmem:[#allocation4 + $0x58] sm:$0xff] %vm942, %v3604
        %3641 = vst.msk [vmem:[#allocation4 + $0x60] sm:$0xff] %vm942, %v3606
        %3642 = vst.msk [vmem:[#allocation4 + $0x68] sm:$0xff] %vm942, %v3608
        %3643 = vst.msk [vmem:[#allocation4 + $0x70] sm:$0xff] %vm942, %v3610
        %3644 = vst.msk [vmem:[#allocation4 + $0x78] sm:$0xff] %vm942, %v3612
        %s3645 = scalar_lea.vmem [#allocation3], 72
        %v3646 = vld [vmem:[%s3645] sm:$0xff]
        %v3647 = vld [vmem:[%s3645 + $0x8] sm:$0xff]
        %v3648 = vld [vmem:[%s3645 + $0x18] sm:$0xff]
        %v3649 = vld [vmem:[%s3645 + $0x20] sm:$0xff]
        %v3650 = vld [vmem:[%s3645 + $0x30] sm:$0xff]
        %v3651 = vld [vmem:[%s3645 + $0x38] sm:$0xff]
        %v3652 = vld [vmem:[%s3645 + $0x48] sm:$0xff]
        %v3653 = vld [vmem:[%s3645 + $0x50] sm:$0xff]
        %v3654 = vld [vmem:[%s3645 + $0x60] sm:$0xff]
        %v3655 = vld [vmem:[%s3645 + $0x68] sm:$0xff]
        %v3656 = vld [vmem:[%s3645 + $0x78] sm:$0xff]
        %v3657 = vld [vmem:[%s3645 + $0x80] sm:$0xff]
        %v3658 = vld [vmem:[%s3645 + $0x90] sm:$0xff]
        %v3659 = vld [vmem:[%s3645 + $0x98] sm:$0xff]
        %v3660 = vld [vmem:[%s3645 + $0xa8] sm:$0xff]
        %v3661 = vld [vmem:[%s3645 + $0xb0] sm:$0xff]
        %3678 = vrot.lane.b32.xlu0 %v3646, 12
        %v3679 = vpop.permute.xlu0 %3678
        %3680 = vrot.lane.b32.xlu0 %v3647, 12
        %v3681 = vpop.permute.xlu0 %3680
        %3682 = vrot.lane.b32.xlu0 %v3648, 12
        %v3683 = vpop.permute.xlu0 %3682
        %3684 = vrot.lane.b32.xlu0 %v3649, 12
        %v3685 = vpop.permute.xlu0 %3684
        %3686 = vrot.lane.b32.xlu0 %v3650, 12
        %v3687 = vpop.permute.xlu0 %3686
        %3688 = vrot.lane.b32.xlu0 %v3651, 12
        %v3689 = vpop.permute.xlu0 %3688
        %3690 = vrot.lane.b32.xlu0 %v3652, 12
        %v3691 = vpop.permute.xlu0 %3690
        %3692 = vrot.lane.b32.xlu0 %v3653, 12
        %v3693 = vpop.permute.xlu0 %3692
        %3694 = vrot.lane.b32.xlu0 %v3654, 12
        %v3695 = vpop.permute.xlu0 %3694
        %3696 = vrot.lane.b32.xlu0 %v3655, 12
        %v3697 = vpop.permute.xlu0 %3696
        %3698 = vrot.lane.b32.xlu0 %v3656, 12
        %v3699 = vpop.permute.xlu0 %3698
        %3700 = vrot.lane.b32.xlu0 %v3657, 12
        %v3701 = vpop.permute.xlu0 %3700
        %3702 = vrot.lane.b32.xlu0 %v3658, 12
        %v3703 = vpop.permute.xlu0 %3702
        %3704 = vrot.lane.b32.xlu0 %v3659, 12
        %v3705 = vpop.permute.xlu0 %3704
        %3706 = vrot.lane.b32.xlu0 %v3660, 12
        %v3707 = vpop.permute.xlu0 %3706
        %3708 = vrot.lane.b32.xlu0 %v3661, 12
        %v3709 = vpop.permute.xlu0 %3708
        %3726 = vst.msk [vmem:[#allocation4] sm:$0xff] %vm1198, %v3679
        %3727 = vst.msk [vmem:[#allocation4 + $0x8] sm:$0xff] %vm1198, %v3681
        %3728 = vst.msk [vmem:[#allocation4 + $0x10] sm:$0xff] %vm1198, %v3683
        %3729 = vst.msk [vmem:[#allocation4 + $0x18] sm:$0xff] %vm1198, %v3685
        %3730 = vst.msk [vmem:[#allocation4 + $0x20] sm:$0xff] %vm1198, %v3687
        %3731 = vst.msk [vmem:[#allocation4 + $0x28] sm:$0xff] %vm1198, %v3689
        %3732 = vst.msk [vmem:[#allocation4 + $0x30] sm:$0xff] %vm1198, %v3691
        %3733 = vst.msk [vmem:[#allocation4 + $0x38] sm:$0xff] %vm1198, %v3693
        %3734 = vst.msk [vmem:[#allocation4 + $0x40] sm:$0xff] %vm1198, %v3695
        %3735 = vst.msk [vmem:[#allocation4 + $0x48] sm:$0xff] %vm1198, %v3697
        %3736 = vst.msk [vmem:[#allocation4 + $0x50] sm:$0xff] %vm1198, %v3699
        %3737 = vst.msk [vmem:[#allocation4 + $0x58] sm:$0xff] %vm1198, %v3701
        %3738 = vst.msk [vmem:[#allocation4 + $0x60] sm:$0xff] %vm1198, %v3703
        %3739 = vst.msk [vmem:[#allocation4 + $0x68] sm:$0xff] %vm1198, %v3705
        %3740 = vst.msk [vmem:[#allocation4 + $0x70] sm:$0xff] %vm1198, %v3707
        %3741 = vst.msk [vmem:[#allocation4 + $0x78] sm:$0xff] %vm1198, %v3709
        %v3742 = vld [vmem:[%s3645 + $0x3] sm:$0xff]
        %v3743 = vld [vmem:[%s3645 + $0xb] sm:$0xff]
        %v3744 = vld [vmem:[%s3645 + $0x1b] sm:$0xff]
        %v3745 = vld [vmem:[%s3645 + $0x23] sm:$0xff]
        %v3746 = vld [vmem:[%s3645 + $0x33] sm:$0xff]
        %v3747 = vld [vmem:[%s3645 + $0x3b] sm:$0xff]
        %v3748 = vld [vmem:[%s3645 + $0x4b] sm:$0xff]
        %v3749 = vld [vmem:[%s3645 + $0x53] sm:$0xff]
        %v3750 = vld [vmem:[%s3645 + $0x63] sm:$0xff]
        %v3751 = vld [vmem:[%s3645 + $0x6b] sm:$0xff]
        %v3752 = vld [vmem:[%s3645 + $0x7b] sm:$0xff]
        %v3753 = vld [vmem:[%s3645 + $0x83] sm:$0xff]
        %v3754 = vld [vmem:[%s3645 + $0x93] sm:$0xff]
        %v3755 = vld [vmem:[%s3645 + $0x9b] sm:$0xff]
        %v3756 = vld [vmem:[%s3645 + $0xab] sm:$0xff]
        %v3757 = vld [vmem:[%s3645 + $0xb3] sm:$0xff]
        %3774 = vrot.lane.b32.xlu0 %v3742, 16
        %v3775 = vpop.permute.xlu0 %3774
        %3776 = vrot.lane.b32.xlu0 %v3743, 16
        %v3777 = vpop.permute.xlu0 %3776
        %3778 = vrot.lane.b32.xlu0 %v3744, 16
        %v3779 = vpop.permute.xlu0 %3778
        %3780 = vrot.lane.b32.xlu0 %v3745, 16
        %v3781 = vpop.permute.xlu0 %3780
        %3782 = vrot.lane.b32.xlu0 %v3746, 16
        %v3783 = vpop.permute.xlu0 %3782
        %3784 = vrot.lane.b32.xlu0 %v3747, 16
        %v3785 = vpop.permute.xlu0 %3784
        %3786 = vrot.lane.b32.xlu0 %v3748, 16
        %v3787 = vpop.permute.xlu0 %3786
        %3788 = vrot.lane.b32.xlu0 %v3749, 16
        %v3789 = vpop.permute.xlu0 %3788
        %3790 = vrot.lane.b32.xlu0 %v3750, 16
        %v3791 = vpop.permute.xlu0 %3790
        %3792 = vrot.lane.b32.xlu0 %v3751, 16
        %v3793 = vpop.permute.xlu0 %3792
        %3794 = vrot.lane.b32.xlu0 %v3752, 16
        %v3795 = vpop.permute.xlu0 %3794
        %3796 = vrot.lane.b32.xlu0 %v3753, 16
        %v3797 = vpop.permute.xlu0 %3796
        %3798 = vrot.lane.b32.xlu0 %v3754, 16
        %v3799 = vpop.permute.xlu0 %3798
        %3800 = vrot.lane.b32.xlu0 %v3755, 16
        %v3801 = vpop.permute.xlu0 %3800
        %3802 = vrot.lane.b32.xlu0 %v3756, 16
        %v3803 = vpop.permute.xlu0 %3802
        %3804 = vrot.lane.b32.xlu0 %v3757, 16
        %v3805 = vpop.permute.xlu0 %3804
        %3822 = vst.msk [vmem:[#allocation4] sm:$0xff] %vm1451, %v3775
        %3823 = vst.msk [vmem:[#allocation4 + $0x8] sm:$0xff] %vm1451, %v3777
        %3824 = vst.msk [vmem:[#allocation4 + $0x10] sm:$0xff] %vm1451, %v3779
        %3825 = vst.msk [vmem:[#allocation4 + $0x18] sm:$0xff] %vm1451, %v3781
        %3826 = vst.msk [vmem:[#allocation4 + $0x20] sm:$0xff] %vm1451, %v3783
        %3827 = vst.msk [vmem:[#allocation4 + $0x28] sm:$0xff] %vm1451, %v3785
        %3828 = vst.msk [vmem:[#allocation4 + $0x30] sm:$0xff] %vm1451, %v3787
        %3829 = vst.msk [vmem:[#allocation4 + $0x38] sm:$0xff] %vm1451, %v3789
        %3830 = vst.msk [vmem:[#allocation4 + $0x40] sm:$0xff] %vm1451, %v3791
        %3831 = vst.msk [vmem:[#allocation4 + $0x48] sm:$0xff] %vm1451, %v3793
        %3832 = vst.msk [vmem:[#allocation4 + $0x50] sm:$0xff] %vm1451, %v3795
        %3833 = vst.msk [vmem:[#allocation4 + $0x58] sm:$0xff] %vm1451, %v3797
        %3834 = vst.msk [vmem:[#allocation4 + $0x60] sm:$0xff] %vm1451, %v3799
        %3835 = vst.msk [vmem:[#allocation4 + $0x68] sm:$0xff] %vm1451, %v3801
        %3836 = vst.msk [vmem:[#allocation4 + $0x70] sm:$0xff] %vm1451, %v3803
        %3837 = vst.msk [vmem:[#allocation4 + $0x78] sm:$0xff] %vm1451, %v3805
        %v3838 = vld [vmem:[%s3645 + $0x6] sm:$0xff]
        %v3839 = vld [vmem:[%s3645 + $0xe] sm:$0xff]
        %v3840 = vld [vmem:[%s3645 + $0x1e] sm:$0xff]
        %v3841 = vld [vmem:[%s3645 + $0x26] sm:$0xff]
        %v3842 = vld [vmem:[%s3645 + $0x36] sm:$0xff]
        %v3843 = vld [vmem:[%s3645 + $0x3e] sm:$0xff]
        %v3844 = vld [vmem:[%s3645 + $0x4e] sm:$0xff]
        %v3845 = vld [vmem:[%s3645 + $0x56] sm:$0xff]
        %v3846 = vld [vmem:[%s3645 + $0x66] sm:$0xff]
        %v3847 = vld [vmem:[%s3645 + $0x6e] sm:$0xff]
        %v3848 = vld [vmem:[%s3645 + $0x7e] sm:$0xff]
        %v3849 = vld [vmem:[%s3645 + $0x86] sm:$0xff]
        %v3850 = vld [vmem:[%s3645 + $0x96] sm:$0xff]
        %v3851 = vld [vmem:[%s3645 + $0x9e] sm:$0xff]
        %v3852 = vld [vmem:[%s3645 + $0xae] sm:$0xff]
        %v3853 = vld [vmem:[%s3645 + $0xb6] sm:$0xff]
        %3870 = vrot.lane.b32.xlu0 %v3838, 20
        %v3871 = vpop.permute.xlu0 %3870
        %3872 = vrot.lane.b32.xlu0 %v3839, 20
        %v3873 = vpop.permute.xlu0 %3872
        %3874 = vrot.lane.b32.xlu0 %v3840, 20
        %v3875 = vpop.permute.xlu0 %3874
        %3876 = vrot.lane.b32.xlu0 %v3841, 20
        %v3877 = vpop.permute.xlu0 %3876
        %3878 = vrot.lane.b32.xlu0 %v3842, 20
        %v3879 = vpop.permute.xlu0 %3878
        %3880 = vrot.lane.b32.xlu0 %v3843, 20
        %v3881 = vpop.permute.xlu0 %3880
        %3882 = vrot.lane.b32.xlu0 %v3844, 20
        %v3883 = vpop.permute.xlu0 %3882
        %3884 = vrot.lane.b32.xlu0 %v3845, 20
        %v3885 = vpop.permute.xlu0 %3884
        %3886 = vrot.lane.b32.xlu0 %v3846, 20
        %v3887 = vpop.permute.xlu0 %3886
        %3888 = vrot.lane.b32.xlu0 %v3847, 20
        %v3889 = vpop.permute.xlu0 %3888
        %3890 = vrot.lane.b32.xlu0 %v3848, 20
        %v3891 = vpop.permute.xlu0 %3890
        %3892 = vrot.lane.b32.xlu0 %v3849, 20
        %v3893 = vpop.permute.xlu0 %3892
        %3894 = vrot.lane.b32.xlu0 %v3850, 20
        %v3895 = vpop.permute.xlu0 %3894
        %3896 = vrot.lane.b32.xlu0 %v3851, 20
        %v3897 = vpop.permute.xlu0 %3896
        %3898 = vrot.lane.b32.xlu0 %v3852, 20
        %v3899 = vpop.permute.xlu0 %3898
        %3900 = vrot.lane.b32.xlu0 %v3853, 20
        %v3901 = vpop.permute.xlu0 %3900
        %3918 = vst.msk [vmem:[#allocation4] sm:$0xff] %vm1704, %v3871
        %3919 = vst.msk [vmem:[#allocation4 + $0x8] sm:$0xff] %vm1704, %v3873
        %3920 = vst.msk [vmem:[#allocation4 + $0x10] sm:$0xff] %vm1704, %v3875
        %3921 = vst.msk [vmem:[#allocation4 + $0x18] sm:$0xff] %vm1704, %v3877
        %3922 = vst.msk [vmem:[#allocation4 + $0x20] sm:$0xff] %vm1704, %v3879
        %3923 = vst.msk [vmem:[#allocation4 + $0x28] sm:$0xff] %vm1704, %v3881
        %3924 = vst.msk [vmem:[#allocation4 + $0x30] sm:$0xff] %vm1704, %v3883
        %3925 = vst.msk [vmem:[#allocation4 + $0x38] sm:$0xff] %vm1704, %v3885
        %3926 = vst.msk [vmem:[#allocation4 + $0x40] sm:$0xff] %vm1704, %v3887
        %3927 = vst.msk [vmem:[#allocation4 + $0x48] sm:$0xff] %vm1704, %v3889
        %3928 = vst.msk [vmem:[#allocation4 + $0x50] sm:$0xff] %vm1704, %v3891
        %3929 = vst.msk [vmem:[#allocation4 + $0x58] sm:$0xff] %vm1704, %v3893
        %3930 = vst.msk [vmem:[#allocation4 + $0x60] sm:$0xff] %vm1704, %v3895
        %3931 = vst.msk [vmem:[#allocation4 + $0x68] sm:$0xff] %vm1704, %v3897
        %3932 = vst.msk [vmem:[#allocation4 + $0x70] sm:$0xff] %vm1704, %v3899
        %3933 = vst.msk [vmem:[#allocation4 + $0x78] sm:$0xff] %vm1704, %v3901
        %s3934 = scalar_lea.vmem [#allocation3], 144
        %v3935 = vld [vmem:[%s3934] sm:$0xff]
        %v3936 = vld [vmem:[%s3934 + $0x8] sm:$0xff]
        %v3937 = vld [vmem:[%s3934 + $0x18] sm:$0xff]
        %v3938 = vld [vmem:[%s3934 + $0x20] sm:$0xff]
        %v3939 = vld [vmem:[%s3934 + $0x30] sm:$0xff]
        %v3940 = vld [vmem:[%s3934 + $0x38] sm:$0xff]
        %v3941 = vld [vmem:[%s3934 + $0x48] sm:$0xff]
        %v3942 = vld [vmem:[%s3934 + $0x50] sm:$0xff]
        %v3943 = vld [vmem:[%s3934 + $0x60] sm:$0xff]
        %v3944 = vld [vmem:[%s3934 + $0x68] sm:$0xff]
        %v3945 = vld [vmem:[%s3934 + $0x78] sm:$0xff]
        %v3946 = vld [vmem:[%s3934 + $0x80] sm:$0xff]
        %v3947 = vld [vmem:[%s3934 + $0x90] sm:$0xff]
        %v3948 = vld [vmem:[%s3934 + $0x98] sm:$0xff]
        %v3949 = vld [vmem:[%s3934 + $0xa8] sm:$0xff]
        %v3950 = vld [vmem:[%s3934 + $0xb0] sm:$0xff]
        %3967 = vrot.lane.b32.xlu0 %v3935, 24
        %v3968 = vpop.permute.xlu0 %3967
        %3969 = vrot.lane.b32.xlu0 %v3936, 24
        %v3970 = vpop.permute.xlu0 %3969
        %3971 = vrot.lane.b32.xlu0 %v3937, 24
        %v3972 = vpop.permute.xlu0 %3971
        %3973 = vrot.lane.b32.xlu0 %v3938, 24
        %v3974 = vpop.permute.xlu0 %3973
        %3975 = vrot.lane.b32.xlu0 %v3939, 24
        %v3976 = vpop.permute.xlu0 %3975
        %3977 = vrot.lane.b32.xlu0 %v3940, 24
        %v3978 = vpop.permute.xlu0 %3977
        %3979 = vrot.lane.b32.xlu0 %v3941, 24
        %v3980 = vpop.permute.xlu0 %3979
        %3981 = vrot.lane.b32.xlu0 %v3942, 24
        %v3982 = vpop.permute.xlu0 %3981
        %3983 = vrot.lane.b32.xlu0 %v3943, 24
        %v3984 = vpop.permute.xlu0 %3983
        %3985 = vrot.lane.b32.xlu0 %v3944, 24
        %v3986 = vpop.permute.xlu0 %3985
        %3987 = vrot.lane.b32.xlu0 %v3945, 24
        %v3988 = vpop.permute.xlu0 %3987
        %3989 = vrot.lane.b32.xlu0 %v3946, 24
        %v3990 = vpop.permute.xlu0 %3989
        %3991 = vrot.lane.b32.xlu0 %v3947, 24
        %v3992 = vpop.permute.xlu0 %3991
        %3993 = vrot.lane.b32.xlu0 %v3948, 24
        %v3994 = vpop.permute.xlu0 %3993
        %3995 = vrot.lane.b32.xlu0 %v3949, 24
        %v3996 = vpop.permute.xlu0 %3995
        %3997 = vrot.lane.b32.xlu0 %v3950, 24
        %v3998 = vpop.permute.xlu0 %3997
        %4015 = vst.msk [vmem:[#allocation4] sm:$0xff] %vm1960, %v3968
        %4016 = vst.msk [vmem:[#allocation4 + $0x8] sm:$0xff] %vm1960, %v3970
        %4017 = vst.msk [vmem:[#allocation4 + $0x10] sm:$0xff] %vm1960, %v3972
        %4018 = vst.msk [vmem:[#allocation4 + $0x18] sm:$0xff] %vm1960, %v3974
        %4019 = vst.msk [vmem:[#allocation4 + $0x20] sm:$0xff] %vm1960, %v3976
        %4020 = vst.msk [vmem:[#allocation4 + $0x28] sm:$0xff] %vm1960, %v3978
        %4021 = vst.msk [vmem:[#allocation4 + $0x30] sm:$0xff] %vm1960, %v3980
        %4022 = vst.msk [vmem:[#allocation4 + $0x38] sm:$0xff] %vm1960, %v3982
        %4023 = vst.msk [vmem:[#allocation4 + $0x40] sm:$0xff] %vm1960, %v3984
        %4024 = vst.msk [vmem:[#allocation4 + $0x48] sm:$0xff] %vm1960, %v3986
        %4025 = vst.msk [vmem:[#allocation4 + $0x50] sm:$0xff] %vm1960, %v3988
        %4026 = vst.msk [vmem:[#allocation4 + $0x58] sm:$0xff] %vm1960, %v3990
        %4027 = vst.msk [vmem:[#allocation4 + $0x60] sm:$0xff] %vm1960, %v3992
        %4028 = vst.msk [vmem:[#allocation4 + $0x68] sm:$0xff] %vm1960, %v3994
        %4029 = vst.msk [vmem:[#allocation4 + $0x70] sm:$0xff] %vm1960, %v3996
        %4030 = vst.msk [vmem:[#allocation4 + $0x78] sm:$0xff] %vm1960, %v3998
        %v4031 = vld [vmem:[%s3934 + $0x3] sm:$0xff]
        %v4032 = vld [vmem:[%s3934 + $0xb] sm:$0xff]
        %v4033 = vld [vmem:[%s3934 + $0x1b] sm:$0xff]
        %v4034 = vld [vmem:[%s3934 + $0x23] sm:$0xff]
        %v4035 = vld [vmem:[%s3934 + $0x33] sm:$0xff]
        %v4036 = vld [vmem:[%s3934 + $0x3b] sm:$0xff]
        %v4037 = vld [vmem:[%s3934 + $0x4b] sm:$0xff]
        %v4038 = vld [vmem:[%s3934 + $0x53] sm:$0xff]
        %v4039 = vld [vmem:[%s3934 + $0x63] sm:$0xff]
        %v4040 = vld [vmem:[%s3934 + $0x6b] sm:$0xff]
        %v4041 = vld [vmem:[%s3934 + $0x7b] sm:$0xff]
        %v4042 = vld [vmem:[%s3934 + $0x83] sm:$0xff]
        %v4043 = vld [vmem:[%s3934 + $0x93] sm:$0xff]
        %v4044 = vld [vmem:[%s3934 + $0x9b] sm:$0xff]
        %v4045 = vld [vmem:[%s3934 + $0xab] sm:$0xff]
        %v4046 = vld [vmem:[%s3934 + $0xb3] sm:$0xff]
        %4063 = vrot.lane.b32.xlu0 %v4031, 28
        %v4064 = vpop.permute.xlu0 %4063
        %4065 = vrot.lane.b32.xlu0 %v4032, 28
        %v4066 = vpop.permute.xlu0 %4065
        %4067 = vrot.lane.b32.xlu0 %v4033, 28
        %v4068 = vpop.permute.xlu0 %4067
        %4069 = vrot.lane.b32.xlu0 %v4034, 28
        %v4070 = vpop.permute.xlu0 %4069
        %4071 = vrot.lane.b32.xlu0 %v4035, 28
        %v4072 = vpop.permute.xlu0 %4071
        %4073 = vrot.lane.b32.xlu0 %v4036, 28
        %v4074 = vpop.permute.xlu0 %4073
        %4075 = vrot.lane.b32.xlu0 %v4037, 28
        %v4076 = vpop.permute.xlu0 %4075
        %4077 = vrot.lane.b32.xlu0 %v4038, 28
        %v4078 = vpop.permute.xlu0 %4077
        %4079 = vrot.lane.b32.xlu0 %v4039, 28
        %v4080 = vpop.permute.xlu0 %4079
        %4081 = vrot.lane.b32.xlu0 %v4040, 28
        %v4082 = vpop.permute.xlu0 %4081
        %4083 = vrot.lane.b32.xlu0 %v4041, 28
        %v4084 = vpop.permute.xlu0 %4083
        %4085 = vrot.lane.b32.xlu0 %v4042, 28
        %v4086 = vpop.permute.xlu0 %4085
        %4087 = vrot.lane.b32.xlu0 %v4043, 28
        %v4088 = vpop.permute.xlu0 %4087
        %4089 = vrot.lane.b32.xlu0 %v4044, 28
        %v4090 = vpop.permute.xlu0 %4089
        %4091 = vrot.lane.b32.xlu0 %v4045, 28
        %v4092 = vpop.permute.xlu0 %4091
        %4093 = vrot.lane.b32.xlu0 %v4046, 28
        %v4094 = vpop.permute.xlu0 %4093
        %4111 = vst.msk [vmem:[#allocation4] sm:$0xff] %vm2213, %v4064
        %4112 = vst.msk [vmem:[#allocation4 + $0x8] sm:$0xff] %vm2213, %v4066
        %4113 = vst.msk [vmem:[#allocation4 + $0x10] sm:$0xff] %vm2213, %v4068
        %4114 = vst.msk [vmem:[#allocation4 + $0x18] sm:$0xff] %vm2213, %v4070
        %4115 = vst.msk [vmem:[#allocation4 + $0x20] sm:$0xff] %vm2213, %v4072
        %4116 = vst.msk [vmem:[#allocation4 + $0x28] sm:$0xff] %vm2213, %v4074
        %4117 = vst.msk [vmem:[#allocation4 + $0x30] sm:$0xff] %vm2213, %v4076
        %4118 = vst.msk [vmem:[#allocation4 + $0x38] sm:$0xff] %vm2213, %v4078
        %4119 = vst.msk [vmem:[#allocation4 + $0x40] sm:$0xff] %vm2213, %v4080
        %4120 = vst.msk [vmem:[#allocation4 + $0x48] sm:$0xff] %vm2213, %v4082
        %4121 = vst.msk [vmem:[#allocation4 + $0x50] sm:$0xff] %vm2213, %v4084
        %4122 = vst.msk [vmem:[#allocation4 + $0x58] sm:$0xff] %vm2213, %v4086
        %4123 = vst.msk [vmem:[#allocation4 + $0x60] sm:$0xff] %vm2213, %v4088
        %4124 = vst.msk [vmem:[#allocation4 + $0x68] sm:$0xff] %vm2213, %v4090
        %4125 = vst.msk [vmem:[#allocation4 + $0x70] sm:$0xff] %vm2213, %v4092
        %4126 = vst.msk [vmem:[#allocation4 + $0x78] sm:$0xff] %vm2213, %v4094
        %v4127 = vld [vmem:[%s3934 + $0x6] sm:$0xff]
        %v4128 = vld [vmem:[%s3934 + $0xe] sm:$0xff]
        %v4129 = vld [vmem:[%s3934 + $0x1e] sm:$0xff]
        %v4130 = vld [vmem:[%s3934 + $0x26] sm:$0xff]
        %v4131 = vld [vmem:[%s3934 + $0x36] sm:$0xff]
        %v4132 = vld [vmem:[%s3934 + $0x3e] sm:$0xff]
        %v4133 = vld [vmem:[%s3934 + $0x4e] sm:$0xff]
        %v4134 = vld [vmem:[%s3934 + $0x56] sm:$0xff]
        %v4135 = vld [vmem:[%s3934 + $0x66] sm:$0xff]
        %v4136 = vld [vmem:[%s3934 + $0x6e] sm:$0xff]
        %v4137 = vld [vmem:[%s3934 + $0x7e] sm:$0xff]
        %v4138 = vld [vmem:[%s3934 + $0x86] sm:$0xff]
        %v4139 = vld [vmem:[%s3934 + $0x96] sm:$0xff]
        %v4140 = vld [vmem:[%s3934 + $0x9e] sm:$0xff]
        %v4141 = vld [vmem:[%s3934 + $0xae] sm:$0xff]
        %v4142 = vld [vmem:[%s3934 + $0xb6] sm:$0xff]
        %4159 = vrot.lane.b32.xlu0 %v4127, 32
        %v4160 = vpop.permute.xlu0 %4159
        %4161 = vrot.lane.b32.xlu0 %v4128, 32
        %v4162 = vpop.permute.xlu0 %4161
        %4163 = vrot.lane.b32.xlu0 %v4129, 32
        %v4164 = vpop.permute.xlu0 %4163
        %4165 = vrot.lane.b32.xlu0 %v4130, 32
        %v4166 = vpop.permute.xlu0 %4165
        %4167 = vrot.lane.b32.xlu0 %v4131, 32
        %v4168 = vpop.permute.xlu0 %4167
        %4169 = vrot.lane.b32.xlu0 %v4132, 32
        %v4170 = vpop.permute.xlu0 %4169
        %4171 = vrot.lane.b32.xlu0 %v4133, 32
        %v4172 = vpop.permute.xlu0 %4171
        %4173 = vrot.lane.b32.xlu0 %v4134, 32
        %v4174 = vpop.permute.xlu0 %4173
        %4175 = vrot.lane.b32.xlu0 %v4135, 32
        %v4176 = vpop.permute.xlu0 %4175
        %4177 = vrot.lane.b32.xlu0 %v4136, 32
        %v4178 = vpop.permute.xlu0 %4177
        %4179 = vrot.lane.b32.xlu0 %v4137, 32
        %v4180 = vpop.permute.xlu0 %4179
        %4181 = vrot.lane.b32.xlu0 %v4138, 32
        %v4182 = vpop.permute.xlu0 %4181
        %4183 = vrot.lane.b32.xlu0 %v4139, 32
        %v4184 = vpop.permute.xlu0 %4183
        %4185 = vrot.lane.b32.xlu0 %v4140, 32
        %v4186 = vpop.permute.xlu0 %4185
        %4187 = vrot.lane.b32.xlu0 %v4141, 32
        %v4188 = vpop.permute.xlu0 %4187
        %4189 = vrot.lane.b32.xlu0 %v4142, 32
        %v4190 = vpop.permute.xlu0 %4189
        %4207 = vst.msk [vmem:[#allocation4] sm:$0xff] %vm2466, %v4160
        %4208 = vst.msk [vmem:[#allocation4 + $0x8] sm:$0xff] %vm2466, %v4162
        %4209 = vst.msk [vmem:[#allocation4 + $0x10] sm:$0xff] %vm2466, %v4164
        %4210 = vst.msk [vmem:[#allocation4 + $0x18] sm:$0xff] %vm2466, %v4166
        %4211 = vst.msk [vmem:[#allocation4 + $0x20] sm:$0xff] %vm2466, %v4168
        %4212 = vst.msk [vmem:[#allocation4 + $0x28] sm:$0xff] %vm2466, %v4170
        %4213 = vst.msk [vmem:[#allocation4 + $0x30] sm:$0xff] %vm2466, %v4172
        %4214 = vst.msk [vmem:[#allocation4 + $0x38] sm:$0xff] %vm2466, %v4174
        %4215 = vst.msk [vmem:[#allocation4 + $0x40] sm:$0xff] %vm2466, %v4176
        %4216 = vst.msk [vmem:[#allocation4 + $0x48] sm:$0xff] %vm2466, %v4178
        %4217 = vst.msk [vmem:[#allocation4 + $0x50] sm:$0xff] %vm2466, %v4180
        %4218 = vst.msk [vmem:[#allocation4 + $0x58] sm:$0xff] %vm2466, %v4182
        %4219 = vst.msk [vmem:[#allocation4 + $0x60] sm:$0xff] %vm2466, %v4184
        %4220 = vst.msk [vmem:[#allocation4 + $0x68] sm:$0xff] %vm2466, %v4186
        %4221 = vst.msk [vmem:[#allocation4 + $0x70] sm:$0xff] %vm2466, %v4188
        %4222 = vst.msk [vmem:[#allocation4 + $0x78] sm:$0xff] %vm2466, %v4190
        %v4223 = vld [vmem:[#allocation4] sm:$0xff]
        %v4224 = vld [vmem:[#allocation4 + $0x8] sm:$0xff]
        %v4225 = vld [vmem:[#allocation4 + $0x10] sm:$0xff]
        %v4226 = vld [vmem:[#allocation4 + $0x18] sm:$0xff]
        %v4227 = vld [vmem:[#allocation4 + $0x20] sm:$0xff]
        %v4228 = vld [vmem:[#allocation4 + $0x28] sm:$0xff]
        %v4229 = vld [vmem:[#allocation4 + $0x30] sm:$0xff]
        %v4230 = vld [vmem:[#allocation4 + $0x38] sm:$0xff]
        %v4231 = vld [vmem:[#allocation4 + $0x40] sm:$0xff]
        %v4232 = vld [vmem:[#allocation4 + $0x48] sm:$0xff]
        %v4233 = vld [vmem:[#allocation4 + $0x50] sm:$0xff]
        %v4234 = vld [vmem:[#allocation4 + $0x58] sm:$0xff]
        %v4235 = vld [vmem:[#allocation4 + $0x60] sm:$0xff]
        %v4236 = vld [vmem:[#allocation4 + $0x68] sm:$0xff]
        %v4237 = vld [vmem:[#allocation4 + $0x70] sm:$0xff]
        %v4238 = vld [vmem:[#allocation4 + $0x78] sm:$0xff]
        %v4239 = vld [vmem:[#allocation13] sm:$0xff]
        %v4240 = vld [vmem:[#allocation13 + $0x8] sm:$0xff]
        %v4241 = vld [vmem:[#allocation13 + $0x10] sm:$0xff]
        %v4242 = vld [vmem:[#allocation13 + $0x18] sm:$0xff]
        %v4243 = vld [vmem:[#allocation13 + $0x20] sm:$0xf]
        %v4245 = vsel %vm2556, %v4223, 0
        %v4248 = vsel %vm2556, %v4224, 0
        %v4251 = vsel %vm2556, %v4225, 0
        %v4254 = vsel %vm2556, %v4226, 0
        %v4257 = vsel %vm2556, %v4227, 0
        %v4260 = vsel %vm2556, %v4228, 0
        %v4263 = vsel %vm2556, %v4229, 0
        %v4266 = vsel %vm2556, %v4230, 0
        %v4269 = vsel %vm2556, %v4231, 0
        %v4272 = vsel %vm2556, %v4232, 0
        %v4275 = vsel %vm2556, %v4233, 0
        %v4278 = vsel %vm2556, %v4234, 0
        %v4281 = vsel %vm2556, %v4235, 0
        %v4284 = vsel %vm2556, %v4236, 0
        %v4287 = vsel %vm2556, %v4237, 0
        %v4290 = vsel %vm2556, %v4238, 0
        %v4293 = vsel %vm2683, %v4243, 0
        %4295 = vmatprep.subr.mxu0 0.0
        %4296 = vmatpush1.msra.mxu0 %v4239
        %4297 = vmatprep.subr.mxu0 0.0
        %4298 = vmatpush1.msra.mxu0 %v4240
        %4299 = vmatprep.subr.mxu0 0.0
        %4300 = vmatpush1.msra.mxu0 %v4241
        %4301 = vmatprep.subr.mxu0 0.0
        %4302 = vmatpush1.msra.mxu0 %v4242
        %4303 = vmatprep.subr.mxu0 0.0
        %4304 = vmatpush1.msra.mxu0 %v4293
        %4305 = vmatprep.subr.mxu0 0.0
        %4306 = vmatpush1.msra.mxu0 0.0
        %4307 = vmatprep.subr.mxu0 0.0
        %4308 = vmatpush1.msra.mxu0 0.0
        %4309 = vmatprep.subr.mxu0 0.0
        %4310 = vmatpush1.msra.mxu0 0.0
        %4311 = vmatprep.subr.mxu0 0.0
        %4312 = vmatpush1.msra.mxu0 0.0
        %4313 = vmatprep.subr.mxu0 0.0
        %4314 = vmatpush1.msra.mxu0 0.0
        %4315 = vmatprep.subr.mxu0 0.0
        %4316 = vmatpush1.msra.mxu0 0.0
        %4317 = vmatprep.subr.mxu0 0.0
        %4318 = vmatpush1.msra.mxu0 0.0
        %4319 = vmatprep.subr.mxu0 0.0
        %4320 = vmatpush1.msra.mxu0 0.0
        %4321 = vmatprep.subr.mxu0 0.0
        %4322 = vmatpush1.msra.mxu0 0.0
        %4323 = vmatprep.subr.mxu0 0.0
        %4324 = vmatpush1.msra.mxu0 0.0
        %4325 = vmatprep.subr.mxu0 0.0
        %4326 = vmatpush1.msra.mxu0 0.0
        %4327 = vmatprep.subr.mxu0 0.0
        %4328 = vmatpush1.msra.mxu0 0.0
        %4329 = vmatprep.subr.mxu0 0.0
        %4330 = vmatpush1.msra.mxu0 0.0
        %4331 = vmatprep.subr.mxu0 0.0
        %4332 = vmatpush1.msra.mxu0 0.0
        %4333 = vmatprep.subr.mxu0 0.0
        %4334 = vmatpush1.msra.mxu0 0.0
        %4335 = vmatprep.subr.mxu0 0.0
        %4336 = vmatpush1.msra.mxu0 0.0
        %4337 = vmatprep.subr.mxu0 0.0
        %4338 = vmatpush1.msra.mxu0 0.0
        %4339 = vmatprep.subr.mxu0 0.0
        %4340 = vmatpush1.msra.mxu0 0.0
        %4341 = vmatprep.subr.mxu0 0.0
        %4342 = vmatpush1.msra.mxu0 0.0
        %4343 = vmatprep.subr.mxu0 0.0
        %4344 = vmatpush1.msra.mxu0 0.0
        %4345 = vmatprep.subr.mxu0 0.0
        %4346 = vmatpush1.msra.mxu0 0.0
        %4347 = vmatprep.subr.mxu0 0.0
        %4348 = vmatpush1.msra.mxu0 0.0
        %4349 = vmatprep.subr.mxu0 0.0
        %4350 = vmatpush1.msra.mxu0 0.0
        %4351 = vmatprep.subr.mxu0 0.0
        %4352 = vmatpush1.msra.mxu0 0.0
        %4353 = vmatprep.subr.mxu0 0.0
        %4354 = vmatpush1.msra.mxu0 0.0
        %4355 = vmatprep.subr.mxu0 0.0
        %4356 = vmatpush1.msra.mxu0 0.0
        %4357 = vmatprep.subr.mxu0 0.0
        %4358 = vmatpush1.msra.mxu0 0.0
        %4359 = vmatprep.mubr.f32.mxu0 0.0
        %4360 = vmatmul.mubr.f32.gmra.mrb[0].mxu0 %v4245
        %v4361 = vpop.f32.mrb[0].mxu0
        %v4362 = vadd.f32 0.0, %v4361
        %v4363 = vpop.f32.mrb[0].mxu0
        %4364 = vmatprep.mubr.f32.mxu0 0.0
        %4365 = vmatmul.mubr.f32.gmra.mrb[0].mxu0 %v4248
        %v4366 = vpop.f32.mrb[0].mxu0
        %v4367 = vadd.f32 0.0, %v4366
        %v4368 = vpop.f32.mrb[0].mxu0
        %4369 = vmatprep.mubr.f32.mxu0 0.0
        %4370 = vmatmul.mubr.f32.gmra.mrb[0].mxu0 %v4251
        %v4371 = vpop.f32.mrb[0].mxu0
        %v4372 = vadd.f32 0.0, %v4371
        %v4373 = vpop.f32.mrb[0].mxu0
        %4374 = vmatprep.mubr.f32.mxu0 0.0
        %4375 = vmatmul.mubr.f32.gmra.mrb[0].mxu0 %v4254
        %v4376 = vpop.f32.mrb[0].mxu0
        %v4377 = vadd.f32 0.0, %v4376
        %v4378 = vpop.f32.mrb[0].mxu0
        %4379 = vmatprep.mubr.f32.mxu0 0.0
        %4380 = vmatmul.mubr.f32.gmra.mrb[0].mxu0 %v4257
        %v4381 = vpop.f32.mrb[0].mxu0
        %v4382 = vadd.f32 0.0, %v4381
        %v4383 = vpop.f32.mrb[0].mxu0
        %4384 = vmatprep.mubr.f32.mxu0 0.0
        %4385 = vmatmul.mubr.f32.gmra.mrb[0].mxu0 %v4260
        %v4386 = vpop.f32.mrb[0].mxu0
        %v4387 = vadd.f32 0.0, %v4386
        %v4388 = vpop.f32.mrb[0].mxu0
        %4389 = vmatprep.mubr.f32.mxu0 0.0
        %4390 = vmatmul.mubr.f32.gmra.mrb[0].mxu0 %v4263
        %v4391 = vpop.f32.mrb[0].mxu0
        %v4392 = vadd.f32 0.0, %v4391
        %v4393 = vpop.f32.mrb[0].mxu0
        %4394 = vmatprep.mubr.f32.mxu0 0.0
        %4395 = vmatmul.mubr.f32.gmra.mrb[0].mxu0 %v4266
        %v4396 = vpop.f32.mrb[0].mxu0
        %v4397 = vadd.f32 0.0, %v4396
        %v4398 = vpop.f32.mrb[0].mxu0
        %4399 = vmatprep.mubr.f32.mxu0 0.0
        %4400 = vmatmul.mubr.f32.gmra.mrb[0].mxu0 %v4269
        %v4401 = vpop.f32.mrb[0].mxu0
        %v4402 = vadd.f32 0.0, %v4401
        %v4403 = vpop.f32.mrb[0].mxu0
        %4404 = vmatprep.mubr.f32.mxu0 0.0
        %4405 = vmatmul.mubr.f32.gmra.mrb[0].mxu0 %v4272
        %v4406 = vpop.f32.mrb[0].mxu0
        %v4407 = vadd.f32 0.0, %v4406
        %v4408 = vpop.f32.mrb[0].mxu0
        %4409 = vmatprep.mubr.f32.mxu0 0.0
        %4410 = vmatmul.mubr.f32.gmra.mrb[0].mxu0 %v4275
        %v4411 = vpop.f32.mrb[0].mxu0
        %v4412 = vadd.f32 0.0, %v4411
        %v4413 = vpop.f32.mrb[0].mxu0
        %4414 = vmatprep.mubr.f32.mxu0 0.0
        %4415 = vmatmul.mubr.f32.gmra.mrb[0].mxu0 %v4278
        %v4416 = vpop.f32.mrb[0].mxu0
        %v4417 = vadd.f32 0.0, %v4416
        %v4418 = vpop.f32.mrb[0].mxu0
        %4419 = vmatprep.mubr.f32.mxu0 0.0
        %4420 = vmatmul.mubr.f32.gmra.mrb[0].mxu0 %v4281
        %v4421 = vpop.f32.mrb[0].mxu0
        %v4422 = vadd.f32 0.0, %v4421
        %v4423 = vpop.f32.mrb[0].mxu0
        %4424 = vmatprep.mubr.f32.mxu0 0.0
        %4425 = vmatmul.mubr.f32.gmra.mrb[0].mxu0 %v4284
        %v4426 = vpop.f32.mrb[0].mxu0
        %v4427 = vadd.f32 0.0, %v4426
        %v4428 = vpop.f32.mrb[0].mxu0
        %4429 = vmatprep.mubr.f32.mxu0 0.0
        %4430 = vmatmul.mubr.f32.gmra.mrb[0].mxu0 %v4287
        %v4431 = vpop.f32.mrb[0].mxu0
        %v4432 = vadd.f32 0.0, %v4431
        %v4433 = vpop.f32.mrb[0].mxu0
        %4434 = vmatprep.mubr.f32.mxu0 0.0
        %4435 = vmatmul.mubr.f32.gmra.mrb[0].mxu0 %v4290
        %v4436 = vpop.f32.mrb[0].mxu0
        %v4437 = vadd.f32 0.0, %v4436
        %v4438 = vpop.f32.mrb[0].mxu0
        %4439 = vdwg.mxu0
        %v4440 = vld [vmem:[#allocation14] sm:$0x1]
        %v4442 = vlaneseq
        %v4443 = vshrl.u32 %v4442, 7
        %v4444 = vsub.s32 0, %v4443
        %v4445 = vrot.slane %v4440, %v4444
        %v4447 = vmul.f32 %v4362, %v4445
        %v4448 = vmul.f32 %v4367, %v4445
        %v4449 = vmul.f32 %v4372, %v4445
        %v4450 = vmul.f32 %v4377, %v4445
        %v4451 = vmul.f32 %v4382, %v4445
        %v4452 = vmul.f32 %v4387, %v4445
        %v4453 = vmul.f32 %v4392, %v4445
        %v4454 = vmul.f32 %v4397, %v4445
        %v4455 = vmul.f32 %v4402, %v4445
        %v4456 = vmul.f32 %v4407, %v4445
        %v4457 = vmul.f32 %v4412, %v4445
        %v4458 = vmul.f32 %v4417, %v4445
        %v4459 = vmul.f32 %v4422, %v4445
        %v4460 = vmul.f32 %v4427, %v4445
        %v4461 = vmul.f32 %v4432, %v4445
        %v4462 = vmul.f32 %v4437, %v4445
        %v4463 = vld [vmem:[#allocation16] sm:$0x1]
        %v4465 = vlaneseq
        %v4466 = vshrl.u32 %v4465, 7
        %v4467 = vsub.s32 0, %v4466
        %v4468 = vrot.slane %v4463, %v4467
        %v4470 = vadd.f32 %v4447, %v4468
        %v4471 = vadd.f32 %v4448, %v4468
        %v4472 = vadd.f32 %v4449, %v4468
        %v4473 = vadd.f32 %v4450, %v4468
        %v4474 = vadd.f32 %v4451, %v4468
        %v4475 = vadd.f32 %v4452, %v4468
        %v4476 = vadd.f32 %v4453, %v4468
        %v4477 = vadd.f32 %v4454, %v4468
        %v4478 = vadd.f32 %v4455, %v4468
        %v4479 = vadd.f32 %v4456, %v4468
        %v4480 = vadd.f32 %v4457, %v4468
        %v4481 = vadd.f32 %v4458, %v4468
        %v4482 = vadd.f32 %v4459, %v4468
        %v4483 = vadd.f32 %v4460, %v4468
        %v4484 = vadd.f32 %v4461, %v4468
        %v4485 = vadd.f32 %v4462, %v4468
        %v4486 = vmax.f32 %v4470, 0.0
        %v4487 = vmax.f32 %v4471, 0.0
        %v4488 = vmax.f32 %v4472, 0.0
        %v4489 = vmax.f32 %v4473, 0.0
        %v4490 = vmax.f32 %v4474, 0.0
        %v4491 = vmax.f32 %v4475, 0.0
        %v4492 = vmax.f32 %v4476, 0.0
        %v4493 = vmax.f32 %v4477, 0.0
        %v4494 = vmax.f32 %v4478, 0.0
        %v4495 = vmax.f32 %v4479, 0.0
        %v4496 = vmax.f32 %v4480, 0.0
        %v4497 = vmax.f32 %v4481, 0.0
        %v4498 = vmax.f32 %v4482, 0.0
        %v4499 = vmax.f32 %v4483, 0.0
        %v4500 = vmax.f32 %v4484, 0.0
        %v4501 = vmax.f32 %v4485, 0.0
        %vm4502 = vcmask 64512
        %4503 = vst.msk [vmem:[%s389] sm:$0xff] %vm4502, %v4486
        %4504 = vst.msk [vmem:[%s389 + $0x8] sm:$0xff] %vm4502, %v4487
        %4505 = vst.msk [vmem:[%s389 + $0x10] sm:$0xff] %vm4502, %v4488
        %4506 = vst.msk [vmem:[%s389 + $0x18] sm:$0xff] %vm4502, %v4489
        %4507 = vst.msk [vmem:[%s389 + $0x20] sm:$0xff] %vm4502, %v4490
        %4508 = vst.msk [vmem:[%s389 + $0x28] sm:$0xff] %vm4502, %v4491
        %4509 = vst.msk [vmem:[%s389 + $0x30] sm:$0xff] %vm4502, %v4492
        %4510 = vst.msk [vmem:[%s389 + $0x38] sm:$0xff] %vm4502, %v4493
        %4511 = vst.msk [vmem:[%s389 + $0x40] sm:$0xff] %vm4502, %v4494
        %4512 = vst.msk [vmem:[%s389 + $0x48] sm:$0xff] %vm4502, %v4495
        %4513 = vst.msk [vmem:[%s389 + $0x50] sm:$0xff] %vm4502, %v4496
        %4514 = vst.msk [vmem:[%s389 + $0x58] sm:$0xff] %vm4502, %v4497
        %4515 = vst.msk [vmem:[%s389 + $0x60] sm:$0xff] %vm4502, %v4498
        %4516 = vst.msk [vmem:[%s389 + $0x68] sm:$0xff] %vm4502, %v4499
        %4517 = vst.msk [vmem:[%s389 + $0x70] sm:$0xff] %vm4502, %v4500
        %4518 = vst.msk [vmem:[%s389 + $0x78] sm:$0xff] %vm4502, %v4501
        %s4519 = sand.u32 %s201, 1
        %s4520 = scalar_lea.sflag [#allocation7], %s4519
        %s4521 = sand.u32 %s201, 1
        %s4522 = smul.addr %s4521, 128
        %s4523 = scalar_lea.vmem [#allocation17], %s4522
        // Predicated region
        $region77: #{tpu_custom_call.1} parent=47 // pred_check
          %p4524 = pneg %p211
        $region78: #{tpu_custom_call.1} parent=47 // pred_check_branch
          %4526 = sbr.rel (%p4524) target = $region80
        $region79: #{tpu_custom_call.1} parent=47 // pred_region
          %s4527 = smul.u32 8, %s32
          %s4529 = ssub.s32 2048, 2048
          %4530 = vsyncadd %s4520, %s4529
          %s4531 = smul.addr %s4527, 2
          %s4532 = smul.addr %s31, 32
          %s4533 = sadd.s32 %s4531, %s4532
          %s4534 = smul.addr %s4533, 128
          %s4535 = scalar_lea.hbm %s7, %s4534
          %s4536 = sshll.u32 %s4523, 4
          %s4537 = int_to_ptr.vmem [resolvable:$true] %s4536
          %4542 = dma.vmem_to_hbm [thread:$0]  %s4537, 2048, %s4535, %s4520, 128, 128, 8
        $region80: #{tpu_custom_call.1} parent=47 // pred_fallthru
          _
      $region48: #{tpu_custom_call.1} parent=5 // pred_fallthru
        _
      %p4543 = scmp.le.s32.totalorder 2, %s22
      // Predicated region
      $region81: #{tpu_custom_call.1} parent=5 // pred_check
        %p4544 = pneg %p4543
      $region82: #{tpu_custom_call.1} parent=5 // pred_check_branch
        %4546 = sbr.rel (%p4544) target = $region84
      $region83: #{tpu_custom_call.1} parent=5 // pred_region
        %s4547 = ssub.s32 %s22, 2
        // Predicated region
        $region85: #{tpu_custom_call.1} parent=83 // pred_check
          %p4548 = pneg %p217
        $region86: #{tpu_custom_call.1} parent=83 // pred_check_branch
          %4550 = sbr.rel (%p4548) target = $region88
        $region87: #{tpu_custom_call.1} parent=83 // pred_region
          %s4551 = sand.u32 %s202, 1
          %s4552 = scalar_lea.sflag [#allocation7], %s4551
          %s4553 = sand.u32 %s202, 1
          %s4554 = smul.addr %s4553, 128
          %s4555 = scalar_lea.vmem [#allocation17], %s4554
          %4556 = dma.done %s4552, 2048
        $region88: #{tpu_custom_call.1} parent=83 // pred_fallthru
          _
      $region84: #{tpu_custom_call.1} parent=5 // pred_fallthru
        _
    $region6: #{tpu_custom_call.1} parent=1 // loop_footer
      %s26 = sadd.s32 1, %s22
    $region7: #{tpu_custom_call.1} parent=1 // loop_footer_branch
      %21 = sbr.rel target = $region3
    $region8: #{tpu_custom_call.1} parent=1 // loop_exit
      _
    %4557 = vsyncpa [#allocation6], 1
    %s4558 = scalar_lea.sflag [#allocation6], 1
    %4559 = vsyncpa %s4558, 1
    %4560 = vsyncpa [#allocation9], 1
    %4561 = vsyncpa [#allocation12], 1
    %4562 = vsyncpa [#allocation15], 1
    %4563 = vsyncpa [#allocation7], 1
    %s4564 = scalar_lea.sflag [#allocation7], 1
    %4565 = vsyncpa %s4564, 1

</llo_original>
